<compile_context>
chip_gen: v6e
topology: v6e:2x2x1
jax: 0.10.0
libtpu: 0.0.40
codegen_flags: <defaults>
</compile_context>

<pallas_src>
import jax
import jax.numpy as jnp
from jax.experimental import pallas as pl
from jax.experimental.pallas import tpu as pltpu

# ---- small but lane-dense synthetic config (LlamaConfig analogue) ----
B = 4                      # batch (grid axis; >2 steps so megacore still pipelines)
S = 128                    # seq_len
H = 256                    # hidden_size
NUM_HEADS = 2
HEAD_DIM = H // NUM_HEADS  # 128 = one vreg lane width
INTER = 512                # intermediate_size
EPS = 1e-6                 # rms_norm_eps
ROPE_BASE = 10000.0
NEG_INF = -1e30            # causal-mask fill value (kernel and reference)


def _rms_norm(x, w, eps):
    # x: (S, H) f32, w: (1, H) f32 -- keep norm math in f32 (v5e VPU has no bf16)
    var = jnp.mean(x * x, axis=-1, keepdims=True)
    return x * jax.lax.rsqrt(var + eps) * w


def decoder_layer_kernel(x_ref, cos_ref, sin_ref,
                         wq_ref, wk_ref, wv_ref, wo_ref,
                         wg_ref, wu_ref, wd_ref,
                         ln1_ref, ln2_ref, out_ref):
    x = x_ref[...]                    # (S, H) f32 (batch dim squeezed by BlockSpec)
    cos = cos_ref[...]                # (S, HEAD_DIM) f32
    sin_s = sin_ref[...]              # (S, HEAD_DIM) f32, sign already folded in
    ln1 = ln1_ref[...]                # (1, H)
    ln2 = ln2_ref[...]                # (1, H)

    # ---- input_layernorm (RMSNorm) ----
    xn = _rms_norm(x, ln1, EPS)
    xn_b = jnp.broadcast_to(xn.astype(jnp.bfloat16)[None], (NUM_HEADS, S, H))

    # ---- self attention: all heads batched in single einsums ----
    # head-major weights: wq/wk/wv (NUM_HEADS, H, HEAD_DIM), wo (NUM_HEADS, HEAD_DIM, H)
    q = jnp.einsum('nsk,nkd->nsd', xn_b, wq_ref[...],
                   preferred_element_type=jnp.float32)            # (N, S, D) f32
    k = jnp.einsum('nsk,nkd->nsd', xn_b, wk_ref[...],
                   preferred_element_type=jnp.float32)
    v = jnp.einsum('nsk,nkd->nsd', xn_b, wv_ref[...],
                   preferred_element_type=jnp.float32)

    # rotary embedding: rotate_half(x)*sin == roll(x, D/2)*sin_signed (XLU roll,
    # no negate + concatenate relayout).
    def rope(t):
        rot = pltpu.roll(t.reshape(NUM_HEADS * S, HEAD_DIM), HEAD_DIM // 2, axis=1)
        return t * cos[None] + rot.reshape(NUM_HEADS, S, HEAD_DIM) * sin_s[None]

    q = rope(q)
    k = rope(k)

    scale = 1.0 / jnp.sqrt(jnp.float32(HEAD_DIM))
    scores = jnp.einsum('nqd,nkd->nqk', q.astype(jnp.bfloat16),
                        k.astype(jnp.bfloat16),
                        preferred_element_type=jnp.float32) * scale   # (N, S, S)

    # causal mask built in-kernel (no (S,S) HBM input / BlockSpec)
    row = jax.lax.broadcasted_iota(jnp.int32, (S, S), 0)
    col = jax.lax.broadcasted_iota(jnp.int32, (S, S), 1)
    scores = jnp.where((col <= row)[None], scores, jnp.float32(NEG_INF))

    # numerically-stable softmax; divide -> EUP approx reciprocal
    m = jnp.max(scores, axis=-1, keepdims=True)
    p = jnp.exp(scores - m)
    denom = jnp.sum(p, axis=-1, keepdims=True)
    p = p * pl.reciprocal(denom, approx=True)

    ctx = jnp.einsum('nqk,nkd->nqd', p.astype(jnp.bfloat16),
                     v.astype(jnp.bfloat16),
                     preferred_element_type=jnp.float32)              # (N, S, D)

    # output projection: per-head matmul, then reduce over the (tiny) head axis
    attn = jnp.einsum('nqd,ndh->nqh', ctx.astype(jnp.bfloat16), wo_ref[...],
                      preferred_element_type=jnp.float32)
    attn = jnp.sum(attn, axis=0)                                      # (S, H)

    # residual
    h1 = x + attn

    # ---- post_attention_layernorm + SwiGLU MLP ----
    xn2 = _rms_norm(h1, ln2, EPS).astype(jnp.bfloat16)
    gate = jnp.dot(xn2, wg_ref[...], preferred_element_type=jnp.float32)
    up = jnp.dot(xn2, wu_ref[...], preferred_element_type=jnp.float32)
    act = (gate * jax.nn.sigmoid(gate) * up).astype(jnp.bfloat16)     # SiLU(gate)*up
    down = jnp.dot(act, wd_ref[...], preferred_element_type=jnp.float32)

    out_ref[...] = h1 + down


def llama_decoder_layer(x, cos, sin, params):
    # Head-major bf16 weights (reshape/cast at trace time; halves weight DMA bytes).
    wq = params["wq"].reshape(H, NUM_HEADS, HEAD_DIM).transpose(1, 0, 2).astype(jnp.bfloat16)
    wk = params["wk"].reshape(H, NUM_HEADS, HEAD_DIM).transpose(1, 0, 2).astype(jnp.bfloat16)
    wv = params["wv"].reshape(H, NUM_HEADS, HEAD_DIM).transpose(1, 0, 2).astype(jnp.bfloat16)
    wo = params["wo"].reshape(NUM_HEADS, HEAD_DIM, H).astype(jnp.bfloat16)
    wg = params["wg"].astype(jnp.bfloat16)
    wu = params["wu"].astype(jnp.bfloat16)
    wd = params["wd"].astype(jnp.bfloat16)

    # fold rotate_half's sign into the sin table: rotate_half(x)*sin == roll(x,D/2)*sin_signed
    half = HEAD_DIM // 2
    sin_signed = jnp.concatenate([-sin[:, :half], sin[:, half:]], axis=-1)

    full = lambda shape: pl.BlockSpec(shape, lambda b: (0,) * len(shape))

    return pl.pallas_call(
        decoder_layer_kernel,
        out_shape=jax.ShapeDtypeStruct((B, S, H), jnp.float32),
        grid_spec=pltpu.PrefetchScalarGridSpec(
            num_scalar_prefetch=0,
            grid=(B,),
            in_specs=[
                pl.BlockSpec((pl.Squeezed(), S, H), lambda b: (b, 0, 0)),  # x
                full((S, HEAD_DIM)),                      # cos
                full((S, HEAD_DIM)),                      # sin (sign-folded)
                full((NUM_HEADS, H, HEAD_DIM)),           # wq
                full((NUM_HEADS, H, HEAD_DIM)),           # wk
                full((NUM_HEADS, H, HEAD_DIM)),           # wv
                full((NUM_HEADS, HEAD_DIM, H)),           # wo
                full((H, INTER)),                         # w_gate
                full((H, INTER)),                         # w_up
                full((INTER, H)),                         # w_down
                full((1, H)),                             # ln1 weight
                full((1, H)),                             # ln2 weight
            ],
            out_specs=pl.BlockSpec((pl.Squeezed(), S, H), lambda b: (b, 0, 0)),
        ),
        compiler_params=pltpu.CompilerParams(
            dimension_semantics=("parallel",)),
        # TODO(synk): at production sizes (H=4096, INTER=14336, S>=4k) add a
        # sequence-tile grid axis and a K-reduction axis with a VMEM f32
        # accumulator (pl.when init/finalize), streaming weight tiles instead
        # of whole-weight blocks; budget tiles for v7x's 64 MiB VMEM and raise
        # vmem_limit_bytes on v6e.
    )(x, cos, sin_signed, wq, wk, wv, wo, wg, wu, wd,
      params["ln1"], params["ln2"])


def reference_decoder_layer(x, cos, sin, params):
    """Pure-JAX f32 reference (same math as the kernel / PyTorch module)."""
    Bq, Sq, Hq = x.shape

    def rms(z, w):
        var = jnp.mean(z * z, axis=-1, keepdims=True)
        return z * jax.lax.rsqrt(var + EPS) * w

    def rot_half(z):
        half = z.shape[-1] // 2
        return jnp.concatenate([-z[..., half:], z[..., :half]], axis=-1)

    xn = rms(x, params["ln1"])
    q = xn @ params["wq"]
    k = xn @ params["wk"]
    v = xn @ params["wv"]
    q = q.reshape(Bq, Sq, NUM_HEADS, HEAD_DIM).transpose(0, 2, 1, 3)
    k = k.reshape(Bq, Sq, NUM_HEADS, HEAD_DIM).transpose(0, 2, 1, 3)
    v = v.reshape(Bq, Sq, NUM_HEADS, HEAD_DIM).transpose(0, 2, 1, 3)
    q = q * cos[None, None] + rot_half(q) * sin[None, None]
    k = k * cos[None, None] + rot_half(k) * sin[None, None]
    scores = jnp.einsum("bhqd,bhkd->bhqk", q, k) / jnp.sqrt(jnp.float32(HEAD_DIM))
    causal = jnp.arange(Sq)[None, :] <= jnp.arange(Sq)[:, None]
    scores = jnp.where(causal[None, None], scores, NEG_INF)
    p = jax.nn.softmax(scores, axis=-1)
    attn = jnp.einsum("bhqk,bhkd->bhqd", p, v).transpose(0, 2, 1, 3).reshape(Bq, Sq, Hq)
    attn = attn @ params["wo"]
    h1 = x + attn
    xn2 = rms(h1, params["ln2"])
    gate = xn2 @ params["wg"]
    up = xn2 @ params["wu"]
    down = (jax.nn.silu(gate) * up) @ params["wd"]
    return h1 + down


def make_params(key):
    ks = jax.random.split(key, 7)
    scale = 0.02
    return {
        "wq": scale * jax.random.normal(ks[0], (H, H), jnp.float32),
        "wk": scale * jax.random.normal(ks[1], (H, H), jnp.float32),
        "wv": scale * jax.random.normal(ks[2], (H, H), jnp.float32),
        "wo": scale * jax.random.normal(ks[3], (H, H), jnp.float32),
        "wg": scale * jax.random.normal(ks[4], (H, INTER), jnp.float32),
        "wu": scale * jax.random.normal(ks[5], (H, INTER), jnp.float32),
        "wd": scale * jax.random.normal(ks[6], (INTER, H), jnp.float32),
        "ln1": jnp.ones((1, H), jnp.float32),
        "ln2": jnp.ones((1, H), jnp.float32),
    }


if __name__ == "__main__":
    key = jax.random.PRNGKey(0)
    kx, kp = jax.random.split(key)
    x = jax.random.normal(kx, (B, S, H), jnp.float32)
    params = make_params(kp)

    # rotary embedding tables (position_ids = arange(S))
    inv_freq = 1.0 / (ROPE_BASE ** (jnp.arange(0, HEAD_DIM, 2, dtype=jnp.float32) / HEAD_DIM))
    pos = jnp.arange(S, dtype=jnp.float32)
    freqs = pos[:, None] * inv_freq[None, :]                 # (S, HEAD_DIM//2)
    emb = jnp.concatenate([freqs, freqs], axis=-1)           # (S, HEAD_DIM)
    cos, sin = jnp.cos(emb), jnp.sin(emb)

    out = llama_decoder_layer(x, cos, sin, params)
    out = jax.block_until_ready(out)

    ref = reference_decoder_layer(x, cos, sin, params)
    assert out.shape == (B, S, H)
    max_err = float(jnp.max(jnp.abs(out - ref)))
    # bf16 weights/activations + approx reciprocal -> slightly looser tolerance
    assert jnp.allclose(out, ref, atol=2e-2, rtol=2e-2), \
        f"mismatch vs reference (max abs err {max_err})"

    # TODO(synk): use_cache / output_attentions branches (present_key_value,
    # attention weights) are not returned; only hidden_states is produced.
    print("KERNEL_OK")
</pallas_src>

<mosaic_0001>
module attributes {stable_mosaic.version = 11 : i64} {
  func.func @decoder_layer_kernel(%arg0: i32, %arg1: memref<1x128x256xf32, #tpu.memory_space<vmem>>, %arg2: memref<128x128xf32, #tpu.memory_space<vmem>>, %arg3: memref<128x128xf32, #tpu.memory_space<vmem>>, %arg4: memref<2x256x128xbf16, #tpu.memory_space<vmem>>, %arg5: memref<2x256x128xbf16, #tpu.memory_space<vmem>>, %arg6: memref<2x256x128xbf16, #tpu.memory_space<vmem>>, %arg7: memref<2x128x256xbf16, #tpu.memory_space<vmem>>, %arg8: memref<256x512xbf16, #tpu.memory_space<vmem>>, %arg9: memref<256x512xbf16, #tpu.memory_space<vmem>>, %arg10: memref<512x256xbf16, #tpu.memory_space<vmem>>, %arg11: memref<1x256xf32, #tpu.memory_space<vmem>>, %arg12: memref<1x256xf32, #tpu.memory_space<vmem>>, %arg13: memref<1x128x256xf32, #tpu.memory_space<vmem>>) attributes {dimension_semantics = [#tpu.dimension_semantics<parallel>], iteration_bounds = array<i64: 4>, scalar_prefetch = 0 : i64, scratch_operands = 0 : i64, tpu.core_type = #tpu.core_type<tc>, window_params = [{transform_indices = @transform_0, window_bounds = array<i64: 1, 128, 256>}, {pipeline_mode = #tpu.pipeline_mode<synchronous>, transform_indices = @transform_1, window_bounds = array<i64: 128, 128>}, {pipeline_mode = #tpu.pipeline_mode<synchronous>, transform_indices = @transform_2, window_bounds = array<i64: 128, 128>}, {pipeline_mode = #tpu.pipeline_mode<synchronous>, transform_indices = @transform_3, window_bounds = array<i64: 2, 256, 128>}, {pipeline_mode = #tpu.pipeline_mode<synchronous>, transform_indices = @transform_4, window_bounds = array<i64: 2, 256, 128>}, {pipeline_mode = #tpu.pipeline_mode<synchronous>, transform_indices = @transform_5, window_bounds = array<i64: 2, 256, 128>}, {pipeline_mode = #tpu.pipeline_mode<synchronous>, transform_indices = @transform_6, window_bounds = array<i64: 2, 128, 256>}, {pipeline_mode = #tpu.pipeline_mode<synchronous>, transform_indices = @transform_7, window_bounds = array<i64: 256, 512>}, {pipeline_mode = #tpu.pipeline_mode<synchronous>, transform_indices = @transform_8, window_bounds = array<i64: 256, 512>}, {pipeline_mode = #tpu.pipeline_mode<synchronous>, transform_indices = @transform_9, window_bounds = array<i64: 512, 256>}, {pipeline_mode = #tpu.pipeline_mode<synchronous>, transform_indices = @transform_10, window_bounds = array<i64: 1, 256>}, {pipeline_mode = #tpu.pipeline_mode<synchronous>, transform_indices = @transform_11, window_bounds = array<i64: 1, 256>}, {transform_indices = @transform_12, window_bounds = array<i64: 1, 128, 256>}]} {
    %c0 = arith.constant 0 : index
    %c0_0 = arith.constant 0 : index
    %c0_1 = arith.constant 0 : index
    %0 = vector.load %arg1[%c0, %c0_0, %c0_1] : memref<1x128x256xf32, #tpu.memory_space<vmem>>, vector<1x128x256xf32>
    %1 = vector.shape_cast %0 : vector<1x128x256xf32> to vector<128x256xf32>
    %c0_2 = arith.constant 0 : index
    %c0_3 = arith.constant 0 : index
    %2 = vector.load %arg2[%c0_2, %c0_3] : memref<128x128xf32, #tpu.memory_space<vmem>>, vector<128x128xf32>
    %c0_4 = arith.constant 0 : index
    %c0_5 = arith.constant 0 : index
    %3 = vector.load %arg3[%c0_4, %c0_5] : memref<128x128xf32, #tpu.memory_space<vmem>>, vector<128x128xf32>
    %c0_6 = arith.constant 0 : index
    %c0_7 = arith.constant 0 : index
    %4 = vector.load %arg11[%c0_6, %c0_7] : memref<1x256xf32, #tpu.memory_space<vmem>>, vector<1x256xf32>
    %c0_8 = arith.constant 0 : index
    %c0_9 = arith.constant 0 : index
    %5 = vector.load %arg12[%c0_8, %c0_9] : memref<1x256xf32, #tpu.memory_space<vmem>>, vector<1x256xf32>
    %6 = arith.mulf %1, %1 : vector<128x256xf32>
    %cst = arith.constant dense<0.000000e+00> : vector<128xf32>
    %7 = vector.multi_reduction <add>, %6, %cst [1] : vector<128x256xf32> to vector<128xf32>
    %8 = vector.shape_cast %7 : vector<128xf32> to vector<128x1xf32>
    %cst_10 = arith.constant 2.560000e+02 : f32
    %9 = vector.broadcast %cst_10 : f32 to vector<128x1xf32>
    %10 = arith.divf %8, %9 : vector<128x1xf32>
    %cst_11 = arith.constant 9.99999997E-7 : f32
    %11 = vector.broadcast %cst_11 : f32 to vector<128x1xf32>
    %12 = arith.addf %10, %11 : vector<128x1xf32>
    %13 = math.rsqrt %12 : vector<128x1xf32>
    %14 = vector.broadcast %13 : vector<128x1xf32> to vector<128x256xf32>
    %15 = arith.mulf %1, %14 : vector<128x256xf32>
    %16 = vector.broadcast %4 : vector<1x256xf32> to vector<128x256xf32>
    %17 = arith.mulf %15, %16 : vector<128x256xf32>
    %18 = arith.truncf %17 : vector<128x256xf32> to vector<128x256xbf16>
    %19 = vector.shape_cast %18 : vector<128x256xbf16> to vector<1x128x256xbf16>
    %20 = vector.shape_cast %19 : vector<1x128x256xbf16> to vector<1x128x256xbf16>
    %21 = vector.broadcast %20 : vector<1x128x256xbf16> to vector<2x128x256xbf16>
    %c0_12 = arith.constant 0 : index
    %c0_13 = arith.constant 0 : index
    %c0_14 = arith.constant 0 : index
    %22 = vector.load %arg4[%c0_12, %c0_13, %c0_14] : memref<2x256x128xbf16, #tpu.memory_space<vmem>>, vector<2x256x128xbf16>
    "tpu.trace_start"() <{level = 10 : i32, message = "nsk,nkd->nsd"}> : () -> ()
    %cst_15 = arith.constant dense<0.000000e+00> : vector<2x128x128xf32>
    %23 = tpu.matmul %21, %22, %cst_15 {dimension_numbers = #tpu.dot_dimension_numbers<[2], [1], [1], [2], [0, 0, 0, 1, 1, 2], [0], [0]>} : vector<2x128x256xbf16>, vector<2x256x128xbf16>, vector<2x128x128xf32> -> vector<2x128x128xf32>
    "tpu.trace_stop"() : () -> ()
    %c0_16 = arith.constant 0 : index
    %c0_17 = arith.constant 0 : index
    %c0_18 = arith.constant 0 : index
    %24 = vector.load %arg5[%c0_16, %c0_17, %c0_18] : memref<2x256x128xbf16, #tpu.memory_space<vmem>>, vector<2x256x128xbf16>
    "tpu.trace_start"() <{level = 10 : i32, message = "nsk,nkd->nsd"}> : () -> ()
    %cst_19 = arith.constant dense<0.000000e+00> : vector<2x128x128xf32>
    %25 = tpu.matmul %21, %24, %cst_19 {dimension_numbers = #tpu.dot_dimension_numbers<[2], [1], [1], [2], [0, 0, 0, 1, 1, 2], [0], [0]>} : vector<2x128x256xbf16>, vector<2x256x128xbf16>, vector<2x128x128xf32> -> vector<2x128x128xf32>
    "tpu.trace_stop"() : () -> ()
    %c0_20 = arith.constant 0 : index
    %c0_21 = arith.constant 0 : index
    %c0_22 = arith.constant 0 : index
    %26 = vector.load %arg6[%c0_20, %c0_21, %c0_22] : memref<2x256x128xbf16, #tpu.memory_space<vmem>>, vector<2x256x128xbf16>
    "tpu.trace_start"() <{level = 10 : i32, message = "nsk,nkd->nsd"}> : () -> ()
    %cst_23 = arith.constant dense<0.000000e+00> : vector<2x128x128xf32>
    %27 = tpu.matmul %21, %26, %cst_23 {dimension_numbers = #tpu.dot_dimension_numbers<[2], [1], [1], [2], [0, 0, 0, 1, 1, 2], [0], [0]>} : vector<2x128x256xbf16>, vector<2x256x128xbf16>, vector<2x128x128xf32> -> vector<2x128x128xf32>
    "tpu.trace_stop"() : () -> ()
    %28 = vector.shape_cast %23 : vector<2x128x128xf32> to vector<256x128xf32>
    %c64_i32 = arith.constant 64 : i32
    %29 = tpu.dynamic_rotate %28 by %c64_i32 dim 1 : vector<256x128xf32>, i32 -> vector<256x128xf32>
    %30 = vector.shape_cast %2 : vector<128x128xf32> to vector<1x128x128xf32>
    %31 = vector.broadcast %30 : vector<1x128x128xf32> to vector<2x128x128xf32>
    %32 = arith.mulf %23, %31 : vector<2x128x128xf32>
    %33 = vector.shape_cast %29 : vector<256x128xf32> to vector<2x128x128xf32>
    %34 = vector.shape_cast %3 : vector<128x128xf32> to vector<1x128x128xf32>
    %35 = vector.broadcast %34 : vector<1x128x128xf32> to vector<2x128x128xf32>
    %36 = arith.mulf %33, %35 : vector<2x128x128xf32>
    %37 = arith.addf %32, %36 : vector<2x128x128xf32>
    %38 = vector.shape_cast %25 : vector<2x128x128xf32> to vector<256x128xf32>
    %c64_i32_24 = arith.constant 64 : i32
    %39 = tpu.dynamic_rotate %38 by %c64_i32_24 dim 1 : vector<256x128xf32>, i32 -> vector<256x128xf32>
    %40 = vector.shape_cast %2 : vector<128x128xf32> to vector<1x128x128xf32>
    %41 = vector.broadcast %40 : vector<1x128x128xf32> to vector<2x128x128xf32>
    %42 = arith.mulf %25, %41 : vector<2x128x128xf32>
    %43 = vector.shape_cast %39 : vector<256x128xf32> to vector<2x128x128xf32>
    %44 = vector.shape_cast %3 : vector<128x128xf32> to vector<1x128x128xf32>
    %45 = vector.broadcast %44 : vector<1x128x128xf32> to vector<2x128x128xf32>
    %46 = arith.mulf %43, %45 : vector<2x128x128xf32>
    %47 = arith.addf %42, %46 : vector<2x128x128xf32>
    %cst_25 = arith.constant 1.280000e+02 : f32
    %48 = math.sqrt %cst_25 : f32
    %cst_26 = arith.constant 1.000000e+00 : f32
    %49 = arith.divf %cst_26, %48 : f32
    %50 = arith.truncf %37 : vector<2x128x128xf32> to vector<2x128x128xbf16>
    %51 = arith.truncf %47 : vector<2x128x128xf32> to vector<2x128x128xbf16>
    "tpu.trace_start"() <{level = 10 : i32, message = "nqd,nkd->nqk"}> : () -> ()
    %cst_27 = arith.constant dense<0.000000e+00> : vector<2x128x128xf32>
    %52 = tpu.matmul %50, %51, %cst_27 {dimension_numbers = #tpu.dot_dimension_numbers<[2], [2], [1], [1], [0, 0, 0, 1, 1, 1], [0], [0]>} : vector<2x128x128xbf16>, vector<2x128x128xbf16>, vector<2x128x128xf32> -> vector<2x128x128xf32>
    "tpu.trace_stop"() : () -> ()
    %53 = vector.broadcast %49 : f32 to vector<2x128x128xf32>
    %54 = arith.mulf %52, %53 : vector<2x128x128xf32>
    %55 = tpu.iota {dimensions = array<i32: 0>} : vector<128x128xi32>
    %56 = tpu.iota {dimensions = array<i32: 1>} : vector<128x128xi32>
    %57 = arith.cmpi sle, %56, %55 : vector<128x128xi32>
    %58 = vector.shape_cast %57 : vector<128x128xi1> to vector<1x128x128xi1>
    %cst_28 = arith.constant -1.000000e+30 : f32
    %59 = vector.shape_cast %58 : vector<1x128x128xi1> to vector<1x128x128xi1>
    %60 = vector.broadcast %59 : vector<1x128x128xi1> to vector<2x128x128xi1>
    %61 = vector.broadcast %cst_28 : f32 to vector<2x128x128xf32>
    %62 = arith.select %60, %54, %61 : vector<2x128x128xi1>, vector<2x128x128xf32>
    %cst_29 = arith.constant dense<0xFF800000> : vector<2x128xf32>
    %63 = vector.multi_reduction <maximumf>, %62, %cst_29 [2] : vector<2x128x128xf32> to vector<2x128xf32>
    %64 = vector.shape_cast %63 : vector<2x128xf32> to vector<2x128x1xf32>
    %65 = vector.broadcast %64 : vector<2x128x1xf32> to vector<2x128x128xf32>
    %66 = arith.subf %62, %65 : vector<2x128x128xf32>
    %67 = math.exp %66 : vector<2x128x128xf32>
    %cst_30 = arith.constant dense<0.000000e+00> : vector<2x128xf32>
    %68 = vector.multi_reduction <add>, %67, %cst_30 [2] : vector<2x128x128xf32> to vector<2x128xf32>
    %69 = vector.shape_cast %68 : vector<2x128xf32> to vector<2x128x1xf32>
    %70 = tpu.reciprocal %69 {approx = true} : vector<2x128x1xf32> -> vector<2x128x1xf32>
    %71 = vector.broadcast %70 : vector<2x128x1xf32> to vector<2x128x128xf32>
    %72 = arith.mulf %67, %71 : vector<2x128x128xf32>
    %73 = arith.truncf %72 : vector<2x128x128xf32> to vector<2x128x128xbf16>
    %74 = arith.truncf %27 : vector<2x128x128xf32> to vector<2x128x128xbf16>
    "tpu.trace_start"() <{level = 10 : i32, message = "nqk,nkd->nqd"}> : () -> ()
    %cst_31 = arith.constant dense<0.000000e+00> : vector<2x128x128xf32>
    %75 = tpu.matmul %73, %74, %cst_31 {dimension_numbers = #tpu.dot_dimension_numbers<[2], [1], [1], [2], [0, 0, 0, 1, 1, 2], [0], [0]>} : vector<2x128x128xbf16>, vector<2x128x128xbf16>, vector<2x128x128xf32> -> vector<2x128x128xf32>
    "tpu.trace_stop"() : () -> ()
    %76 = arith.truncf %75 : vector<2x128x128xf32> to vector<2x128x128xbf16>
    %c0_32 = arith.constant 0 : index
    %c0_33 = arith.constant 0 : index
    %c0_34 = arith.constant 0 : index
    %77 = vector.load %arg7[%c0_32, %c0_33, %c0_34] : memref<2x128x256xbf16, #tpu.memory_space<vmem>>, vector<2x128x256xbf16>
    "tpu.trace_start"() <{level = 10 : i32, message = "nqd,ndh->nqh"}> : () -> ()
    %cst_35 = arith.constant dense<0.000000e+00> : vector<2x128x256xf32>
    %78 = tpu.matmul %76, %77, %cst_35 {dimension_numbers = #tpu.dot_dimension_numbers<[2], [1], [1], [2], [0, 0, 0, 1, 1, 2], [0], [0]>} : vector<2x128x128xbf16>, vector<2x128x256xbf16>, vector<2x128x256xf32> -> vector<2x128x256xf32>
    "tpu.trace_stop"() : () -> ()
    %cst_36 = arith.constant dense<0.000000e+00> : vector<128x256xf32>
    %79 = vector.multi_reduction <add>, %78, %cst_36 [0] : vector<2x128x256xf32> to vector<128x256xf32>
    %80 = arith.addf %1, %79 : vector<128x256xf32>
    %81 = arith.mulf %80, %80 : vector<128x256xf32>
    %cst_37 = arith.constant dense<0.000000e+00> : vector<128xf32>
    %82 = vector.multi_reduction <add>, %81, %cst_37 [1] : vector<128x256xf32> to vector<128xf32>
    %83 = vector.shape_cast %82 : vector<128xf32> to vector<128x1xf32>
    %cst_38 = arith.constant 2.560000e+02 : f32
    %84 = vector.broadcast %cst_38 : f32 to vector<128x1xf32>
    %85 = arith.divf %83, %84 : vector<128x1xf32>
    %cst_39 = arith.constant 9.99999997E-7 : f32
    %86 = vector.broadcast %cst_39 : f32 to vector<128x1xf32>
    %87 = arith.addf %85, %86 : vector<128x1xf32>
    %88 = math.rsqrt %87 : vector<128x1xf32>
    %89 = vector.broadcast %88 : vector<128x1xf32> to vector<128x256xf32>
    %90 = arith.mulf %80, %89 : vector<128x256xf32>
    %91 = vector.broadcast %5 : vector<1x256xf32> to vector<128x256xf32>
    %92 = arith.mulf %90, %91 : vector<128x256xf32>
    %93 = arith.truncf %92 : vector<128x256xf32> to vector<128x256xbf16>
    %c0_40 = arith.constant 0 : index
    %c0_41 = arith.constant 0 : index
    %94 = vector.load %arg8[%c0_40, %c0_41] : memref<256x512xbf16, #tpu.memory_space<vmem>>, vector<256x512xbf16>
    %cst_42 = arith.constant dense<0.000000e+00> : vector<128x512xf32>
    %95 = tpu.matmul %93, %94, %cst_42 {dimension_numbers = #tpu.dot_dimension_numbers<[1], [0], [0], [1], [0, 0, 1, 1], [], []>} : vector<128x256xbf16>, vector<256x512xbf16>, vector<128x512xf32> -> vector<128x512xf32>
    %c0_43 = arith.constant 0 : index
    %c0_44 = arith.constant 0 : index
    %96 = vector.load %arg9[%c0_43, %c0_44] : memref<256x512xbf16, #tpu.memory_space<vmem>>, vector<256x512xbf16>
    %cst_45 = arith.constant dense<0.000000e+00> : vector<128x512xf32>
    %97 = tpu.matmul %93, %96, %cst_45 {dimension_numbers = #tpu.dot_dimension_numbers<[1], [0], [0], [1], [0, 0, 1, 1], [], []>} : vector<128x256xbf16>, vector<256x512xbf16>, vector<128x512xf32> -> vector<128x512xf32>
    %98 = arith.negf %95 : vector<128x512xf32>
    %99 = math.exp %98 : vector<128x512xf32>
    %cst_46 = arith.constant 1.000000e+00 : f32
    %100 = vector.broadcast %cst_46 : f32 to vector<128x512xf32>
    %101 = arith.addf %100, %99 : vector<128x512xf32>
    %102 = arith.divf %100, %101 : vector<128x512xf32>
    %103 = arith.mulf %95, %102 : vector<128x512xf32>
    %104 = arith.mulf %103, %97 : vector<128x512xf32>
    %105 = arith.truncf %104 : vector<128x512xf32> to vector<128x512xbf16>
    %c0_47 = arith.constant 0 : index
    %c0_48 = arith.constant 0 : index
    %106 = vector.load %arg10[%c0_47, %c0_48] : memref<512x256xbf16, #tpu.memory_space<vmem>>, vector<512x256xbf16>
    %cst_49 = arith.constant dense<0.000000e+00> : vector<128x256xf32>
    %107 = tpu.matmul %105, %106, %cst_49 {dimension_numbers = #tpu.dot_dimension_numbers<[1], [0], [0], [1], [0, 0, 1, 1], [], []>} : vector<128x512xbf16>, vector<512x256xbf16>, vector<128x256xf32> -> vector<128x256xf32>
    %108 = arith.addf %80, %107 : vector<128x256xf32>
    %c0_50 = arith.constant 0 : index
    %c0_51 = arith.constant 0 : index
    %c0_52 = arith.constant 0 : index
    %109 = vector.load %arg13[%c0_50, %c0_51, %c0_52] : memref<1x128x256xf32, #tpu.memory_space<vmem>>, vector<1x128x256xf32>
    %110 = vector.shape_cast %109 : vector<1x128x256xf32> to vector<128x256xf32>
    %111 = vector.shape_cast %108 : vector<128x256xf32> to vector<1x128x256xf32>
    tpu.vector_store %arg13[%c0_50, %c0_51, %c0_52], %111 {strides = array<i32>} : memref<1x128x256xf32, #tpu.memory_space<vmem>>, vector<1x128x256xf32>,
    return
  }
  func.func @transform_0(%arg0: i32) -> (i32, i32, i32) {
    %c0_i32 = arith.constant 0 : i32
    %c0_i32_0 = arith.constant 0 : i32
    %c0_i32_1 = arith.constant 0 : i32
    return %arg0, %c0_i32, %c0_i32_0 : i32, i32, i32
  }
  func.func @transform_1(%arg0: i32) -> (i32, i32) {
    %c0_i32 = arith.constant 0 : i32
    %c0_i32_0 = arith.constant 0 : i32
    %c0_i32_1 = arith.constant 0 : i32
    return %c0_i32, %c0_i32_0 : i32, i32
  }
  func.func @transform_2(%arg0: i32) -> (i32, i32) {
    %c0_i32 = arith.constant 0 : i32
    %c0_i32_0 = arith.constant 0 : i32
    %c0_i32_1 = arith.constant 0 : i32
    return %c0_i32, %c0_i32_0 : i32, i32
  }
  func.func @transform_3(%arg0: i32) -> (i32, i32, i32) {
    %c0_i32 = arith.constant 0 : i32
    %c0_i32_0 = arith.constant 0 : i32
    %c0_i32_1 = arith.constant 0 : i32
    %c0_i32_2 = arith.constant 0 : i32
    return %c0_i32, %c0_i32_0, %c0_i32_1 : i32, i32, i32
  }
  func.func @transform_4(%arg0: i32) -> (i32, i32, i32) {
    %c0_i32 = arith.constant 0 : i32
    %c0_i32_0 = arith.constant 0 : i32
    %c0_i32_1 = arith.constant 0 : i32
    %c0_i32_2 = arith.constant 0 : i32
    return %c0_i32, %c0_i32_0, %c0_i32_1 : i32, i32, i32
  }
  func.func @transform_5(%arg0: i32) -> (i32, i32, i32) {
    %c0_i32 = arith.constant 0 : i32
    %c0_i32_0 = arith.constant 0 : i32
    %c0_i32_1 = arith.constant 0 : i32
    %c0_i32_2 = arith.constant 0 : i32
    return %c0_i32, %c0_i32_0, %c0_i32_1 : i32, i32, i32
  }
  func.func @transform_6(%arg0: i32) -> (i32, i32, i32) {
    %c0_i32 = arith.constant 0 : i32
    %c0_i32_0 = arith.constant 0 : i32
    %c0_i32_1 = arith.constant 0 : i32
    %c0_i32_2 = arith.constant 0 : i32
    return %c0_i32, %c0_i32_0, %c0_i32_1 : i32, i32, i32
  }
  func.func @transform_7(%arg0: i32) -> (i32, i32) {
    %c0_i32 = arith.constant 0 : i32
    %c0_i32_0 = arith.constant 0 : i32
    %c0_i32_1 = arith.constant 0 : i32
    return %c0_i32, %c0_i32_0 : i32, i32
  }
  func.func @transform_8(%arg0: i32) -> (i32, i32) {
    %c0_i32 = arith.constant 0 : i32
    %c0_i32_0 = arith.constant 0 : i32
    %c0_i32_1 = arith.constant 0 : i32
    return %c0_i32, %c0_i32_0 : i32, i32
  }
  func.func @transform_9(%arg0: i32) -> (i32, i32) {
    %c0_i32 = arith.constant 0 : i32
    %c0_i32_0 = arith.constant 0 : i32
    %c0_i32_1 = arith.constant 0 : i32
    return %c0_i32, %c0_i32_0 : i32, i32
  }
  func.func @transform_10(%arg0: i32) -> (i32, i32) {
    %c0_i32 = arith.constant 0 : i32
    %c0_i32_0 = arith.constant 0 : i32
    %c0_i32_1 = arith.constant 0 : i32
    return %c0_i32, %c0_i32_0 : i32, i32
  }
  func.func @transform_11(%arg0: i32) -> (i32, i32) {
    %c0_i32 = arith.constant 0 : i32
    %c0_i32_0 = arith.constant 0 : i32
    %c0_i32_1 = arith.constant 0 : i32
    return %c0_i32, %c0_i32_0 : i32, i32
  }
  func.func @transform_12(%arg0: i32) -> (i32, i32, i32) {
    %c0_i32 = arith.constant 0 : i32
    %c0_i32_0 = arith.constant 0 : i32
    %c0_i32_1 = arith.constant 0 : i32
    return %arg0, %c0_i32, %c0_i32_0 : i32, i32, i32
  }
}

</mosaic_0001>

<llo_original>
// kernel: tpu_custom_call.1
$region0: #{tpu_custom_call.1}
  #allocation0 [shape = 'u32[]', space=smem, size = 0x4, offset = 0x4, fixed_abs, tag = 'smem constant byte address 0x4 - core index']
  #allocation1 [shape = 'u32[144,128]{1,0:T(1,128)}', space=vmem, size = 0x12000, scoped, tag = 'internal scratch']
  %s0 = inlined_call_operand.hbm [shape: f32[4,128,256], index: 0, kind: input, shape index: {}]
  %s1 = inlined_call_operand.hbm [shape: f32[128,128], index: 1, kind: input, shape index: {}]
  %s2 = inlined_call_operand.hbm [shape: f32[128,128], index: 2, kind: input, shape index: {}]
  %s3 = inlined_call_operand.hbm [shape: bf16[2,256,128], index: 3, kind: input, shape index: {}]
  %s4 = inlined_call_operand.hbm [shape: bf16[2,256,128], index: 4, kind: input, shape index: {}]
  %s5 = inlined_call_operand.hbm [shape: bf16[2,256,128], index: 5, kind: input, shape index: {}]
  %s6 = inlined_call_operand.hbm [shape: bf16[2,128,256], index: 6, kind: input, shape index: {}]
  %s7 = inlined_call_operand.hbm [shape: bf16[256,512], index: 7, kind: input, shape index: {}]
  %s8 = inlined_call_operand.hbm [shape: bf16[256,512], index: 8, kind: input, shape index: {}]
  %s9 = inlined_call_operand.hbm [shape: bf16[512,256], index: 9, kind: input, shape index: {}]
  %s10 = inlined_call_operand.vmem [shape: f32[1,256], index: 10, kind: input, shape index: {}]
  %s11 = inlined_call_operand.vmem [shape: f32[1,256], index: 11, kind: input, shape index: {}]
  %s12 = inlined_call_operand.hbm [shape: f32[4,128,256], index: 12, kind: output, shape index: {}]
  %s13 = sld [smem:[#allocation0]]
  $region121: #{tpu_custom_call.1} parent=0
    _
  %s15 = ssub.s32 1, %s13
  %s16 = scalar_select 0, %s15, %s13
  $region1: #{tpu_custom_call.1} parent=0
    #allocation2 [shape = 'u8[262144]{0}', space=vmem, size = 0x40000, scoped, tag = 'input window, operand 0']
    #allocation3 [shape = 's32[2]{0}', space=sflag, size = 0x8, scoped, tag = 'scoped memory for tpu_custom_call.1']
    #allocation4 [shape = 's32[2]{0}', space=sflag, size = 0x8, scoped, tag = 'scoped memory for tpu_custom_call.1']
    #allocation5 [shape = 'u8[65536]{0}', space=vmem, size = 0x10000, scoped, tag = 'input window, operand 1, single buffered']
    #allocation6 [shape = 's32[1]{0}', space=sflag, size = 0x4, scoped, tag = 'scoped memory for tpu_custom_call.1']
    #allocation7 [shape = 'u8[65536]{0}', space=vmem, size = 0x10000, scoped, tag = 'input window, operand 2, single buffered']
    #allocation8 [shape = 'u8[131072]{0}', space=vmem, size = 0x20000, scoped, tag = 'input window, operand 3, single buffered']
    #allocation9 [shape = 's32[1]{0}', space=sflag, size = 0x4, scoped, tag = 'scoped memory for tpu_custom_call.1']
    #allocation10 [shape = 'u8[131072]{0}', space=vmem, size = 0x20000, scoped, tag = 'input window, operand 4, single buffered']
    #allocation11 [shape = 'u8[131072]{0}', space=vmem, size = 0x20000, scoped, tag = 'input window, operand 5, single buffered']
    #allocation12 [shape = 's32[1]{0}', space=sflag, size = 0x4, scoped, tag = 'scoped memory for tpu_custom_call.1']
    #allocation13 [shape = 'u8[131072]{0}', space=vmem, size = 0x20000, scoped, tag = 'input window, operand 6, single buffered']
    #allocation14 [shape = 'u8[262144]{0}', space=vmem, size = 0x40000, scoped, tag = 'input window, operand 7, single buffered']
    #allocation15 [shape = 's32[1]{0}', space=sflag, size = 0x4, scoped, tag = 'scoped memory for tpu_custom_call.1']
    #allocation16 [shape = 'u8[262144]{0}', space=vmem, size = 0x40000, scoped, tag = 'input window, operand 8, single buffered']
    #allocation17 [shape = 'u8[262144]{0}', space=vmem, size = 0x40000, scoped, tag = 'input window, operand 9, single buffered']
    #allocation18 [shape = 's32[1]{0}', space=sflag, size = 0x4, scoped, tag = 'scoped memory for tpu_custom_call.1']
    #allocation19 [shape = 'u8[262144]{0}', space=vmem, size = 0x40000, scoped, tag = 'output window, operand 0']
    %17 = vsyncpa [#allocation3], 0
    %s18 = scalar_lea.sflag [#allocation3], 1
    %19 = vsyncpa %s18, 0
    %20 = vsyncpa [#allocation6], 0
    %21 = vsyncpa [#allocation9], 0
    %22 = vsyncpa [#allocation12], 0
    %23 = vsyncpa [#allocation15], 0
    %24 = vsyncpa [#allocation18], 0
    %25 = vsyncpa [#allocation4], 0
    %s26 = scalar_lea.sflag [#allocation4], 1
    %27 = vsyncpa %s26, 0
    loop: start=0, step=1, limit=6
    $region2: #{tpu_custom_call.1} parent=1 // loop_pre_header
      _
    $region3: #{tpu_custom_call.1} parent=1 // loop_header
      %s29 = sphi 0, %s33
      %p30 = scmp.ge.s32.totalorder %s29, 6
      %s39 = sphi 0, %s41
      %s42 = sphi 0, %s39
      %s43 = sphi 0, %s42
      %s59 = sphi 0, %s43
      %s63 = sphi 0, %s63
      %s65 = sphi 0, %s63
      %s66 = sphi 0, %s65
      %s80 = sphi 0, %s66
      %s84 = sphi 0, %s84
      %s86 = sphi 0, %s84
      %s87 = sphi 0, %s86
      %s101 = sphi 0, %s87
      %s105 = sphi 0, %s105
      %s107 = sphi 0, %s105
      %s108 = sphi 0, %s107
      %s122 = sphi 0, %s108
      %s126 = sphi 0, %s126
      %s128 = sphi 0, %s126
      %s129 = sphi 0, %s128
      %s143 = sphi 0, %s129
      %s147 = sphi 0, %s147
      %s149 = sphi 0, %s147
      %s150 = sphi 0, %s149
      %s164 = sphi 0, %s150
      %s168 = sphi 0, %s168
      %s170 = sphi 0, %s168
      %s171 = sphi 0, %s170
      %s185 = sphi 0, %s171
      %s189 = sphi 0, %s189
      %s191 = sphi 0, %s189
      %s192 = sphi 0, %s191
      %s206 = sphi 0, %s192
      %s210 = sphi 0, %s210
      %s212 = sphi 0, %s210
      %s213 = sphi 0, %s212
      %s227 = sphi 0, %s213
      %s231 = sphi 0, %s231
      %s233 = sphi 0, %s231
      %s234 = sphi 0, %s233
      %s248 = sphi 0, %s234
      %s252 = sphi 0, %s252
      %s254 = sphi 0, %s252
      %s255 = sphi 0, %s254
      %s269 = sphi 0, %s255
      %s273 = sphi 0, %s273
      %s275 = sphi 0, %s273
      %s276 = sphi 0, %s275
      %s290 = sphi 0, %s276
      %s296 = sphi 0, %s298
      %s299 = sphi 0, %s296
      %s300 = sphi 0, %s299
      %s316 = sphi 0, %s300
    $region4: #{tpu_custom_call.1} parent=1 // loop_header_branch
      %32 = sbr.rel (%p30) target = $region8
    $region5: #{tpu_custom_call.1} parent=1 // loop_body
      %s34 = ssub.s32 %s29, 1
      %s35 = ssub.s32 %s29, 2
      %s36 = sadd.s32 %s29, 1
      %s37 = ssub.s32 %s29, %s36
      %p38 = scmp.eq.s32.totalorder %s37, 0
      %s40 = sadd.s32 %s39, 1
      %s41 = scalar_select %p38, %s39, %s40
      %p44 = pneg %p38
      %p45 = scmp.eq.s32.totalorder %s29, 3
      %p46 = por %p44, %p45
      %p47 = scmp.ne.s32.totalorder %s39, %s42
      %p48 = scmp.eq.s32.totalorder %s29, 0
      %p49 = por %p47, %p48
      %p50 = scmp.ne.s32.totalorder %s39, %s42
      %p51 = scmp.eq.s32.totalorder %s34, 3
      %p52 = por %p50, %p51
      %p53 = scmp.ne.s32.totalorder %s42, %s43
      %p54 = scmp.eq.s32.totalorder %s34, 0
      %p55 = por %p53, %p54
      %p56 = scmp.ne.s32.totalorder %s42, %s43
      %p57 = scmp.eq.s32.totalorder %s35, 3
      %p58 = por %p56, %p57
      %p60 = scmp.ne.s32.totalorder %s43, %s59
      %p61 = scmp.eq.s32.totalorder %s35, 0
      %p62 = por %p60, %p61
      %s64 = sadd.s32 %s63, 1
      %p67 = scmp.eq.s32.totalorder %s29, 3
      %p68 = scmp.ne.s32.totalorder %s63, %s65
      %p69 = scmp.eq.s32.totalorder %s29, 0
      %p70 = por %p68, %p69
      %p71 = scmp.ne.s32.totalorder %s63, %s65
      %p72 = scmp.eq.s32.totalorder %s34, 3
      %p73 = por %p71, %p72
      %p74 = scmp.ne.s32.totalorder %s65, %s66
      %p75 = scmp.eq.s32.totalorder %s34, 0
      %p76 = por %p74, %p75
      %p77 = scmp.ne.s32.totalorder %s65, %s66
      %p78 = scmp.eq.s32.totalorder %s35, 3
      %p79 = por %p77, %p78
      %p81 = scmp.ne.s32.totalorder %s66, %s80
      %p82 = scmp.eq.s32.totalorder %s35, 0
      %p83 = por %p81, %p82
      %s85 = sadd.s32 %s84, 1
      %p88 = scmp.eq.s32.totalorder %s29, 3
      %p89 = scmp.ne.s32.totalorder %s84, %s86
      %p90 = scmp.eq.s32.totalorder %s29, 0
      %p91 = por %p89, %p90
      %p92 = scmp.ne.s32.totalorder %s84, %s86
      %p93 = scmp.eq.s32.totalorder %s34, 3
      %p94 = por %p92, %p93
      %p95 = scmp.ne.s32.totalorder %s86, %s87
      %p96 = scmp.eq.s32.totalorder %s34, 0
      %p97 = por %p95, %p96
      %p98 = scmp.ne.s32.totalorder %s86, %s87
      %p99 = scmp.eq.s32.totalorder %s35, 3
      %p100 = por %p98, %p99
      %p102 = scmp.ne.s32.totalorder %s87, %s101
      %p103 = scmp.eq.s32.totalorder %s35, 0
      %p104 = por %p102, %p103
      %s106 = sadd.s32 %s105, 1
      %p109 = scmp.eq.s32.totalorder %s29, 3
      %p110 = scmp.ne.s32.totalorder %s105, %s107
      %p111 = scmp.eq.s32.totalorder %s29, 0
      %p112 = por %p110, %p111
      %p113 = scmp.ne.s32.totalorder %s105, %s107
      %p114 = scmp.eq.s32.totalorder %s34, 3
      %p115 = por %p113, %p114
      %p116 = scmp.ne.s32.totalorder %s107, %s108
      %p117 = scmp.eq.s32.totalorder %s34, 0
      %p118 = por %p116, %p117
      %p119 = scmp.ne.s32.totalorder %s107, %s108
      %p120 = scmp.eq.s32.totalorder %s35, 3
      %p121 = por %p119, %p120
      %p123 = scmp.ne.s32.totalorder %s108, %s122
      %p124 = scmp.eq.s32.totalorder %s35, 0
      %p125 = por %p123, %p124
      %s127 = sadd.s32 %s126, 1
      %p130 = scmp.eq.s32.totalorder %s29, 3
      %p131 = scmp.ne.s32.totalorder %s126, %s128
      %p132 = scmp.eq.s32.totalorder %s29, 0
      %p133 = por %p131, %p132
      %p134 = scmp.ne.s32.totalorder %s126, %s128
      %p135 = scmp.eq.s32.totalorder %s34, 3
      %p136 = por %p134, %p135
      %p137 = scmp.ne.s32.totalorder %s128, %s129
      %p138 = scmp.eq.s32.totalorder %s34, 0
      %p139 = por %p137, %p138
      %p140 = scmp.ne.s32.totalorder %s128, %s129
      %p141 = scmp.eq.s32.totalorder %s35, 3
      %p142 = por %p140, %p141
      %p144 = scmp.ne.s32.totalorder %s129, %s143
      %p145 = scmp.eq.s32.totalorder %s35, 0
      %p146 = por %p144, %p145
      %s148 = sadd.s32 %s147, 1
      %p151 = scmp.eq.s32.totalorder %s29, 3
      %p152 = scmp.ne.s32.totalorder %s147, %s149
      %p153 = scmp.eq.s32.totalorder %s29, 0
      %p154 = por %p152, %p153
      %p155 = scmp.ne.s32.totalorder %s147, %s149
      %p156 = scmp.eq.s32.totalorder %s34, 3
      %p157 = por %p155, %p156
      %p158 = scmp.ne.s32.totalorder %s149, %s150
      %p159 = scmp.eq.s32.totalorder %s34, 0
      %p160 = por %p158, %p159
      %p161 = scmp.ne.s32.totalorder %s149, %s150
      %p162 = scmp.eq.s32.totalorder %s35, 3
      %p163 = por %p161, %p162
      %p165 = scmp.ne.s32.totalorder %s150, %s164
      %p166 = scmp.eq.s32.totalorder %s35, 0
      %p167 = por %p165, %p166
      %s169 = sadd.s32 %s168, 1
      %p172 = scmp.eq.s32.totalorder %s29, 3
      %p173 = scmp.ne.s32.totalorder %s168, %s170
      %p174 = scmp.eq.s32.totalorder %s29, 0
      %p175 = por %p173, %p174
      %p176 = scmp.ne.s32.totalorder %s168, %s170
      %p177 = scmp.eq.s32.totalorder %s34, 3
      %p178 = por %p176, %p177
      %p179 = scmp.ne.s32.totalorder %s170, %s171
      %p180 = scmp.eq.s32.totalorder %s34, 0
      %p181 = por %p179, %p180
      %p182 = scmp.ne.s32.totalorder %s170, %s171
      %p183 = scmp.eq.s32.totalorder %s35, 3
      %p184 = por %p182, %p183
      %p186 = scmp.ne.s32.totalorder %s171, %s185
      %p187 = scmp.eq.s32.totalorder %s35, 0
      %p188 = por %p186, %p187
      %s190 = sadd.s32 %s189, 1
      %p193 = scmp.eq.s32.totalorder %s29, 3
      %p194 = scmp.ne.s32.totalorder %s189, %s191
      %p195 = scmp.eq.s32.totalorder %s29, 0
      %p196 = por %p194, %p195
      %p197 = scmp.ne.s32.totalorder %s189, %s191
      %p198 = scmp.eq.s32.totalorder %s34, 3
      %p199 = por %p197, %p198
      %p200 = scmp.ne.s32.totalorder %s191, %s192
      %p201 = scmp.eq.s32.totalorder %s34, 0
      %p202 = por %p200, %p201
      %p203 = scmp.ne.s32.totalorder %s191, %s192
      %p204 = scmp.eq.s32.totalorder %s35, 3
      %p205 = por %p203, %p204
      %p207 = scmp.ne.s32.totalorder %s192, %s206
      %p208 = scmp.eq.s32.totalorder %s35, 0
      %p209 = por %p207, %p208
      %s211 = sadd.s32 %s210, 1
      %p214 = scmp.eq.s32.totalorder %s29, 3
      %p215 = scmp.ne.s32.totalorder %s210, %s212
      %p216 = scmp.eq.s32.totalorder %s29, 0
      %p217 = por %p215, %p216
      %p218 = scmp.ne.s32.totalorder %s210, %s212
      %p219 = scmp.eq.s32.totalorder %s34, 3
      %p220 = por %p218, %p219
      %p221 = scmp.ne.s32.totalorder %s212, %s213
      %p222 = scmp.eq.s32.totalorder %s34, 0
      %p223 = por %p221, %p222
      %p224 = scmp.ne.s32.totalorder %s212, %s213
      %p225 = scmp.eq.s32.totalorder %s35, 3
      %p226 = por %p224, %p225
      %p228 = scmp.ne.s32.totalorder %s213, %s227
      %p229 = scmp.eq.s32.totalorder %s35, 0
      %p230 = por %p228, %p229
      %s232 = sadd.s32 %s231, 1
      %p235 = scmp.eq.s32.totalorder %s29, 3
      %p236 = scmp.ne.s32.totalorder %s231, %s233
      %p237 = scmp.eq.s32.totalorder %s29, 0
      %p238 = por %p236, %p237
      %p239 = scmp.ne.s32.totalorder %s231, %s233
      %p240 = scmp.eq.s32.totalorder %s34, 3
      %p241 = por %p239, %p240
      %p242 = scmp.ne.s32.totalorder %s233, %s234
      %p243 = scmp.eq.s32.totalorder %s34, 0
      %p244 = por %p242, %p243
      %p245 = scmp.ne.s32.totalorder %s233, %s234
      %p246 = scmp.eq.s32.totalorder %s35, 3
      %p247 = por %p245, %p246
      %p249 = scmp.ne.s32.totalorder %s234, %s248
      %p250 = scmp.eq.s32.totalorder %s35, 0
      %p251 = por %p249, %p250
      %s253 = sadd.s32 %s252, 1
      %p256 = scmp.eq.s32.totalorder %s29, 3
      %p257 = scmp.ne.s32.totalorder %s252, %s254
      %p258 = scmp.eq.s32.totalorder %s29, 0
      %p259 = por %p257, %p258
      %p260 = scmp.ne.s32.totalorder %s252, %s254
      %p261 = scmp.eq.s32.totalorder %s34, 3
      %p262 = por %p260, %p261
      %p263 = scmp.ne.s32.totalorder %s254, %s255
      %p264 = scmp.eq.s32.totalorder %s34, 0
      %p265 = por %p263, %p264
      %p266 = scmp.ne.s32.totalorder %s254, %s255
      %p267 = scmp.eq.s32.totalorder %s35, 3
      %p268 = por %p266, %p267
      %p270 = scmp.ne.s32.totalorder %s255, %s269
      %p271 = scmp.eq.s32.totalorder %s35, 0
      %p272 = por %p270, %p271
      %s274 = sadd.s32 %s273, 1
      %p277 = scmp.eq.s32.totalorder %s29, 3
      %p278 = scmp.ne.s32.totalorder %s273, %s275
      %p279 = scmp.eq.s32.totalorder %s29, 0
      %p280 = por %p278, %p279
      %p281 = scmp.ne.s32.totalorder %s273, %s275
      %p282 = scmp.eq.s32.totalorder %s34, 3
      %p283 = por %p281, %p282
      %p284 = scmp.ne.s32.totalorder %s275, %s276
      %p285 = scmp.eq.s32.totalorder %s34, 0
      %p286 = por %p284, %p285
      %p287 = scmp.ne.s32.totalorder %s275, %s276
      %p288 = scmp.eq.s32.totalorder %s35, 3
      %p289 = por %p287, %p288
      %p291 = scmp.ne.s32.totalorder %s276, %s290
      %p292 = scmp.eq.s32.totalorder %s35, 0
      %p293 = por %p291, %p292
      %s294 = ssub.s32 %s29, %s36
      %p295 = scmp.eq.s32.totalorder %s294, 0
      %s297 = sadd.s32 %s296, 1
      %s298 = scalar_select %p295, %s296, %s297
      %p301 = pneg %p295
      %p302 = scmp.eq.s32.totalorder %s29, 3
      %p303 = por %p301, %p302
      %p304 = scmp.ne.s32.totalorder %s296, %s299
      %p305 = scmp.eq.s32.totalorder %s29, 0
      %p306 = por %p304, %p305
      %p307 = scmp.ne.s32.totalorder %s296, %s299
      %p308 = scmp.eq.s32.totalorder %s34, 3
      %p309 = por %p307, %p308
      %p310 = scmp.ne.s32.totalorder %s299, %s300
      %p311 = scmp.eq.s32.totalorder %s34, 0
      %p312 = por %p310, %p311
      %p313 = scmp.ne.s32.totalorder %s299, %s300
      %p314 = scmp.eq.s32.totalorder %s35, 3
      %p315 = por %p313, %p314
      %p317 = scmp.ne.s32.totalorder %s300, %s316
      %p318 = scmp.eq.s32.totalorder %s35, 0
      %p319 = por %p317, %p318
      %p320 = scmp.le.s32.totalorder 1, %s29
      %p321 = scmp.lt.s32.totalorder %s29, 5
      %p322 = pnand %p320, %p321
      %p323 = pneg %p322
      // Predicated region
      $region9: #{tpu_custom_call.1} parent=5 // pred_check
        _
      $region10: #{tpu_custom_call.1} parent=5 // pred_check_branch
        %325 = sbr.rel (%p322) target = $region12
      $region11: #{tpu_custom_call.1} parent=5 // pred_region
        %s326 = ssub.s32 %s29, 1
        // Predicated region
        $region13: #{tpu_custom_call.1} parent=11 // pred_check
          %p327 = pneg %p76
        $region14: #{tpu_custom_call.1} parent=11 // pred_check_branch
          %329 = sbr.rel (%p327) target = $region16
        $region15: #{tpu_custom_call.1} parent=11 // pred_region
          %s331 = ssub.s32 2048, 2048
          %332 = vsyncadd [#allocation6], %s331
          %s333 = sshll.u32 [#allocation5], 4
          %s334 = int_to_ptr.vmem [resolvable:$true] %s333
          %339 = dma.hbm_to_vmem [thread:$0]  %s1, 2048, %s334, [#allocation6], 128, 128, 8
        $region16: #{tpu_custom_call.1} parent=11 // pred_fallthru
          _
        // Predicated region
        $region17: #{tpu_custom_call.1} parent=11 // pred_check
          %p340 = pneg %p97
        $region18: #{tpu_custom_call.1} parent=11 // pred_check_branch
          %342 = sbr.rel (%p340) target = $region20
        $region19: #{tpu_custom_call.1} parent=11 // pred_region
          %s344 = ssub.s32 2048, 2048
          %345 = vsyncadd [#allocation6], %s344
          %s346 = sshll.u32 [#allocation7], 4
          %s347 = int_to_ptr.vmem [resolvable:$true] %s346
          %352 = dma.hbm_to_vmem [thread:$0]  %s2, 2048, %s347, [#allocation6], 128, 128, 8
        $region20: #{tpu_custom_call.1} parent=11 // pred_fallthru
          _
        // Predicated region
        $region21: #{tpu_custom_call.1} parent=11 // pred_check
          %p353 = pneg %p118
        $region22: #{tpu_custom_call.1} parent=11 // pred_check_branch
          %355 = sbr.rel (%p353) target = $region24
        $region23: #{tpu_custom_call.1} parent=11 // pred_region
          %s357 = ssub.s32 4096, 4096
          %358 = vsyncadd [#allocation9], %s357
          %s359 = sshll.u32 [#allocation8], 4
          %s360 = int_to_ptr.vmem [resolvable:$true] %s359
          %365 = dma.hbm_to_vmem [thread:$0]  %s3, 4096, %s360, [#allocation9], 64, 64, 4
        $region24: #{tpu_custom_call.1} parent=11 // pred_fallthru
          _
        // Predicated region
        $region25: #{tpu_custom_call.1} parent=11 // pred_check
          %p366 = pneg %p139
        $region26: #{tpu_custom_call.1} parent=11 // pred_check_branch
          %368 = sbr.rel (%p366) target = $region28
        $region27: #{tpu_custom_call.1} parent=11 // pred_region
          %s370 = ssub.s32 4096, 4096
          %371 = vsyncadd [#allocation9], %s370
          %s372 = sshll.u32 [#allocation10], 4
          %s373 = int_to_ptr.vmem [resolvable:$true] %s372
          %378 = dma.hbm_to_vmem [thread:$0]  %s4, 4096, %s373, [#allocation9], 64, 64, 4
        $region28: #{tpu_custom_call.1} parent=11 // pred_fallthru
          _
        // Predicated region
        $region29: #{tpu_custom_call.1} parent=11 // pred_check
          %p379 = pneg %p160
        $region30: #{tpu_custom_call.1} parent=11 // pred_check_branch
          %381 = sbr.rel (%p379) target = $region32
        $region31: #{tpu_custom_call.1} parent=11 // pred_region
          %s383 = ssub.s32 4096, 4096
          %384 = vsyncadd [#allocation12], %s383
          %s385 = sshll.u32 [#allocation11], 4
          %s386 = int_to_ptr.vmem [resolvable:$true] %s385
          %391 = dma.hbm_to_vmem [thread:$0]  %s5, 4096, %s386, [#allocation12], 64, 64, 4
        $region32: #{tpu_custom_call.1} parent=11 // pred_fallthru
          _
        // Predicated region
        $region33: #{tpu_custom_call.1} parent=11 // pred_check
          %p392 = pneg %p181
        $region34: #{tpu_custom_call.1} parent=11 // pred_check_branch
          %394 = sbr.rel (%p392) target = $region36
        $region35: #{tpu_custom_call.1} parent=11 // pred_region
          %s396 = ssub.s32 4096, 4096
          %397 = vsyncadd [#allocation12], %s396
          %s398 = sshll.u32 [#allocation13], 4
          %s399 = int_to_ptr.vmem [resolvable:$true] %s398
          %404 = dma.hbm_to_vmem [thread:$0]  %s6, 4096, %s399, [#allocation12], 128, 128, 8
        $region36: #{tpu_custom_call.1} parent=11 // pred_fallthru
          _
        // Predicated region
        $region37: #{tpu_custom_call.1} parent=11 // pred_check
          %p405 = pneg %p202
        $region38: #{tpu_custom_call.1} parent=11 // pred_check_branch
          %407 = sbr.rel (%p405) target = $region40
        $region39: #{tpu_custom_call.1} parent=11 // pred_region
          %s409 = ssub.s32 8192, 8192
          %410 = vsyncadd [#allocation15], %s409
          %s411 = sshll.u32 [#allocation14], 4
          %s412 = int_to_ptr.vmem [resolvable:$true] %s411
          %417 = dma.hbm_to_vmem [thread:$0]  %s7, 8192, %s412, [#allocation15], 256, 256, 16
        $region40: #{tpu_custom_call.1} parent=11 // pred_fallthru
          _
        // Predicated region
        $region41: #{tpu_custom_call.1} parent=11 // pred_check
          %p418 = pneg %p223
        $region42: #{tpu_custom_call.1} parent=11 // pred_check_branch
          %420 = sbr.rel (%p418) target = $region44
        $region43: #{tpu_custom_call.1} parent=11 // pred_region
          %s422 = ssub.s32 8192, 8192
          %423 = vsyncadd [#allocation15], %s422
          %s424 = sshll.u32 [#allocation16], 4
          %s425 = int_to_ptr.vmem [resolvable:$true] %s424
          %430 = dma.hbm_to_vmem [thread:$0]  %s8, 8192, %s425, [#allocation15], 256, 256, 16
        $region44: #{tpu_custom_call.1} parent=11 // pred_fallthru
          _
        // Predicated region
        $region45: #{tpu_custom_call.1} parent=11 // pred_check
          %p431 = pneg %p244
        $region46: #{tpu_custom_call.1} parent=11 // pred_check_branch
          %433 = sbr.rel (%p431) target = $region48
        $region47: #{tpu_custom_call.1} parent=11 // pred_region
          %s435 = ssub.s32 8192, 8192
          %436 = vsyncadd [#allocation18], %s435
          %s437 = sshll.u32 [#allocation17], 4
          %s438 = int_to_ptr.vmem [resolvable:$true] %s437
          %443 = dma.hbm_to_vmem [thread:$0]  %s9, 8192, %s438, [#allocation18], 128, 128, 8
        $region48: #{tpu_custom_call.1} parent=11 // pred_fallthru
          _
        // Predicated region
        $region49: #{tpu_custom_call.1} parent=11 // pred_check
          %p444 = pneg %p265
        $region50: #{tpu_custom_call.1} parent=11 // pred_check_branch
          %446 = sbr.rel (%p444) target = $region52
        $region51: #{tpu_custom_call.1} parent=11 // pred_region
          _
        $region52: #{tpu_custom_call.1} parent=11 // pred_fallthru
          _
        // Predicated region
        $region53: #{tpu_custom_call.1} parent=11 // pred_check
          %p447 = pneg %p286
        $region54: #{tpu_custom_call.1} parent=11 // pred_check_branch
          %449 = sbr.rel (%p447) target = $region56
        $region55: #{tpu_custom_call.1} parent=11 // pred_region
          _
        $region56: #{tpu_custom_call.1} parent=11 // pred_fallthru
          _
      $region12: #{tpu_custom_call.1} parent=5 // pred_fallthru
        _
      %p450 = scmp.lt.s32.totalorder %s29, 4
      // Predicated region
      $region57: #{tpu_custom_call.1} parent=5 // pred_check
        %p451 = pneg %p450
      $region58: #{tpu_custom_call.1} parent=5 // pred_check_branch
        %453 = sbr.rel (%p451) target = $region60
      $region59: #{tpu_custom_call.1} parent=5 // pred_region
        // Predicated region
        $region61: #{tpu_custom_call.1} parent=59 // pred_check
          %p454 = pneg %p49
        $region62: #{tpu_custom_call.1} parent=59 // pred_check_branch
          %456 = sbr.rel (%p454) target = $region64
        $region63: #{tpu_custom_call.1} parent=59 // pred_region
          %s457 = sand.u32 %s39, 1
          %s458 = scalar_lea.sflag [#allocation3], %s457
          %s459 = sand.u32 %s39, 1
          %s460 = smul.addr %s459, 256
          %s461 = scalar_lea.vmem [#allocation2], %s460
          %s463 = ssub.s32 4096, 4096
          %464 = vsyncadd %s458, %s463
          %s465 = smul.addr %s29, 32
          %s466 = smul.addr %s465, 128
          %s467 = scalar_lea.hbm %s0, %s466
          %s468 = sshll.u32 %s461, 4
          %s469 = int_to_ptr.vmem [resolvable:$true] %s468
          %474 = dma.hbm_to_vmem [thread:$0]  %s467, 4096, %s469, %s458, 256, 256, 16
        $region64: #{tpu_custom_call.1} parent=59 // pred_fallthru
          _
      $region60: #{tpu_custom_call.1} parent=5 // pred_fallthru
        _
      %p475 = scmp.le.s32.totalorder 1, %s29
      %p476 = scmp.lt.s32.totalorder %s29, 5
      %p477 = pnand %p475, %p476
      %p478 = pneg %p477
      // Predicated region
      $region65: #{tpu_custom_call.1} parent=5 // pred_check
        _
      $region66: #{tpu_custom_call.1} parent=5 // pred_check_branch
        %480 = sbr.rel (%p477) target = $region68
      $region67: #{tpu_custom_call.1} parent=5 // pred_region
        %s481 = ssub.s32 %s29, 1
        %s482 = sand.u32 %s42, 1
        %s483 = scalar_lea.sflag [#allocation3], %s482
        %s484 = sand.u32 %s42, 1
        %s485 = smul.addr %s484, 256
        %s486 = scalar_lea.vmem [#allocation2], %s485
        // Predicated region
        $region69: #{tpu_custom_call.1} parent=67 // pred_check
          %p487 = pneg %p55
        $region70: #{tpu_custom_call.1} parent=67 // pred_check_branch
          %489 = sbr.rel (%p487) target = $region72
        $region71: #{tpu_custom_call.1} parent=67 // pred_region
          %490 = dma.done %s483, 4096
        $region72: #{tpu_custom_call.1} parent=67 // pred_fallthru
          _
        // Predicated region
        $region73: #{tpu_custom_call.1} parent=67 // pred_check
          %p491 = pneg %p76
        $region74: #{tpu_custom_call.1} parent=67 // pred_check_branch
          %493 = sbr.rel (%p491) target = $region76
        $region75: #{tpu_custom_call.1} parent=67 // pred_region
          %494 = dma.done [#allocation6], 2048
        $region76: #{tpu_custom_call.1} parent=67 // pred_fallthru
          _
        // Predicated region
        $region77: #{tpu_custom_call.1} parent=67 // pred_check
          %p495 = pneg %p97
        $region78: #{tpu_custom_call.1} parent=67 // pred_check_branch
          %497 = sbr.rel (%p495) target = $region80
        $region79: #{tpu_custom_call.1} parent=67 // pred_region
          %498 = dma.done [#allocation6], 2048
        $region80: #{tpu_custom_call.1} parent=67 // pred_fallthru
          _
        // Predicated region
        $region81: #{tpu_custom_call.1} parent=67 // pred_check
          %p499 = pneg %p118
        $region82: #{tpu_custom_call.1} parent=67 // pred_check_branch
          %501 = sbr.rel (%p499) target = $region84
        $region83: #{tpu_custom_call.1} parent=67 // pred_region
          %502 = dma.done [#allocation9], 4096
        $region84: #{tpu_custom_call.1} parent=67 // pred_fallthru
          _
        // Predicated region
        $region85: #{tpu_custom_call.1} parent=67 // pred_check
          %p503 = pneg %p139
        $region86: #{tpu_custom_call.1} parent=67 // pred_check_branch
          %505 = sbr.rel (%p503) target = $region88
        $region87: #{tpu_custom_call.1} parent=67 // pred_region
          %506 = dma.done [#allocation9], 4096
        $region88: #{tpu_custom_call.1} parent=67 // pred_fallthru
          _
        // Predicated region
        $region89: #{tpu_custom_call.1} parent=67 // pred_check
          %p507 = pneg %p160
        $region90: #{tpu_custom_call.1} parent=67 // pred_check_branch
          %509 = sbr.rel (%p507) target = $region92
        $region91: #{tpu_custom_call.1} parent=67 // pred_region
          %510 = dma.done [#allocation12], 4096
        $region92: #{tpu_custom_call.1} parent=67 // pred_fallthru
          _
        // Predicated region
        $region93: #{tpu_custom_call.1} parent=67 // pred_check
          %p511 = pneg %p181
        $region94: #{tpu_custom_call.1} parent=67 // pred_check_branch
          %513 = sbr.rel (%p511) target = $region96
        $region95: #{tpu_custom_call.1} parent=67 // pred_region
          %514 = dma.done [#allocation12], 4096
        $region96: #{tpu_custom_call.1} parent=67 // pred_fallthru
          _
        // Predicated region
        $region97: #{tpu_custom_call.1} parent=67 // pred_check
          %p515 = pneg %p202
        $region98: #{tpu_custom_call.1} parent=67 // pred_check_branch
          %517 = sbr.rel (%p515) target = $region100
        $region99: #{tpu_custom_call.1} parent=67 // pred_region
          %518 = dma.done [#allocation15], 8192
        $region100: #{tpu_custom_call.1} parent=67 // pred_fallthru
          _
        // Predicated region
        $region101: #{tpu_custom_call.1} parent=67 // pred_check
          %p519 = pneg %p223
        $region102: #{tpu_custom_call.1} parent=67 // pred_check_branch
          %521 = sbr.rel (%p519) target = $region104
        $region103: #{tpu_custom_call.1} parent=67 // pred_region
          %522 = dma.done [#allocation15], 8192
        $region104: #{tpu_custom_call.1} parent=67 // pred_fallthru
          _
        // Predicated region
        $region105: #{tpu_custom_call.1} parent=67 // pred_check
          %p523 = pneg %p244
        $region106: #{tpu_custom_call.1} parent=67 // pred_check_branch
          %525 = sbr.rel (%p523) target = $region108
        $region107: #{tpu_custom_call.1} parent=67 // pred_region
          %526 = dma.done [#allocation18], 8192
        $region108: #{tpu_custom_call.1} parent=67 // pred_fallthru
          _
        %s527 = sand.u32 %s42, 1
        %s528 = scalar_lea.sflag [#allocation3], %s527
        %s529 = sand.u32 %s42, 1
        %s530 = smul.addr %s529, 256
        %s531 = scalar_lea.vmem [#allocation2], %s530
        %p532 = pneg %p55
        %p533 = pneg %p52
        %p534 = pneg %p76
        %p535 = pneg %p73
        %p536 = pneg %p97
        %p537 = pneg %p94
        %p538 = pneg %p118
        %p539 = pneg %p115
        %p540 = pneg %p139
        %p541 = pneg %p136
        %p542 = pneg %p160
        %p543 = pneg %p157
        %p544 = pneg %p181
        %p545 = pneg %p178
        %p546 = pneg %p202
        %p547 = pneg %p199
        %p548 = pneg %p223
        %p549 = pneg %p220
        %p550 = pneg %p244
        %p551 = pneg %p241
        %p552 = pneg %p265
        %p553 = pneg %p262
        %p554 = pneg %p286
        %p555 = pneg %p283
        %p556 = pneg %p312
        %p557 = pneg %p309
        %s558 = sand.u32 %s299, 1
        %s559 = scalar_lea.sflag [#allocation4], %s558
        %s560 = sand.u32 %s299, 1
        %s561 = smul.addr %s560, 256
        %s562 = scalar_lea.vmem [#allocation19], %s561
        %v564 = vld [vmem:[%s486] sm:$0xff]
        %v565 = vld [vmem:[%s486 + $0x8] sm:$0xff]
        %v566 = vld [vmem:[%s486 + $0x10] sm:$0xff]
        %v567 = vld [vmem:[%s486 + $0x18] sm:$0xff]
        %v568 = vld [vmem:[%s486 + $0x20] sm:$0xff]
        %v569 = vld [vmem:[%s486 + $0x28] sm:$0xff]
        %v570 = vld [vmem:[%s486 + $0x30] sm:$0xff]
        %v571 = vld [vmem:[%s486 + $0x38] sm:$0xff]
        %v572 = vld [vmem:[%s486 + $0x40] sm:$0xff]
        %v573 = vld [vmem:[%s486 + $0x48] sm:$0xff]
        %v574 = vld [vmem:[%s486 + $0x50] sm:$0xff]
        %v575 = vld [vmem:[%s486 + $0x58] sm:$0xff]
        %v576 = vld [vmem:[%s486 + $0x60] sm:$0xff]
        %v577 = vld [vmem:[%s486 + $0x68] sm:$0xff]
        %v578 = vld [vmem:[%s486 + $0x70] sm:$0xff]
        %v579 = vld [vmem:[%s486 + $0x78] sm:$0xff]
        %v580 = vld [vmem:[%s486 + $0x80] sm:$0xff]
        %v581 = vld [vmem:[%s486 + $0x88] sm:$0xff]
        %v582 = vld [vmem:[%s486 + $0x90] sm:$0xff]
        %v583 = vld [vmem:[%s486 + $0x98] sm:$0xff]
        %v584 = vld [vmem:[%s486 + $0xa0] sm:$0xff]
        %v585 = vld [vmem:[%s486 + $0xa8] sm:$0xff]
        %v586 = vld [vmem:[%s486 + $0xb0] sm:$0xff]
        %v587 = vld [vmem:[%s486 + $0xb8] sm:$0xff]
        %v588 = vld [vmem:[%s486 + $0xc0] sm:$0xff]
        %v589 = vld [vmem:[%s486 + $0xc8] sm:$0xff]
        %v590 = vld [vmem:[%s486 + $0xd0] sm:$0xff]
        %v591 = vld [vmem:[%s486 + $0xd8] sm:$0xff]
        %v592 = vld [vmem:[%s486 + $0xe0] sm:$0xff]
        %v593 = vld [vmem:[%s486 + $0xe8] sm:$0xff]
        %v594 = vld [vmem:[%s486 + $0xf0] sm:$0xff]
        %v595 = vld [vmem:[%s486 + $0xf8] sm:$0xff]
        %v596 = vld [vmem:[#allocation5] sm:$0xff]
        %v597 = vld [vmem:[#allocation5 + $0x8] sm:$0xff]
        %v598 = vld [vmem:[#allocation5 + $0x10] sm:$0xff]
        %v599 = vld [vmem:[#allocation5 + $0x18] sm:$0xff]
        %v600 = vld [vmem:[#allocation5 + $0x20] sm:$0xff]
        %v601 = vld [vmem:[#allocation5 + $0x28] sm:$0xff]
        %v602 = vld [vmem:[#allocation5 + $0x30] sm:$0xff]
        %v603 = vld [vmem:[#allocation5 + $0x38] sm:$0xff]
        %v604 = vld [vmem:[#allocation5 + $0x40] sm:$0xff]
        %v605 = vld [vmem:[#allocation5 + $0x48] sm:$0xff]
        %v606 = vld [vmem:[#allocation5 + $0x50] sm:$0xff]
        %v607 = vld [vmem:[#allocation5 + $0x58] sm:$0xff]
        %v608 = vld [vmem:[#allocation5 + $0x60] sm:$0xff]
        %v609 = vld [vmem:[#allocation5 + $0x68] sm:$0xff]
        %v610 = vld [vmem:[#allocation5 + $0x70] sm:$0xff]
        %v611 = vld [vmem:[#allocation5 + $0x78] sm:$0xff]
        %v612 = vld [vmem:[#allocation7] sm:$0xff]
        %v613 = vld [vmem:[#allocation7 + $0x8] sm:$0xff]
        %v614 = vld [vmem:[#allocation7 + $0x10] sm:$0xff]
        %v615 = vld [vmem:[#allocation7 + $0x18] sm:$0xff]
        %v616 = vld [vmem:[#allocation7 + $0x20] sm:$0xff]
        %v617 = vld [vmem:[#allocation7 + $0x28] sm:$0xff]
        %v618 = vld [vmem:[#allocation7 + $0x30] sm:$0xff]
        %v619 = vld [vmem:[#allocation7 + $0x38] sm:$0xff]
        %v620 = vld [vmem:[#allocation7 + $0x40] sm:$0xff]
        %v621 = vld [vmem:[#allocation7 + $0x48] sm:$0xff]
        %v622 = vld [vmem:[#allocation7 + $0x50] sm:$0xff]
        %v623 = vld [vmem:[#allocation7 + $0x58] sm:$0xff]
        %v624 = vld [vmem:[#allocation7 + $0x60] sm:$0xff]
        %v625 = vld [vmem:[#allocation7 + $0x68] sm:$0xff]
        %v626 = vld [vmem:[#allocation7 + $0x70] sm:$0xff]
        %v627 = vld [vmem:[#allocation7 + $0x78] sm:$0xff]
        %v628 = vld [vmem:[%s10] sm:$0x3]
        %v629 = vld [vmem:[%s11] sm:$0x3]
        %v630 = vmul.f32 %v564, %v564
        %v631 = vmul.f32 %v565, %v565
        %v632 = vmul.f32 %v566, %v566
        %v633 = vmul.f32 %v567, %v567
        %v634 = vmul.f32 %v568, %v568
        %v635 = vmul.f32 %v569, %v569
        %v636 = vmul.f32 %v570, %v570
        %v637 = vmul.f32 %v571, %v571
        %v638 = vmul.f32 %v572, %v572
        %v639 = vmul.f32 %v573, %v573
        %v640 = vmul.f32 %v574, %v574
        %v641 = vmul.f32 %v575, %v575
        %v642 = vmul.f32 %v576, %v576
        %v643 = vmul.f32 %v577, %v577
        %v644 = vmul.f32 %v578, %v578
        %v645 = vmul.f32 %v579, %v579
        %v646 = vmul.f32 %v580, %v580
        %v647 = vmul.f32 %v581, %v581
        %v648 = vmul.f32 %v582, %v582
        %v649 = vmul.f32 %v583, %v583
        %v650 = vmul.f32 %v584, %v584
        %v651 = vmul.f32 %v585, %v585
        %v652 = vmul.f32 %v586, %v586
        %v653 = vmul.f32 %v587, %v587
        %v654 = vmul.f32 %v588, %v588
        %v655 = vmul.f32 %v589, %v589
        %v656 = vmul.f32 %v590, %v590
        %v657 = vmul.f32 %v591, %v591
        %v658 = vmul.f32 %v592, %v592
        %v659 = vmul.f32 %v593, %v593
        %v660 = vmul.f32 %v594, %v594
        %v661 = vmul.f32 %v595, %v595
        %v662 = vadd.f32 %v630, %v631
        %663 = vadd.xlane.f32.xlu0 %v662
        %v664 = vpop.xlane.xlu0 %663
        %v665 = vadd.f32 %v632, %v633
        %666 = vadd.xlane.f32.xlu0 %v665
        %v667 = vpop.xlane.xlu0 %666
        %v668 = vadd.f32 %v634, %v635
        %669 = vadd.xlane.f32.xlu0 %v668
        %v670 = vpop.xlane.xlu0 %669
        %v671 = vadd.f32 %v636, %v637
        %672 = vadd.xlane.f32.xlu0 %v671
        %v673 = vpop.xlane.xlu0 %672
        %v674 = vadd.f32 %v638, %v639
        %675 = vadd.xlane.f32.xlu0 %v674
        %v676 = vpop.xlane.xlu0 %675
        %v677 = vadd.f32 %v640, %v641
        %678 = vadd.xlane.f32.xlu0 %v677
        %v679 = vpop.xlane.xlu0 %678
        %v680 = vadd.f32 %v642, %v643
        %681 = vadd.xlane.f32.xlu0 %v680
        %v682 = vpop.xlane.xlu0 %681
        %v683 = vadd.f32 %v644, %v645
        %684 = vadd.xlane.f32.xlu0 %v683
        %v685 = vpop.xlane.xlu0 %684
        %v686 = vadd.f32 %v646, %v647
        %687 = vadd.xlane.f32.xlu0 %v686
        %v688 = vpop.xlane.xlu0 %687
        %v689 = vadd.f32 %v648, %v649
        %690 = vadd.xlane.f32.xlu0 %v689
        %v691 = vpop.xlane.xlu0 %690
        %v692 = vadd.f32 %v650, %v651
        %693 = vadd.xlane.f32.xlu0 %v692
        %v694 = vpop.xlane.xlu0 %693
        %v695 = vadd.f32 %v652, %v653
        %696 = vadd.xlane.f32.xlu0 %v695
        %v697 = vpop.xlane.xlu0 %696
        %v698 = vadd.f32 %v654, %v655
        %699 = vadd.xlane.f32.xlu0 %v698
        %v700 = vpop.xlane.xlu0 %699
        %v701 = vadd.f32 %v656, %v657
        %702 = vadd.xlane.f32.xlu0 %v701
        %v703 = vpop.xlane.xlu0 %702
        %v704 = vadd.f32 %v658, %v659
        %705 = vadd.xlane.f32.xlu0 %v704
        %v706 = vpop.xlane.xlu0 %705
        %v707 = vadd.f32 %v660, %v661
        %708 = vadd.xlane.f32.xlu0 %v707
        %v709 = vpop.xlane.xlu0 %708
        %v710 = vrcp.pop 256.0
        %v711 = vmul.f32 %v664, %v710
        %v712 = vmul.f32 %v667, %v710
        %v713 = vmul.f32 %v670, %v710
        %v714 = vmul.f32 %v673, %v710
        %v715 = vmul.f32 %v676, %v710
        %v716 = vmul.f32 %v679, %v710
        %v717 = vmul.f32 %v682, %v710
        %v718 = vmul.f32 %v685, %v710
        %v719 = vmul.f32 %v688, %v710
        %v720 = vmul.f32 %v691, %v710
        %v721 = vmul.f32 %v694, %v710
        %v722 = vmul.f32 %v697, %v710
        %v723 = vmul.f32 %v700, %v710
        %v724 = vmul.f32 %v703, %v710
        %v725 = vmul.f32 %v706, %v710
        %v726 = vmul.f32 %v709, %v710
        %v727 = vadd.f32 %v711, 1e-06
        %v728 = vadd.f32 %v712, 1e-06
        %v729 = vadd.f32 %v713, 1e-06
        %v730 = vadd.f32 %v714, 1e-06
        %v731 = vadd.f32 %v715, 1e-06
        %v732 = vadd.f32 %v716, 1e-06
        %v733 = vadd.f32 %v717, 1e-06
        %v734 = vadd.f32 %v718, 1e-06
        %v735 = vadd.f32 %v719, 1e-06
        %v736 = vadd.f32 %v720, 1e-06
        %v737 = vadd.f32 %v721, 1e-06
        %v738 = vadd.f32 %v722, 1e-06
        %v739 = vadd.f32 %v723, 1e-06
        %v740 = vadd.f32 %v724, 1e-06
        %v741 = vadd.f32 %v725, 1e-06
        %v742 = vadd.f32 %v726, 1e-06
        %v743 = vrsqrt.pop %v727
        %v744 = vrsqrt.pop %v728
        %v745 = vrsqrt.pop %v729
        %v746 = vrsqrt.pop %v730
        %v747 = vrsqrt.pop %v731
        %v748 = vrsqrt.pop %v732
        %v749 = vrsqrt.pop %v733
        %v750 = vrsqrt.pop %v734
        %v751 = vrsqrt.pop %v735
        %v752 = vrsqrt.pop %v736
        %v753 = vrsqrt.pop %v737
        %v754 = vrsqrt.pop %v738
        %v755 = vrsqrt.pop %v739
        %v756 = vrsqrt.pop %v740
        %v757 = vrsqrt.pop %v741
        %v758 = vrsqrt.pop %v742
        %v759 = vmul.f32 %v564, %v743
        %v760 = vmul.f32 %v565, %v743
        %v761 = vmul.f32 %v566, %v744
        %v762 = vmul.f32 %v567, %v744
        %v763 = vmul.f32 %v568, %v745
        %v764 = vmul.f32 %v569, %v745
        %v765 = vmul.f32 %v570, %v746
        %v766 = vmul.f32 %v571, %v746
        %v767 = vmul.f32 %v572, %v747
        %v768 = vmul.f32 %v573, %v747
        %v769 = vmul.f32 %v574, %v748
        %v770 = vmul.f32 %v575, %v748
        %v771 = vmul.f32 %v576, %v749
        %v772 = vmul.f32 %v577, %v749
        %v773 = vmul.f32 %v578, %v750
        %v774 = vmul.f32 %v579, %v750
        %v775 = vmul.f32 %v580, %v751
        %v776 = vmul.f32 %v581, %v751
        %v777 = vmul.f32 %v582, %v752
        %v778 = vmul.f32 %v583, %v752
        %v779 = vmul.f32 %v584, %v753
        %v780 = vmul.f32 %v585, %v753
        %v781 = vmul.f32 %v586, %v754
        %v782 = vmul.f32 %v587, %v754
        %v783 = vmul.f32 %v588, %v755
        %v784 = vmul.f32 %v589, %v755
        %v785 = vmul.f32 %v590, %v756
        %v786 = vmul.f32 %v591, %v756
        %v787 = vmul.f32 %v592, %v757
        %v788 = vmul.f32 %v593, %v757
        %v789 = vmul.f32 %v594, %v758
        %v790 = vmul.f32 %v595, %v758
        %v792 = vlaneseq
        %v793 = vshrl.u32 %v792, 7
        %v794 = vsub.s32 0, %v793
        %v795 = vrot.slane %v628, %v794
        %v796 = vlaneseq
        %v797 = vshrl.u32 %v796, 7
        %v798 = vsub.s32 1, %v797
        %v799 = vrot.slane %v628, %v798
        %v802 = vmul.f32 %v759, %v795
        %v803 = vmul.f32 %v760, %v799
        %v804 = vmul.f32 %v761, %v795
        %v805 = vmul.f32 %v762, %v799
        %v806 = vmul.f32 %v763, %v795
        %v807 = vmul.f32 %v764, %v799
        %v808 = vmul.f32 %v765, %v795
        %v809 = vmul.f32 %v766, %v799
        %v810 = vmul.f32 %v767, %v795
        %v811 = vmul.f32 %v768, %v799
        %v812 = vmul.f32 %v769, %v795
        %v813 = vmul.f32 %v770, %v799
        %v814 = vmul.f32 %v771, %v795
        %v815 = vmul.f32 %v772, %v799
        %v816 = vmul.f32 %v773, %v795
        %v817 = vmul.f32 %v774, %v799
        %v818 = vmul.f32 %v775, %v795
        %v819 = vmul.f32 %v776, %v799
        %v820 = vmul.f32 %v777, %v795
        %v821 = vmul.f32 %v778, %v799
        %v822 = vmul.f32 %v779, %v795
        %v823 = vmul.f32 %v780, %v799
        %v824 = vmul.f32 %v781, %v795
        %v825 = vmul.f32 %v782, %v799
        %v826 = vmul.f32 %v783, %v795
        %v827 = vmul.f32 %v784, %v799
        %v828 = vmul.f32 %v785, %v795
        %v829 = vmul.f32 %v786, %v799
        %v830 = vmul.f32 %v787, %v795
        %v831 = vmul.f32 %v788, %v799
        %v832 = vmul.f32 %v789, %v795
        %v833 = vmul.f32 %v790, %v799
        %v834 = vpack.c.bf16 %v804, %v802
        %v835 = vpack.c.bf16 %v805, %v803
        %v836 = vpack.c.bf16 %v808, %v806
        %v837 = vpack.c.bf16 %v809, %v807
        %v838 = vpack.c.bf16 %v812, %v810
        %v839 = vpack.c.bf16 %v813, %v811
        %v840 = vpack.c.bf16 %v816, %v814
        %v841 = vpack.c.bf16 %v817, %v815
        %v842 = vpack.c.bf16 %v820, %v818
        %v843 = vpack.c.bf16 %v821, %v819
        %v844 = vpack.c.bf16 %v824, %v822
        %v845 = vpack.c.bf16 %v825, %v823
        %v846 = vpack.c.bf16 %v828, %v826
        %v847 = vpack.c.bf16 %v829, %v827
        %v848 = vpack.c.bf16 %v832, %v830
        %v849 = vpack.c.bf16 %v833, %v831
        %v850 = vld [vmem:[#allocation8] sm:$0xf]
        %v851 = vld [vmem:[#allocation8 + $0x4] sm:$0xf]
        %v852 = vld [vmem:[#allocation8 + $0x8] sm:$0xf]
        %v853 = vld [vmem:[#allocation8 + $0xc] sm:$0xf]
        %v854 = vld [vmem:[#allocation8 + $0x10] sm:$0xf]
        %v855 = vld [vmem:[#allocation8 + $0x14] sm:$0xf]
        %v856 = vld [vmem:[#allocation8 + $0x18] sm:$0xf]
        %v857 = vld [vmem:[#allocation8 + $0x1c] sm:$0xf]
        %v858 = vld [vmem:[#allocation8 + $0x20] sm:$0xf]
        %v859 = vld [vmem:[#allocation8 + $0x24] sm:$0xf]
        %v860 = vld [vmem:[#allocation8 + $0x28] sm:$0xf]
        %v861 = vld [vmem:[#allocation8 + $0x2c] sm:$0xf]
        %v862 = vld [vmem:[#allocation8 + $0x30] sm:$0xf]
        %v863 = vld [vmem:[#allocation8 + $0x34] sm:$0xf]
        %v864 = vld [vmem:[#allocation8 + $0x38] sm:$0xf]
        %v865 = vld [vmem:[#allocation8 + $0x3c] sm:$0xf]
        %v866 = vld [vmem:[#allocation8 + $0x40] sm:$0xf]
        %v867 = vld [vmem:[#allocation8 + $0x44] sm:$0xf]
        %v868 = vld [vmem:[#allocation8 + $0x48] sm:$0xf]
        %v869 = vld [vmem:[#allocation8 + $0x4c] sm:$0xf]
        %v870 = vld [vmem:[#allocation8 + $0x50] sm:$0xf]
        %v871 = vld [vmem:[#allocation8 + $0x54] sm:$0xf]
        %v872 = vld [vmem:[#allocation8 + $0x58] sm:$0xf]
        %v873 = vld [vmem:[#allocation8 + $0x5c] sm:$0xf]
        %v874 = vld [vmem:[#allocation8 + $0x60] sm:$0xf]
        %v875 = vld [vmem:[#allocation8 + $0x64] sm:$0xf]
        %v876 = vld [vmem:[#allocation8 + $0x68] sm:$0xf]
        %v877 = vld [vmem:[#allocation8 + $0x6c] sm:$0xf]
        %v878 = vld [vmem:[#allocation8 + $0x70] sm:$0xf]
        %v879 = vld [vmem:[#allocation8 + $0x74] sm:$0xf]
        %v880 = vld [vmem:[#allocation8 + $0x78] sm:$0xf]
        %v881 = vld [vmem:[#allocation8 + $0x7c] sm:$0xf]
        %v882 = vld [vmem:[#allocation8 + $0x80] sm:$0xf]
        %v883 = vld [vmem:[#allocation8 + $0x84] sm:$0xf]
        %v884 = vld [vmem:[#allocation8 + $0x88] sm:$0xf]
        %v885 = vld [vmem:[#allocation8 + $0x8c] sm:$0xf]
        %v886 = vld [vmem:[#allocation8 + $0x90] sm:$0xf]
        %v887 = vld [vmem:[#allocation8 + $0x94] sm:$0xf]
        %v888 = vld [vmem:[#allocation8 + $0x98] sm:$0xf]
        %v889 = vld [vmem:[#allocation8 + $0x9c] sm:$0xf]
        %v890 = vld [vmem:[#allocation8 + $0xa0] sm:$0xf]
        %v891 = vld [vmem:[#allocation8 + $0xa4] sm:$0xf]
        %v892 = vld [vmem:[#allocation8 + $0xa8] sm:$0xf]
        %v893 = vld [vmem:[#allocation8 + $0xac] sm:$0xf]
        %v894 = vld [vmem:[#allocation8 + $0xb0] sm:$0xf]
        %v895 = vld [vmem:[#allocation8 + $0xb4] sm:$0xf]
        %v896 = vld [vmem:[#allocation8 + $0xb8] sm:$0xf]
        %v897 = vld [vmem:[#allocation8 + $0xbc] sm:$0xf]
        %v898 = vld [vmem:[#allocation8 + $0xc0] sm:$0xf]
        %v899 = vld [vmem:[#allocation8 + $0xc4] sm:$0xf]
        %v900 = vld [vmem:[#allocation8 + $0xc8] sm:$0xf]
        %v901 = vld [vmem:[#allocation8 + $0xcc] sm:$0xf]
        %v902 = vld [vmem:[#allocation8 + $0xd0] sm:$0xf]
        %v903 = vld [vmem:[#allocation8 + $0xd4] sm:$0xf]
        %v904 = vld [vmem:[#allocation8 + $0xd8] sm:$0xf]
        %v905 = vld [vmem:[#allocation8 + $0xdc] sm:$0xf]
        %v906 = vld [vmem:[#allocation8 + $0xe0] sm:$0xf]
        %v907 = vld [vmem:[#allocation8 + $0xe4] sm:$0xf]
        %v908 = vld [vmem:[#allocation8 + $0xe8] sm:$0xf]
        %v909 = vld [vmem:[#allocation8 + $0xec] sm:$0xf]
        %v910 = vld [vmem:[#allocation8 + $0xf0] sm:$0xf]
        %v911 = vld [vmem:[#allocation8 + $0xf4] sm:$0xf]
        %v912 = vld [vmem:[#allocation8 + $0xf8] sm:$0xf]
        %v913 = vld [vmem:[#allocation8 + $0xfc] sm:$0xf]
        %v946 = vunpack.c.l.b16 %v850
        %v947 = vunpack.c.l.b16 %v851
        %v948 = vunpack.c.l.b16 %v852
        %v949 = vunpack.c.l.b16 %v853
        %v950 = vunpack.c.l.b16 %v854
        %v951 = vunpack.c.l.b16 %v855
        %v952 = vunpack.c.l.b16 %v856
        %v953 = vunpack.c.l.b16 %v857
        %v954 = vunpack.c.l.b16 %v858
        %v955 = vunpack.c.l.b16 %v859
        %v956 = vunpack.c.l.b16 %v860
        %v957 = vunpack.c.l.b16 %v861
        %v958 = vunpack.c.l.b16 %v862
        %v959 = vunpack.c.l.b16 %v863
        %v960 = vunpack.c.l.b16 %v864
        %v961 = vunpack.c.l.b16 %v865
        %v962 = vunpack.c.l.b16 %v866
        %v963 = vunpack.c.l.b16 %v867
        %v964 = vunpack.c.l.b16 %v868
        %v965 = vunpack.c.l.b16 %v869
        %v966 = vunpack.c.l.b16 %v870
        %v967 = vunpack.c.l.b16 %v871
        %v968 = vunpack.c.l.b16 %v872
        %v969 = vunpack.c.l.b16 %v873
        %v970 = vunpack.c.l.b16 %v874
        %v971 = vunpack.c.l.b16 %v875
        %v972 = vunpack.c.l.b16 %v876
        %v973 = vunpack.c.l.b16 %v877
        %v974 = vunpack.c.l.b16 %v878
        %v975 = vunpack.c.l.b16 %v879
        %v976 = vunpack.c.l.b16 %v880
        %v977 = vunpack.c.l.b16 %v881
        %v978 = vpack.c.b16 %v947, %v946
        %v979 = vpack.c.b16 %v949, %v948
        %v980 = vpack.c.b16 %v951, %v950
        %v981 = vpack.c.b16 %v953, %v952
        %v982 = vpack.c.b16 %v955, %v954
        %v983 = vpack.c.b16 %v957, %v956
        %v984 = vpack.c.b16 %v959, %v958
        %v985 = vpack.c.b16 %v961, %v960
        %v986 = vpack.c.b16 %v963, %v962
        %v987 = vpack.c.b16 %v965, %v964
        %v988 = vpack.c.b16 %v967, %v966
        %v989 = vpack.c.b16 %v969, %v968
        %v990 = vpack.c.b16 %v971, %v970
        %v991 = vpack.c.b16 %v973, %v972
        %v992 = vpack.c.b16 %v975, %v974
        %v993 = vpack.c.b16 %v977, %v976
        %1010 = vmatprep.subr.bf16.mxu0 0
        %1011 = vmatpush1.bf16.msra.mxu0 %v985
        %1012 = vmatprep.subr.bf16.mxu0 0
        %1013 = vmatpush1.bf16.msra.mxu0 %v984
        %1014 = vmatprep.subr.bf16.mxu0 0
        %1015 = vmatpush1.bf16.msra.mxu0 %v983
        %1016 = vmatprep.subr.bf16.mxu0 0
        %1017 = vmatpush1.bf16.msra.mxu0 %v982
        %1018 = vmatprep.subr.bf16.mxu0 0
        %1019 = vmatpush1.bf16.msra.mxu0 %v981
        %1020 = vmatprep.subr.bf16.mxu0 0
        %1021 = vmatpush1.bf16.msra.mxu0 %v980
        %1022 = vmatprep.subr.bf16.mxu0 0
        %1023 = vmatpush1.bf16.msra.mxu0 %v979
        %1024 = vmatprep.subr.bf16.mxu0 0
        %1025 = vmatpush1.bf16.msra.mxu0 %v978
        %1026 = vmatprep.subr.bf16.mxu0 0
        %1027 = vmatpush2.bf16.msra.mxu0 %v993
        %1028 = vmatprep.subr.bf16.mxu0 0
        %1029 = vmatpush2.bf16.msra.mxu0 %v992
        %1030 = vmatprep.subr.bf16.mxu0 0
        %1031 = vmatpush2.bf16.msra.mxu0 %v991
        %1032 = vmatprep.subr.bf16.mxu0 0
        %1033 = vmatpush2.bf16.msra.mxu0 %v990
        %1034 = vmatprep.subr.bf16.mxu0 0
        %1035 = vmatpush2.bf16.msra.mxu0 %v989
        %1036 = vmatprep.subr.bf16.mxu0 0
        %1037 = vmatpush2.bf16.msra.mxu0 %v988
        %1038 = vmatprep.subr.bf16.mxu0 0
        %1039 = vmatpush2.bf16.msra.mxu0 %v987
        %1040 = vmatprep.subr.bf16.mxu0 0
        %1041 = vmatpush2.bf16.msra.mxu0 %v986
        %1042 = vmatprep.mubr.bf16.mxu0 %v835
        %1043 = vmatmul.mubr.bf16.gmra.mxu0 %v834
        %v1044 = vpop.f32.mrf.mxu0
        %v1045 = vadd.f32 0.0, %v1044
        %v1046 = vpop.f32.mrf.mxu0
        %v1047 = vpop.f32.mrf.mxu0
        %v1048 = vadd.f32 0.0, %v1047
        %v1049 = vpop.f32.mrf.mxu0
        %1050 = vmatprep.mubr.bf16.mxu0 %v837
        %1051 = vmatmul.mubr.bf16.gmra.mxu0 %v836
        %v1052 = vpop.f32.mrf.mxu0
        %v1053 = vadd.f32 0.0, %v1052
        %v1054 = vpop.f32.mrf.mxu0
        %v1055 = vpop.f32.mrf.mxu0
        %v1056 = vadd.f32 0.0, %v1055
        %v1057 = vpop.f32.mrf.mxu0
        %1058 = vmatprep.mubr.bf16.mxu0 %v839
        %1059 = vmatmul.mubr.bf16.gmra.mxu0 %v838
        %v1060 = vpop.f32.mrf.mxu0
        %v1061 = vadd.f32 0.0, %v1060
        %v1062 = vpop.f32.mrf.mxu0
        %v1063 = vpop.f32.mrf.mxu0
        %v1064 = vadd.f32 0.0, %v1063
        %v1065 = vpop.f32.mrf.mxu0
        %1066 = vmatprep.mubr.bf16.mxu0 %v841
        %1067 = vmatmul.mubr.bf16.gmra.mxu0 %v840
        %v1068 = vpop.f32.mrf.mxu0
        %v1069 = vadd.f32 0.0, %v1068
        %v1070 = vpop.f32.mrf.mxu0
        %v1071 = vpop.f32.mrf.mxu0
        %v1072 = vadd.f32 0.0, %v1071
        %v1073 = vpop.f32.mrf.mxu0
        %1074 = vmatprep.mubr.bf16.mxu0 %v843
        %1075 = vmatmul.mubr.bf16.gmra.mxu0 %v842
        %v1076 = vpop.f32.mrf.mxu0
        %v1077 = vadd.f32 0.0, %v1076
        %v1078 = vpop.f32.mrf.mxu0
        %v1079 = vpop.f32.mrf.mxu0
        %v1080 = vadd.f32 0.0, %v1079
        %v1081 = vpop.f32.mrf.mxu0
        %1082 = vmatprep.mubr.bf16.mxu0 %v845
        %1083 = vmatmul.mubr.bf16.gmra.mxu0 %v844
        %v1084 = vpop.f32.mrf.mxu0
        %v1085 = vadd.f32 0.0, %v1084
        %v1086 = vpop.f32.mrf.mxu0
        %v1087 = vpop.f32.mrf.mxu0
        %v1088 = vadd.f32 0.0, %v1087
        %v1089 = vpop.f32.mrf.mxu0
        %1090 = vmatprep.mubr.bf16.mxu0 %v847
        %1091 = vmatmul.mubr.bf16.gmra.mxu0 %v846
        %v1092 = vpop.f32.mrf.mxu0
        %v1093 = vadd.f32 0.0, %v1092
        %v1094 = vpop.f32.mrf.mxu0
        %v1095 = vpop.f32.mrf.mxu0
        %v1096 = vadd.f32 0.0, %v1095
        %v1097 = vpop.f32.mrf.mxu0
        %1098 = vmatprep.mubr.bf16.mxu0 %v849
        %1099 = vmatmul.mubr.bf16.gmra.mxu0 %v848
        %v1100 = vpop.f32.mrf.mxu0
        %v1101 = vadd.f32 0.0, %v1100
        %v1102 = vpop.f32.mrf.mxu0
        %v1103 = vpop.f32.mrf.mxu0
        %v1104 = vadd.f32 0.0, %v1103
        %v1105 = vpop.f32.mrf.mxu0
        %1106 = vdwg.mxu0
        %v1139 = vunpack.c.l.b16 %v882
        %v1140 = vunpack.c.l.b16 %v883
        %v1141 = vunpack.c.l.b16 %v884
        %v1142 = vunpack.c.l.b16 %v885
        %v1143 = vunpack.c.l.b16 %v886
        %v1144 = vunpack.c.l.b16 %v887
        %v1145 = vunpack.c.l.b16 %v888
        %v1146 = vunpack.c.l.b16 %v889
        %v1147 = vunpack.c.l.b16 %v890
        %v1148 = vunpack.c.l.b16 %v891
        %v1149 = vunpack.c.l.b16 %v892
        %v1150 = vunpack.c.l.b16 %v893
        %v1151 = vunpack.c.l.b16 %v894
        %v1152 = vunpack.c.l.b16 %v895
        %v1153 = vunpack.c.l.b16 %v896
        %v1154 = vunpack.c.l.b16 %v897
        %v1155 = vunpack.c.l.b16 %v898
        %v1156 = vunpack.c.l.b16 %v899
        %v1157 = vunpack.c.l.b16 %v900
        %v1158 = vunpack.c.l.b16 %v901
        %v1159 = vunpack.c.l.b16 %v902
        %v1160 = vunpack.c.l.b16 %v903
        %v1161 = vunpack.c.l.b16 %v904
        %v1162 = vunpack.c.l.b16 %v905
        %v1163 = vunpack.c.l.b16 %v906
        %v1164 = vunpack.c.l.b16 %v907
        %v1165 = vunpack.c.l.b16 %v908
        %v1166 = vunpack.c.l.b16 %v909
        %v1167 = vunpack.c.l.b16 %v910
        %v1168 = vunpack.c.l.b16 %v911
        %v1169 = vunpack.c.l.b16 %v912
        %v1170 = vunpack.c.l.b16 %v913
        %v1171 = vpack.c.b16 %v1140, %v1139
        %v1172 = vpack.c.b16 %v1142, %v1141
        %v1173 = vpack.c.b16 %v1144, %v1143
        %v1174 = vpack.c.b16 %v1146, %v1145
        %v1175 = vpack.c.b16 %v1148, %v1147
        %v1176 = vpack.c.b16 %v1150, %v1149
        %v1177 = vpack.c.b16 %v1152, %v1151
        %v1178 = vpack.c.b16 %v1154, %v1153
        %v1179 = vpack.c.b16 %v1156, %v1155
        %v1180 = vpack.c.b16 %v1158, %v1157
        %v1181 = vpack.c.b16 %v1160, %v1159
        %v1182 = vpack.c.b16 %v1162, %v1161
        %v1183 = vpack.c.b16 %v1164, %v1163
        %v1184 = vpack.c.b16 %v1166, %v1165
        %v1185 = vpack.c.b16 %v1168, %v1167
        %v1186 = vpack.c.b16 %v1170, %v1169
        %1203 = vmatprep.subr.bf16.mxu0 0
        %1204 = vmatpush1.bf16.msra.mxu0 %v1178
        %1205 = vmatprep.subr.bf16.mxu0 0
        %1206 = vmatpush1.bf16.msra.mxu0 %v1177
        %1207 = vmatprep.subr.bf16.mxu0 0
        %1208 = vmatpush1.bf16.msra.mxu0 %v1176
        %1209 = vmatprep.subr.bf16.mxu0 0
        %1210 = vmatpush1.bf16.msra.mxu0 %v1175
        %1211 = vmatprep.subr.bf16.mxu0 0
        %1212 = vmatpush1.bf16.msra.mxu0 %v1174
        %1213 = vmatprep.subr.bf16.mxu0 0
        %1214 = vmatpush1.bf16.msra.mxu0 %v1173
        %1215 = vmatprep.subr.bf16.mxu0 0
        %1216 = vmatpush1.bf16.msra.mxu0 %v1172
        %1217 = vmatprep.subr.bf16.mxu0 0
        %1218 = vmatpush1.bf16.msra.mxu0 %v1171
        %1219 = vmatprep.subr.bf16.mxu0 0
        %1220 = vmatpush2.bf16.msra.mxu0 %v1186
        %1221 = vmatprep.subr.bf16.mxu0 0
        %1222 = vmatpush2.bf16.msra.mxu0 %v1185
        %1223 = vmatprep.subr.bf16.mxu0 0
        %1224 = vmatpush2.bf16.msra.mxu0 %v1184
        %1225 = vmatprep.subr.bf16.mxu0 0
        %1226 = vmatpush2.bf16.msra.mxu0 %v1183
        %1227 = vmatprep.subr.bf16.mxu0 0
        %1228 = vmatpush2.bf16.msra.mxu0 %v1182
        %1229 = vmatprep.subr.bf16.mxu0 0
        %1230 = vmatpush2.bf16.msra.mxu0 %v1181
        %1231 = vmatprep.subr.bf16.mxu0 0
        %1232 = vmatpush2.bf16.msra.mxu0 %v1180
        %1233 = vmatprep.subr.bf16.mxu0 0
        %1234 = vmatpush2.bf16.msra.mxu0 %v1179
        %1235 = vmatprep.mubr.bf16.mxu0 %v835
        %1236 = vmatmul.mubr.bf16.gmra.mxu0 %v834
        %v1237 = vpop.f32.mrf.mxu0
        %v1238 = vadd.f32 0.0, %v1237
        %v1239 = vpop.f32.mrf.mxu0
        %v1240 = vpop.f32.mrf.mxu0
        %v1241 = vadd.f32 0.0, %v1240
        %v1242 = vpop.f32.mrf.mxu0
        %1243 = vmatprep.mubr.bf16.mxu0 %v837
        %1244 = vmatmul.mubr.bf16.gmra.mxu0 %v836
        %v1245 = vpop.f32.mrf.mxu0
        %v1246 = vadd.f32 0.0, %v1245
        %v1247 = vpop.f32.mrf.mxu0
        %v1248 = vpop.f32.mrf.mxu0
        %v1249 = vadd.f32 0.0, %v1248
        %v1250 = vpop.f32.mrf.mxu0
        %1251 = vmatprep.mubr.bf16.mxu0 %v839
        %1252 = vmatmul.mubr.bf16.gmra.mxu0 %v838
        %v1253 = vpop.f32.mrf.mxu0
        %v1254 = vadd.f32 0.0, %v1253
        %v1255 = vpop.f32.mrf.mxu0
        %v1256 = vpop.f32.mrf.mxu0
        %v1257 = vadd.f32 0.0, %v1256
        %v1258 = vpop.f32.mrf.mxu0
        %1259 = vmatprep.mubr.bf16.mxu0 %v841
        %1260 = vmatmul.mubr.bf16.gmra.mxu0 %v840
        %v1261 = vpop.f32.mrf.mxu0
        %v1262 = vadd.f32 0.0, %v1261
        %v1263 = vpop.f32.mrf.mxu0
        %v1264 = vpop.f32.mrf.mxu0
        %v1265 = vadd.f32 0.0, %v1264
        %v1266 = vpop.f32.mrf.mxu0
        %1267 = vmatprep.mubr.bf16.mxu0 %v843
        %1268 = vmatmul.mubr.bf16.gmra.mxu0 %v842
        %v1269 = vpop.f32.mrf.mxu0
        %v1270 = vadd.f32 0.0, %v1269
        %v1271 = vpop.f32.mrf.mxu0
        %v1272 = vpop.f32.mrf.mxu0
        %v1273 = vadd.f32 0.0, %v1272
        %v1274 = vpop.f32.mrf.mxu0
        %1275 = vmatprep.mubr.bf16.mxu0 %v845
        %1276 = vmatmul.mubr.bf16.gmra.mxu0 %v844
        %v1277 = vpop.f32.mrf.mxu0
        %v1278 = vadd.f32 0.0, %v1277
        %v1279 = vpop.f32.mrf.mxu0
        %v1280 = vpop.f32.mrf.mxu0
        %v1281 = vadd.f32 0.0, %v1280
        %v1282 = vpop.f32.mrf.mxu0
        %1283 = vmatprep.mubr.bf16.mxu0 %v847
        %1284 = vmatmul.mubr.bf16.gmra.mxu0 %v846
        %v1285 = vpop.f32.mrf.mxu0
        %v1286 = vadd.f32 0.0, %v1285
        %v1287 = vpop.f32.mrf.mxu0
        %v1288 = vpop.f32.mrf.mxu0
        %v1289 = vadd.f32 0.0, %v1288
        %v1290 = vpop.f32.mrf.mxu0
        %1291 = vmatprep.mubr.bf16.mxu0 %v849
        %1292 = vmatmul.mubr.bf16.gmra.mxu0 %v848
        %v1293 = vpop.f32.mrf.mxu0
        %v1294 = vadd.f32 0.0, %v1293
        %v1295 = vpop.f32.mrf.mxu0
        %v1296 = vpop.f32.mrf.mxu0
        %v1297 = vadd.f32 0.0, %v1296
        %v1298 = vpop.f32.mrf.mxu0
        %1299 = vdwg.mxu0
        %v1300 = vld [vmem:[#allocation10] sm:$0xf]
        %v1301 = vld [vmem:[#allocation10 + $0x4] sm:$0xf]
        %v1302 = vld [vmem:[#allocation10 + $0x8] sm:$0xf]
        %v1303 = vld [vmem:[#allocation10 + $0xc] sm:$0xf]
        %v1304 = vld [vmem:[#allocation10 + $0x10] sm:$0xf]
        %v1305 = vld [vmem:[#allocation10 + $0x14] sm:$0xf]
        %v1306 = vld [vmem:[#allocation10 + $0x18] sm:$0xf]
        %v1307 = vld [vmem:[#allocation10 + $0x1c] sm:$0xf]
        %v1308 = vld [vmem:[#allocation10 + $0x20] sm:$0xf]
        %v1309 = vld [vmem:[#allocation10 + $0x24] sm:$0xf]
        %v1310 = vld [vmem:[#allocation10 + $0x28] sm:$0xf]
        %v1311 = vld [vmem:[#allocation10 + $0x2c] sm:$0xf]
        %v1312 = vld [vmem:[#allocation10 + $0x30] sm:$0xf]
        %v1313 = vld [vmem:[#allocation10 + $0x34] sm:$0xf]
        %v1314 = vld [vmem:[#allocation10 + $0x38] sm:$0xf]
        %v1315 = vld [vmem:[#allocation10 + $0x3c] sm:$0xf]
        %v1316 = vld [vmem:[#allocation10 + $0x40] sm:$0xf]
        %v1317 = vld [vmem:[#allocation10 + $0x44] sm:$0xf]
        %v1318 = vld [vmem:[#allocation10 + $0x48] sm:$0xf]
        %v1319 = vld [vmem:[#allocation10 + $0x4c] sm:$0xf]
        %v1320 = vld [vmem:[#allocation10 + $0x50] sm:$0xf]
        %v1321 = vld [vmem:[#allocation10 + $0x54] sm:$0xf]
        %v1322 = vld [vmem:[#allocation10 + $0x58] sm:$0xf]
        %v1323 = vld [vmem:[#allocation10 + $0x5c] sm:$0xf]
        %v1324 = vld [vmem:[#allocation10 + $0x60] sm:$0xf]
        %v1325 = vld [vmem:[#allocation10 + $0x64] sm:$0xf]
        %v1326 = vld [vmem:[#allocation10 + $0x68] sm:$0xf]
        %v1327 = vld [vmem:[#allocation10 + $0x6c] sm:$0xf]
        %v1328 = vld [vmem:[#allocation10 + $0x70] sm:$0xf]
        %v1329 = vld [vmem:[#allocation10 + $0x74] sm:$0xf]
        %v1330 = vld [vmem:[#allocation10 + $0x78] sm:$0xf]
        %v1331 = vld [vmem:[#allocation10 + $0x7c] sm:$0xf]
        %v1332 = vld [vmem:[#allocation10 + $0x80] sm:$0xf]
        %v1333 = vld [vmem:[#allocation10 + $0x84] sm:$0xf]
        %v1334 = vld [vmem:[#allocation10 + $0x88] sm:$0xf]
        %v1335 = vld [vmem:[#allocation10 + $0x8c] sm:$0xf]
        %v1336 = vld [vmem:[#allocation10 + $0x90] sm:$0xf]
        %v1337 = vld [vmem:[#allocation10 + $0x94] sm:$0xf]
        %v1338 = vld [vmem:[#allocation10 + $0x98] sm:$0xf]
        %v1339 = vld [vmem:[#allocation10 + $0x9c] sm:$0xf]
        %v1340 = vld [vmem:[#allocation10 + $0xa0] sm:$0xf]
        %v1341 = vld [vmem:[#allocation10 + $0xa4] sm:$0xf]
        %v1342 = vld [vmem:[#allocation10 + $0xa8] sm:$0xf]
        %v1343 = vld [vmem:[#allocation10 + $0xac] sm:$0xf]
        %v1344 = vld [vmem:[#allocation10 + $0xb0] sm:$0xf]
        %v1345 = vld [vmem:[#allocation10 + $0xb4] sm:$0xf]
        %v1346 = vld [vmem:[#allocation10 + $0xb8] sm:$0xf]
        %v1347 = vld [vmem:[#allocation10 + $0xbc] sm:$0xf]
        %v1348 = vld [vmem:[#allocation10 + $0xc0] sm:$0xf]
        %v1349 = vld [vmem:[#allocation10 + $0xc4] sm:$0xf]
        %v1350 = vld [vmem:[#allocation10 + $0xc8] sm:$0xf]
        %v1351 = vld [vmem:[#allocation10 + $0xcc] sm:$0xf]
        %v1352 = vld [vmem:[#allocation10 + $0xd0] sm:$0xf]
        %v1353 = vld [vmem:[#allocation10 + $0xd4] sm:$0xf]
        %v1354 = vld [vmem:[#allocation10 + $0xd8] sm:$0xf]
        %v1355 = vld [vmem:[#allocation10 + $0xdc] sm:$0xf]
        %v1356 = vld [vmem:[#allocation10 + $0xe0] sm:$0xf]
        %v1357 = vld [vmem:[#allocation10 + $0xe4] sm:$0xf]
        %v1358 = vld [vmem:[#allocation10 + $0xe8] sm:$0xf]
        %v1359 = vld [vmem:[#allocation10 + $0xec] sm:$0xf]
        %v1360 = vld [vmem:[#allocation10 + $0xf0] sm:$0xf]
        %v1361 = vld [vmem:[#allocation10 + $0xf4] sm:$0xf]
        %v1362 = vld [vmem:[#allocation10 + $0xf8] sm:$0xf]
        %v1363 = vld [vmem:[#allocation10 + $0xfc] sm:$0xf]
        %v1396 = vunpack.c.l.b16 %v1300
        %v1397 = vunpack.c.l.b16 %v1301
        %v1398 = vunpack.c.l.b16 %v1302
        %v1399 = vunpack.c.l.b16 %v1303
        %v1400 = vunpack.c.l.b16 %v1304
        %v1401 = vunpack.c.l.b16 %v1305
        %v1402 = vunpack.c.l.b16 %v1306
        %v1403 = vunpack.c.l.b16 %v1307
        %v1404 = vunpack.c.l.b16 %v1308
        %v1405 = vunpack.c.l.b16 %v1309
        %v1406 = vunpack.c.l.b16 %v1310
        %v1407 = vunpack.c.l.b16 %v1311
        %v1408 = vunpack.c.l.b16 %v1312
        %v1409 = vunpack.c.l.b16 %v1313
        %v1410 = vunpack.c.l.b16 %v1314
        %v1411 = vunpack.c.l.b16 %v1315
        %v1412 = vunpack.c.l.b16 %v1316
        %v1413 = vunpack.c.l.b16 %v1317
        %v1414 = vunpack.c.l.b16 %v1318
        %v1415 = vunpack.c.l.b16 %v1319
        %v1416 = vunpack.c.l.b16 %v1320
        %v1417 = vunpack.c.l.b16 %v1321
        %v1418 = vunpack.c.l.b16 %v1322
        %v1419 = vunpack.c.l.b16 %v1323
        %v1420 = vunpack.c.l.b16 %v1324
        %v1421 = vunpack.c.l.b16 %v1325
        %v1422 = vunpack.c.l.b16 %v1326
        %v1423 = vunpack.c.l.b16 %v1327
        %v1424 = vunpack.c.l.b16 %v1328
        %v1425 = vunpack.c.l.b16 %v1329
        %v1426 = vunpack.c.l.b16 %v1330
        %v1427 = vunpack.c.l.b16 %v1331
        %v1428 = vpack.c.b16 %v1397, %v1396
        %v1429 = vpack.c.b16 %v1399, %v1398
        %v1430 = vpack.c.b16 %v1401, %v1400
        %v1431 = vpack.c.b16 %v1403, %v1402
        %v1432 = vpack.c.b16 %v1405, %v1404
        %v1433 = vpack.c.b16 %v1407, %v1406
        %v1434 = vpack.c.b16 %v1409, %v1408
        %v1435 = vpack.c.b16 %v1411, %v1410
        %v1436 = vpack.c.b16 %v1413, %v1412
        %v1437 = vpack.c.b16 %v1415, %v1414
        %v1438 = vpack.c.b16 %v1417, %v1416
        %v1439 = vpack.c.b16 %v1419, %v1418
        %v1440 = vpack.c.b16 %v1421, %v1420
        %v1441 = vpack.c.b16 %v1423, %v1422
        %v1442 = vpack.c.b16 %v1425, %v1424
        %v1443 = vpack.c.b16 %v1427, %v1426
        %1460 = vmatprep.subr.bf16.mxu0 0
        %1461 = vmatpush1.bf16.msra.mxu0 %v1435
        %1462 = vmatprep.subr.bf16.mxu0 0
        %1463 = vmatpush1.bf16.msra.mxu0 %v1434
        %1464 = vmatprep.subr.bf16.mxu0 0
        %1465 = vmatpush1.bf16.msra.mxu0 %v1433
        %1466 = vmatprep.subr.bf16.mxu0 0
        %1467 = vmatpush1.bf16.msra.mxu0 %v1432
        %1468 = vmatprep.subr.bf16.mxu0 0
        %1469 = vmatpush1.bf16.msra.mxu0 %v1431
        %1470 = vmatprep.subr.bf16.mxu0 0
        %1471 = vmatpush1.bf16.msra.mxu0 %v1430
        %1472 = vmatprep.subr.bf16.mxu0 0
        %1473 = vmatpush1.bf16.msra.mxu0 %v1429
        %1474 = vmatprep.subr.bf16.mxu0 0
        %1475 = vmatpush1.bf16.msra.mxu0 %v1428
        %1476 = vmatprep.subr.bf16.mxu0 0
        %1477 = vmatpush2.bf16.msra.mxu0 %v1443
        %1478 = vmatprep.subr.bf16.mxu0 0
        %1479 = vmatpush2.bf16.msra.mxu0 %v1442
        %1480 = vmatprep.subr.bf16.mxu0 0
        %1481 = vmatpush2.bf16.msra.mxu0 %v1441
        %1482 = vmatprep.subr.bf16.mxu0 0
        %1483 = vmatpush2.bf16.msra.mxu0 %v1440
        %1484 = vmatprep.subr.bf16.mxu0 0
        %1485 = vmatpush2.bf16.msra.mxu0 %v1439
        %1486 = vmatprep.subr.bf16.mxu0 0
        %1487 = vmatpush2.bf16.msra.mxu0 %v1438
        %1488 = vmatprep.subr.bf16.mxu0 0
        %1489 = vmatpush2.bf16.msra.mxu0 %v1437
        %1490 = vmatprep.subr.bf16.mxu0 0
        %1491 = vmatpush2.bf16.msra.mxu0 %v1436
        %1492 = vmatprep.mubr.bf16.mxu0 %v835
        %1493 = vmatmul.mubr.bf16.gmra.mxu0 %v834
        %v1494 = vpop.f32.mrf.mxu0
        %v1495 = vadd.f32 0.0, %v1494
        %v1496 = vpop.f32.mrf.mxu0
        %v1497 = vpop.f32.mrf.mxu0
        %v1498 = vadd.f32 0.0, %v1497
        %v1499 = vpop.f32.mrf.mxu0
        %1500 = vmatprep.mubr.bf16.mxu0 %v837
        %1501 = vmatmul.mubr.bf16.gmra.mxu0 %v836
        %v1502 = vpop.f32.mrf.mxu0
        %v1503 = vadd.f32 0.0, %v1502
        %v1504 = vpop.f32.mrf.mxu0
        %v1505 = vpop.f32.mrf.mxu0
        %v1506 = vadd.f32 0.0, %v1505
        %v1507 = vpop.f32.mrf.mxu0
        %1508 = vmatprep.mubr.bf16.mxu0 %v839
        %1509 = vmatmul.mubr.bf16.gmra.mxu0 %v838
        %v1510 = vpop.f32.mrf.mxu0
        %v1511 = vadd.f32 0.0, %v1510
        %v1512 = vpop.f32.mrf.mxu0
        %v1513 = vpop.f32.mrf.mxu0
        %v1514 = vadd.f32 0.0, %v1513
        %v1515 = vpop.f32.mrf.mxu0
        %1516 = vmatprep.mubr.bf16.mxu0 %v841
        %1517 = vmatmul.mubr.bf16.gmra.mxu0 %v840
        %v1518 = vpop.f32.mrf.mxu0
        %v1519 = vadd.f32 0.0, %v1518
        %v1520 = vpop.f32.mrf.mxu0
        %v1521 = vpop.f32.mrf.mxu0
        %v1522 = vadd.f32 0.0, %v1521
        %v1523 = vpop.f32.mrf.mxu0
        %1524 = vmatprep.mubr.bf16.mxu0 %v843
        %1525 = vmatmul.mubr.bf16.gmra.mxu0 %v842
        %v1526 = vpop.f32.mrf.mxu0
        %v1527 = vadd.f32 0.0, %v1526
        %v1528 = vpop.f32.mrf.mxu0
        %v1529 = vpop.f32.mrf.mxu0
        %v1530 = vadd.f32 0.0, %v1529
        %v1531 = vpop.f32.mrf.mxu0
        %1532 = vmatprep.mubr.bf16.mxu0 %v845
        %1533 = vmatmul.mubr.bf16.gmra.mxu0 %v844
        %v1534 = vpop.f32.mrf.mxu0
        %v1535 = vadd.f32 0.0, %v1534
        %v1536 = vpop.f32.mrf.mxu0
        %v1537 = vpop.f32.mrf.mxu0
        %v1538 = vadd.f32 0.0, %v1537
        %v1539 = vpop.f32.mrf.mxu0
        %1540 = vmatprep.mubr.bf16.mxu0 %v847
        %1541 = vmatmul.mubr.bf16.gmra.mxu0 %v846
        %v1542 = vpop.f32.mrf.mxu0
        %v1543 = vadd.f32 0.0, %v1542
        %v1544 = vpop.f32.mrf.mxu0
        %v1545 = vpop.f32.mrf.mxu0
        %v1546 = vadd.f32 0.0, %v1545
        %v1547 = vpop.f32.mrf.mxu0
        %1548 = vmatprep.mubr.bf16.mxu0 %v849
        %1549 = vmatmul.mubr.bf16.gmra.mxu0 %v848
        %v1550 = vpop.f32.mrf.mxu0
        %v1551 = vadd.f32 0.0, %v1550
        %v1552 = vpop.f32.mrf.mxu0
        %v1553 = vpop.f32.mrf.mxu0
        %v1554 = vadd.f32 0.0, %v1553
        %v1555 = vpop.f32.mrf.mxu0
        %1556 = vdwg.mxu0
        %v1589 = vunpack.c.l.b16 %v1332
        %v1590 = vunpack.c.l.b16 %v1333
        %v1591 = vunpack.c.l.b16 %v1334
        %v1592 = vunpack.c.l.b16 %v1335
        %v1593 = vunpack.c.l.b16 %v1336
        %v1594 = vunpack.c.l.b16 %v1337
        %v1595 = vunpack.c.l.b16 %v1338
        %v1596 = vunpack.c.l.b16 %v1339
        %v1597 = vunpack.c.l.b16 %v1340
        %v1598 = vunpack.c.l.b16 %v1341
        %v1599 = vunpack.c.l.b16 %v1342
        %v1600 = vunpack.c.l.b16 %v1343
        %v1601 = vunpack.c.l.b16 %v1344
        %v1602 = vunpack.c.l.b16 %v1345
        %v1603 = vunpack.c.l.b16 %v1346
        %v1604 = vunpack.c.l.b16 %v1347
        %v1605 = vunpack.c.l.b16 %v1348
        %v1606 = vunpack.c.l.b16 %v1349
        %v1607 = vunpack.c.l.b16 %v1350
        %v1608 = vunpack.c.l.b16 %v1351
        %v1609 = vunpack.c.l.b16 %v1352
        %v1610 = vunpack.c.l.b16 %v1353
        %v1611 = vunpack.c.l.b16 %v1354
        %v1612 = vunpack.c.l.b16 %v1355
        %v1613 = vunpack.c.l.b16 %v1356
        %v1614 = vunpack.c.l.b16 %v1357
        %v1615 = vunpack.c.l.b16 %v1358
        %v1616 = vunpack.c.l.b16 %v1359
        %v1617 = vunpack.c.l.b16 %v1360
        %v1618 = vunpack.c.l.b16 %v1361
        %v1619 = vunpack.c.l.b16 %v1362
        %v1620 = vunpack.c.l.b16 %v1363
        %v1621 = vpack.c.b16 %v1590, %v1589
        %v1622 = vpack.c.b16 %v1592, %v1591
        %v1623 = vpack.c.b16 %v1594, %v1593
        %v1624 = vpack.c.b16 %v1596, %v1595
        %v1625 = vpack.c.b16 %v1598, %v1597
        %v1626 = vpack.c.b16 %v1600, %v1599
        %v1627 = vpack.c.b16 %v1602, %v1601
        %v1628 = vpack.c.b16 %v1604, %v1603
        %v1629 = vpack.c.b16 %v1606, %v1605
        %v1630 = vpack.c.b16 %v1608, %v1607
        %v1631 = vpack.c.b16 %v1610, %v1609
        %v1632 = vpack.c.b16 %v1612, %v1611
        %v1633 = vpack.c.b16 %v1614, %v1613
        %v1634 = vpack.c.b16 %v1616, %v1615
        %v1635 = vpack.c.b16 %v1618, %v1617
        %v1636 = vpack.c.b16 %v1620, %v1619
        %1653 = vmatprep.subr.bf16.mxu0 0
        %1654 = vmatpush1.bf16.msra.mxu0 %v1628
        %1655 = vmatprep.subr.bf16.mxu0 0
        %1656 = vmatpush1.bf16.msra.mxu0 %v1627
        %1657 = vmatprep.subr.bf16.mxu0 0
        %1658 = vmatpush1.bf16.msra.mxu0 %v1626
        %1659 = vmatprep.subr.bf16.mxu0 0
        %1660 = vmatpush1.bf16.msra.mxu0 %v1625
        %1661 = vmatprep.subr.bf16.mxu0 0
        %1662 = vmatpush1.bf16.msra.mxu0 %v1624
        %1663 = vmatprep.subr.bf16.mxu0 0
        %1664 = vmatpush1.bf16.msra.mxu0 %v1623
        %1665 = vmatprep.subr.bf16.mxu0 0
        %1666 = vmatpush1.bf16.msra.mxu0 %v1622
        %1667 = vmatprep.subr.bf16.mxu0 0
        %1668 = vmatpush1.bf16.msra.mxu0 %v1621
        %1669 = vmatprep.subr.bf16.mxu0 0
        %1670 = vmatpush2.bf16.msra.mxu0 %v1636
        %1671 = vmatprep.subr.bf16.mxu0 0
        %1672 = vmatpush2.bf16.msra.mxu0 %v1635
        %1673 = vmatprep.subr.bf16.mxu0 0
        %1674 = vmatpush2.bf16.msra.mxu0 %v1634
        %1675 = vmatprep.subr.bf16.mxu0 0
        %1676 = vmatpush2.bf16.msra.mxu0 %v1633
        %1677 = vmatprep.subr.bf16.mxu0 0
        %1678 = vmatpush2.bf16.msra.mxu0 %v1632
        %1679 = vmatprep.subr.bf16.mxu0 0
        %1680 = vmatpush2.bf16.msra.mxu0 %v1631
        %1681 = vmatprep.subr.bf16.mxu0 0
        %1682 = vmatpush2.bf16.msra.mxu0 %v1630
        %1683 = vmatprep.subr.bf16.mxu0 0
        %1684 = vmatpush2.bf16.msra.mxu0 %v1629
        %1685 = vmatprep.mubr.bf16.mxu0 %v835
        %1686 = vmatmul.mubr.bf16.gmra.mxu0 %v834
        %v1687 = vpop.f32.mrf.mxu0
        %v1688 = vadd.f32 0.0, %v1687
        %v1689 = vpop.f32.mrf.mxu0
        %v1690 = vpop.f32.mrf.mxu0
        %v1691 = vadd.f32 0.0, %v1690
        %v1692 = vpop.f32.mrf.mxu0
        %1693 = vmatprep.mubr.bf16.mxu0 %v837
        %1694 = vmatmul.mubr.bf16.gmra.mxu0 %v836
        %v1695 = vpop.f32.mrf.mxu0
        %v1696 = vadd.f32 0.0, %v1695
        %v1697 = vpop.f32.mrf.mxu0
        %v1698 = vpop.f32.mrf.mxu0
        %v1699 = vadd.f32 0.0, %v1698
        %v1700 = vpop.f32.mrf.mxu0
        %1701 = vmatprep.mubr.bf16.mxu0 %v839
        %1702 = vmatmul.mubr.bf16.gmra.mxu0 %v838
        %v1703 = vpop.f32.mrf.mxu0
        %v1704 = vadd.f32 0.0, %v1703
        %v1705 = vpop.f32.mrf.mxu0
        %v1706 = vpop.f32.mrf.mxu0
        %v1707 = vadd.f32 0.0, %v1706
        %v1708 = vpop.f32.mrf.mxu0
        %1709 = vmatprep.mubr.bf16.mxu0 %v841
        %1710 = vmatmul.mubr.bf16.gmra.mxu0 %v840
        %v1711 = vpop.f32.mrf.mxu0
        %v1712 = vadd.f32 0.0, %v1711
        %v1713 = vpop.f32.mrf.mxu0
        %v1714 = vpop.f32.mrf.mxu0
        %v1715 = vadd.f32 0.0, %v1714
        %v1716 = vpop.f32.mrf.mxu0
        %1717 = vmatprep.mubr.bf16.mxu0 %v843
        %1718 = vmatmul.mubr.bf16.gmra.mxu0 %v842
        %v1719 = vpop.f32.mrf.mxu0
        %v1720 = vadd.f32 0.0, %v1719
        %v1721 = vpop.f32.mrf.mxu0
        %v1722 = vpop.f32.mrf.mxu0
        %v1723 = vadd.f32 0.0, %v1722
        %v1724 = vpop.f32.mrf.mxu0
        %1725 = vmatprep.mubr.bf16.mxu0 %v845
        %1726 = vmatmul.mubr.bf16.gmra.mxu0 %v844
        %v1727 = vpop.f32.mrf.mxu0
        %v1728 = vadd.f32 0.0, %v1727
        %v1729 = vpop.f32.mrf.mxu0
        %v1730 = vpop.f32.mrf.mxu0
        %v1731 = vadd.f32 0.0, %v1730
        %v1732 = vpop.f32.mrf.mxu0
        %1733 = vmatprep.mubr.bf16.mxu0 %v847
        %1734 = vmatmul.mubr.bf16.gmra.mxu0 %v846
        %v1735 = vpop.f32.mrf.mxu0
        %v1736 = vadd.f32 0.0, %v1735
        %v1737 = vpop.f32.mrf.mxu0
        %v1738 = vpop.f32.mrf.mxu0
        %v1739 = vadd.f32 0.0, %v1738
        %v1740 = vpop.f32.mrf.mxu0
        %1741 = vmatprep.mubr.bf16.mxu0 %v849
        %1742 = vmatmul.mubr.bf16.gmra.mxu0 %v848
        %v1743 = vpop.f32.mrf.mxu0
        %v1744 = vadd.f32 0.0, %v1743
        %v1745 = vpop.f32.mrf.mxu0
        %v1746 = vpop.f32.mrf.mxu0
        %v1747 = vadd.f32 0.0, %v1746
        %v1748 = vpop.f32.mrf.mxu0
        %1749 = vdwg.mxu0
        %v1750 = vld [vmem:[#allocation11] sm:$0xf]
        %v1751 = vld [vmem:[#allocation11 + $0x4] sm:$0xf]
        %v1752 = vld [vmem:[#allocation11 + $0x8] sm:$0xf]
        %v1753 = vld [vmem:[#allocation11 + $0xc] sm:$0xf]
        %v1754 = vld [vmem:[#allocation11 + $0x10] sm:$0xf]
        %v1755 = vld [vmem:[#allocation11 + $0x14] sm:$0xf]
        %v1756 = vld [vmem:[#allocation11 + $0x18] sm:$0xf]
        %v1757 = vld [vmem:[#allocation11 + $0x1c] sm:$0xf]
        %v1758 = vld [vmem:[#allocation11 + $0x20] sm:$0xf]
        %v1759 = vld [vmem:[#allocation11 + $0x24] sm:$0xf]
        %v1760 = vld [vmem:[#allocation11 + $0x28] sm:$0xf]
        %v1761 = vld [vmem:[#allocation11 + $0x2c] sm:$0xf]
        %v1762 = vld [vmem:[#allocation11 + $0x30] sm:$0xf]
        %v1763 = vld [vmem:[#allocation11 + $0x34] sm:$0xf]
        %v1764 = vld [vmem:[#allocation11 + $0x38] sm:$0xf]
        %v1765 = vld [vmem:[#allocation11 + $0x3c] sm:$0xf]
        %v1766 = vld [vmem:[#allocation11 + $0x40] sm:$0xf]
        %v1767 = vld [vmem:[#allocation11 + $0x44] sm:$0xf]
        %v1768 = vld [vmem:[#allocation11 + $0x48] sm:$0xf]
        %v1769 = vld [vmem:[#allocation11 + $0x4c] sm:$0xf]
        %v1770 = vld [vmem:[#allocation11 + $0x50] sm:$0xf]
        %v1771 = vld [vmem:[#allocation11 + $0x54] sm:$0xf]
        %v1772 = vld [vmem:[#allocation11 + $0x58] sm:$0xf]
        %v1773 = vld [vmem:[#allocation11 + $0x5c] sm:$0xf]
        %v1774 = vld [vmem:[#allocation11 + $0x60] sm:$0xf]
        %v1775 = vld [vmem:[#allocation11 + $0x64] sm:$0xf]
        %v1776 = vld [vmem:[#allocation11 + $0x68] sm:$0xf]
        %v1777 = vld [vmem:[#allocation11 + $0x6c] sm:$0xf]
        %v1778 = vld [vmem:[#allocation11 + $0x70] sm:$0xf]
        %v1779 = vld [vmem:[#allocation11 + $0x74] sm:$0xf]
        %v1780 = vld [vmem:[#allocation11 + $0x78] sm:$0xf]
        %v1781 = vld [vmem:[#allocation11 + $0x7c] sm:$0xf]
        %v1782 = vld [vmem:[#allocation11 + $0x80] sm:$0xf]
        %v1783 = vld [vmem:[#allocation11 + $0x84] sm:$0xf]
        %v1784 = vld [vmem:[#allocation11 + $0x88] sm:$0xf]
        %v1785 = vld [vmem:[#allocation11 + $0x8c] sm:$0xf]
        %v1786 = vld [vmem:[#allocation11 + $0x90] sm:$0xf]
        %v1787 = vld [vmem:[#allocation11 + $0x94] sm:$0xf]
        %v1788 = vld [vmem:[#allocation11 + $0x98] sm:$0xf]
        %v1789 = vld [vmem:[#allocation11 + $0x9c] sm:$0xf]
        %v1790 = vld [vmem:[#allocation11 + $0xa0] sm:$0xf]
        %v1791 = vld [vmem:[#allocation11 + $0xa4] sm:$0xf]
        %v1792 = vld [vmem:[#allocation11 + $0xa8] sm:$0xf]
        %v1793 = vld [vmem:[#allocation11 + $0xac] sm:$0xf]
        %v1794 = vld [vmem:[#allocation11 + $0xb0] sm:$0xf]
        %v1795 = vld [vmem:[#allocation11 + $0xb4] sm:$0xf]
        %v1796 = vld [vmem:[#allocation11 + $0xb8] sm:$0xf]
        %v1797 = vld [vmem:[#allocation11 + $0xbc] sm:$0xf]
        %v1798 = vld [vmem:[#allocation11 + $0xc0] sm:$0xf]
        %v1799 = vld [vmem:[#allocation11 + $0xc4] sm:$0xf]
        %v1800 = vld [vmem:[#allocation11 + $0xc8] sm:$0xf]
        %v1801 = vld [vmem:[#allocation11 + $0xcc] sm:$0xf]
        %v1802 = vld [vmem:[#allocation11 + $0xd0] sm:$0xf]
        %v1803 = vld [vmem:[#allocation11 + $0xd4] sm:$0xf]
        %v1804 = vld [vmem:[#allocation11 + $0xd8] sm:$0xf]
        %v1805 = vld [vmem:[#allocation11 + $0xdc] sm:$0xf]
        %v1806 = vld [vmem:[#allocation11 + $0xe0] sm:$0xf]
        %v1807 = vld [vmem:[#allocation11 + $0xe4] sm:$0xf]
        %v1808 = vld [vmem:[#allocation11 + $0xe8] sm:$0xf]
        %v1809 = vld [vmem:[#allocation11 + $0xec] sm:$0xf]
        %v1810 = vld [vmem:[#allocation11 + $0xf0] sm:$0xf]
        %v1811 = vld [vmem:[#allocation11 + $0xf4] sm:$0xf]
        %v1812 = vld [vmem:[#allocation11 + $0xf8] sm:$0xf]
        %v1813 = vld [vmem:[#allocation11 + $0xfc] sm:$0xf]
        %v1846 = vunpack.c.l.b16 %v1750
        %v1847 = vunpack.c.l.b16 %v1751
        %v1848 = vunpack.c.l.b16 %v1752
        %v1849 = vunpack.c.l.b16 %v1753
        %v1850 = vunpack.c.l.b16 %v1754
        %v1851 = vunpack.c.l.b16 %v1755
        %v1852 = vunpack.c.l.b16 %v1756
        %v1853 = vunpack.c.l.b16 %v1757
        %v1854 = vunpack.c.l.b16 %v1758
        %v1855 = vunpack.c.l.b16 %v1759
        %v1856 = vunpack.c.l.b16 %v1760
        %v1857 = vunpack.c.l.b16 %v1761
        %v1858 = vunpack.c.l.b16 %v1762
        %v1859 = vunpack.c.l.b16 %v1763
        %v1860 = vunpack.c.l.b16 %v1764
        %v1861 = vunpack.c.l.b16 %v1765
        %v1862 = vunpack.c.l.b16 %v1766
        %v1863 = vunpack.c.l.b16 %v1767
        %v1864 = vunpack.c.l.b16 %v1768
        %v1865 = vunpack.c.l.b16 %v1769
        %v1866 = vunpack.c.l.b16 %v1770
        %v1867 = vunpack.c.l.b16 %v1771
        %v1868 = vunpack.c.l.b16 %v1772
        %v1869 = vunpack.c.l.b16 %v1773
        %v1870 = vunpack.c.l.b16 %v1774
        %v1871 = vunpack.c.l.b16 %v1775
        %v1872 = vunpack.c.l.b16 %v1776
        %v1873 = vunpack.c.l.b16 %v1777
        %v1874 = vunpack.c.l.b16 %v1778
        %v1875 = vunpack.c.l.b16 %v1779
        %v1876 = vunpack.c.l.b16 %v1780
        %v1877 = vunpack.c.l.b16 %v1781
        %v1878 = vpack.c.b16 %v1847, %v1846
        %v1879 = vpack.c.b16 %v1849, %v1848
        %v1880 = vpack.c.b16 %v1851, %v1850
        %v1881 = vpack.c.b16 %v1853, %v1852
        %v1882 = vpack.c.b16 %v1855, %v1854
        %v1883 = vpack.c.b16 %v1857, %v1856
        %v1884 = vpack.c.b16 %v1859, %v1858
        %v1885 = vpack.c.b16 %v1861, %v1860
        %v1886 = vpack.c.b16 %v1863, %v1862
        %v1887 = vpack.c.b16 %v1865, %v1864
        %v1888 = vpack.c.b16 %v1867, %v1866
        %v1889 = vpack.c.b16 %v1869, %v1868
        %v1890 = vpack.c.b16 %v1871, %v1870
        %v1891 = vpack.c.b16 %v1873, %v1872
        %v1892 = vpack.c.b16 %v1875, %v1874
        %v1893 = vpack.c.b16 %v1877, %v1876
        %1910 = vmatprep.subr.bf16.mxu0 0
        %1911 = vmatpush1.bf16.msra.mxu0 %v1885
        %1912 = vmatprep.subr.bf16.mxu0 0
        %1913 = vmatpush1.bf16.msra.mxu0 %v1884
        %1914 = vmatprep.subr.bf16.mxu0 0
        %1915 = vmatpush1.bf16.msra.mxu0 %v1883
        %1916 = vmatprep.subr.bf16.mxu0 0
        %1917 = vmatpush1.bf16.msra.mxu0 %v1882
        %1918 = vmatprep.subr.bf16.mxu0 0
        %1919 = vmatpush1.bf16.msra.mxu0 %v1881
        %1920 = vmatprep.subr.bf16.mxu0 0
        %1921 = vmatpush1.bf16.msra.mxu0 %v1880
        %1922 = vmatprep.subr.bf16.mxu0 0
        %1923 = vmatpush1.bf16.msra.mxu0 %v1879
        %1924 = vmatprep.subr.bf16.mxu0 0
        %1925 = vmatpush1.bf16.msra.mxu0 %v1878
        %1926 = vmatprep.subr.bf16.mxu0 0
        %1927 = vmatpush2.bf16.msra.mxu0 %v1893
        %1928 = vmatprep.subr.bf16.mxu0 0
        %1929 = vmatpush2.bf16.msra.mxu0 %v1892
        %1930 = vmatprep.subr.bf16.mxu0 0
        %1931 = vmatpush2.bf16.msra.mxu0 %v1891
        %1932 = vmatprep.subr.bf16.mxu0 0
        %1933 = vmatpush2.bf16.msra.mxu0 %v1890
        %1934 = vmatprep.subr.bf16.mxu0 0
        %1935 = vmatpush2.bf16.msra.mxu0 %v1889
        %1936 = vmatprep.subr.bf16.mxu0 0
        %1937 = vmatpush2.bf16.msra.mxu0 %v1888
        %1938 = vmatprep.subr.bf16.mxu0 0
        %1939 = vmatpush2.bf16.msra.mxu0 %v1887
        %1940 = vmatprep.subr.bf16.mxu0 0
        %1941 = vmatpush2.bf16.msra.mxu0 %v1886
        %1942 = vmatprep.mubr.bf16.mxu0 %v835
        %1943 = vmatmul.mubr.bf16.gmra.mxu0 %v834
        %v1944 = vpop.f32.mrf.mxu0
        %v1945 = vadd.f32 0.0, %v1944
        %v1946 = vpop.f32.mrf.mxu0
        %v1947 = vpop.f32.mrf.mxu0
        %v1948 = vadd.f32 0.0, %v1947
        %v1949 = vpop.f32.mrf.mxu0
        %1950 = vmatprep.mubr.bf16.mxu0 %v837
        %1951 = vmatmul.mubr.bf16.gmra.mxu0 %v836
        %v1952 = vpop.f32.mrf.mxu0
        %v1953 = vadd.f32 0.0, %v1952
        %v1954 = vpop.f32.mrf.mxu0
        %v1955 = vpop.f32.mrf.mxu0
        %v1956 = vadd.f32 0.0, %v1955
        %v1957 = vpop.f32.mrf.mxu0
        %1958 = vmatprep.mubr.bf16.mxu0 %v839
        %1959 = vmatmul.mubr.bf16.gmra.mxu0 %v838
        %v1960 = vpop.f32.mrf.mxu0
        %v1961 = vadd.f32 0.0, %v1960
        %v1962 = vpop.f32.mrf.mxu0
        %v1963 = vpop.f32.mrf.mxu0
        %v1964 = vadd.f32 0.0, %v1963
        %v1965 = vpop.f32.mrf.mxu0
        %1966 = vmatprep.mubr.bf16.mxu0 %v841
        %1967 = vmatmul.mubr.bf16.gmra.mxu0 %v840
        %v1968 = vpop.f32.mrf.mxu0
        %v1969 = vadd.f32 0.0, %v1968
        %v1970 = vpop.f32.mrf.mxu0
        %v1971 = vpop.f32.mrf.mxu0
        %v1972 = vadd.f32 0.0, %v1971
        %v1973 = vpop.f32.mrf.mxu0
        %1974 = vmatprep.mubr.bf16.mxu0 %v843
        %1975 = vmatmul.mubr.bf16.gmra.mxu0 %v842
        %v1976 = vpop.f32.mrf.mxu0
        %v1977 = vadd.f32 0.0, %v1976
        %v1978 = vpop.f32.mrf.mxu0
        %v1979 = vpop.f32.mrf.mxu0
        %v1980 = vadd.f32 0.0, %v1979
        %v1981 = vpop.f32.mrf.mxu0
        %1982 = vmatprep.mubr.bf16.mxu0 %v845
        %1983 = vmatmul.mubr.bf16.gmra.mxu0 %v844
        %v1984 = vpop.f32.mrf.mxu0
        %v1985 = vadd.f32 0.0, %v1984
        %v1986 = vpop.f32.mrf.mxu0
        %v1987 = vpop.f32.mrf.mxu0
        %v1988 = vadd.f32 0.0, %v1987
        %v1989 = vpop.f32.mrf.mxu0
        %1990 = vmatprep.mubr.bf16.mxu0 %v847
        %1991 = vmatmul.mubr.bf16.gmra.mxu0 %v846
        %v1992 = vpop.f32.mrf.mxu0
        %v1993 = vadd.f32 0.0, %v1992
        %v1994 = vpop.f32.mrf.mxu0
        %v1995 = vpop.f32.mrf.mxu0
        %v1996 = vadd.f32 0.0, %v1995
        %v1997 = vpop.f32.mrf.mxu0
        %1998 = vmatprep.mubr.bf16.mxu0 %v849
        %1999 = vmatmul.mubr.bf16.gmra.mxu0 %v848
        %v2000 = vpop.f32.mrf.mxu0
        %v2001 = vadd.f32 0.0, %v2000
        %v2002 = vpop.f32.mrf.mxu0
        %v2003 = vpop.f32.mrf.mxu0
        %v2004 = vadd.f32 0.0, %v2003
        %v2005 = vpop.f32.mrf.mxu0
        %2006 = vdwg.mxu0
        %v2039 = vunpack.c.l.b16 %v1782
        %v2040 = vunpack.c.l.b16 %v1783
        %v2041 = vunpack.c.l.b16 %v1784
        %v2042 = vunpack.c.l.b16 %v1785
        %v2043 = vunpack.c.l.b16 %v1786
        %v2044 = vunpack.c.l.b16 %v1787
        %v2045 = vunpack.c.l.b16 %v1788
        %v2046 = vunpack.c.l.b16 %v1789
        %v2047 = vunpack.c.l.b16 %v1790
        %v2048 = vunpack.c.l.b16 %v1791
        %v2049 = vunpack.c.l.b16 %v1792
        %v2050 = vunpack.c.l.b16 %v1793
        %v2051 = vunpack.c.l.b16 %v1794
        %v2052 = vunpack.c.l.b16 %v1795
        %v2053 = vunpack.c.l.b16 %v1796
        %v2054 = vunpack.c.l.b16 %v1797
        %v2055 = vunpack.c.l.b16 %v1798
        %v2056 = vunpack.c.l.b16 %v1799
        %v2057 = vunpack.c.l.b16 %v1800
        %v2058 = vunpack.c.l.b16 %v1801
        %v2059 = vunpack.c.l.b16 %v1802
        %v2060 = vunpack.c.l.b16 %v1803
        %v2061 = vunpack.c.l.b16 %v1804
        %v2062 = vunpack.c.l.b16 %v1805
        %v2063 = vunpack.c.l.b16 %v1806
        %v2064 = vunpack.c.l.b16 %v1807
        %v2065 = vunpack.c.l.b16 %v1808
        %v2066 = vunpack.c.l.b16 %v1809
        %v2067 = vunpack.c.l.b16 %v1810
        %v2068 = vunpack.c.l.b16 %v1811
        %v2069 = vunpack.c.l.b16 %v1812
        %v2070 = vunpack.c.l.b16 %v1813
        %v2071 = vpack.c.b16 %v2040, %v2039
        %v2072 = vpack.c.b16 %v2042, %v2041
        %v2073 = vpack.c.b16 %v2044, %v2043
        %v2074 = vpack.c.b16 %v2046, %v2045
        %v2075 = vpack.c.b16 %v2048, %v2047
        %v2076 = vpack.c.b16 %v2050, %v2049
        %v2077 = vpack.c.b16 %v2052, %v2051
        %v2078 = vpack.c.b16 %v2054, %v2053
        %v2079 = vpack.c.b16 %v2056, %v2055
        %v2080 = vpack.c.b16 %v2058, %v2057
        %v2081 = vpack.c.b16 %v2060, %v2059
        %v2082 = vpack.c.b16 %v2062, %v2061
        %v2083 = vpack.c.b16 %v2064, %v2063
        %v2084 = vpack.c.b16 %v2066, %v2065
        %v2085 = vpack.c.b16 %v2068, %v2067
        %v2086 = vpack.c.b16 %v2070, %v2069
        %2103 = vmatprep.subr.bf16.mxu0 0
        %2104 = vmatpush1.bf16.msra.mxu0 %v2078
        %2105 = vmatprep.subr.bf16.mxu0 0
        %2106 = vmatpush1.bf16.msra.mxu0 %v2077
        %2107 = vmatprep.subr.bf16.mxu0 0
        %2108 = vmatpush1.bf16.msra.mxu0 %v2076
        %2109 = vmatprep.subr.bf16.mxu0 0
        %2110 = vmatpush1.bf16.msra.mxu0 %v2075
        %2111 = vmatprep.subr.bf16.mxu0 0
        %2112 = vmatpush1.bf16.msra.mxu0 %v2074
        %2113 = vmatprep.subr.bf16.mxu0 0
        %2114 = vmatpush1.bf16.msra.mxu0 %v2073
        %2115 = vmatprep.subr.bf16.mxu0 0
        %2116 = vmatpush1.bf16.msra.mxu0 %v2072
        %2117 = vmatprep.subr.bf16.mxu0 0
        %2118 = vmatpush1.bf16.msra.mxu0 %v2071
        %2119 = vmatprep.subr.bf16.mxu0 0
        %2120 = vmatpush2.bf16.msra.mxu0 %v2086
        %2121 = vmatprep.subr.bf16.mxu0 0
        %2122 = vmatpush2.bf16.msra.mxu0 %v2085
        %2123 = vmatprep.subr.bf16.mxu0 0
        %2124 = vmatpush2.bf16.msra.mxu0 %v2084
        %2125 = vmatprep.subr.bf16.mxu0 0
        %2126 = vmatpush2.bf16.msra.mxu0 %v2083
        %2127 = vmatprep.subr.bf16.mxu0 0
        %2128 = vmatpush2.bf16.msra.mxu0 %v2082
        %2129 = vmatprep.subr.bf16.mxu0 0
        %2130 = vmatpush2.bf16.msra.mxu0 %v2081
        %2131 = vmatprep.subr.bf16.mxu0 0
        %2132 = vmatpush2.bf16.msra.mxu0 %v2080
        %2133 = vmatprep.subr.bf16.mxu0 0
        %2134 = vmatpush2.bf16.msra.mxu0 %v2079
        %2135 = vmatprep.mubr.bf16.mxu0 %v835
        %2136 = vmatmul.mubr.bf16.gmra.mxu0 %v834
        %v2137 = vpop.f32.mrf.mxu0
        %v2138 = vadd.f32 0.0, %v2137
        %v2139 = vpop.f32.mrf.mxu0
        %v2140 = vpop.f32.mrf.mxu0
        %v2141 = vadd.f32 0.0, %v2140
        %v2142 = vpop.f32.mrf.mxu0
        %2143 = vmatprep.mubr.bf16.mxu0 %v837
        %2144 = vmatmul.mubr.bf16.gmra.mxu0 %v836
        %v2145 = vpop.f32.mrf.mxu0
        %v2146 = vadd.f32 0.0, %v2145
        %v2147 = vpop.f32.mrf.mxu0
        %v2148 = vpop.f32.mrf.mxu0
        %v2149 = vadd.f32 0.0, %v2148
        %v2150 = vpop.f32.mrf.mxu0
        %2151 = vmatprep.mubr.bf16.mxu0 %v839
        %2152 = vmatmul.mubr.bf16.gmra.mxu0 %v838
        %v2153 = vpop.f32.mrf.mxu0
        %v2154 = vadd.f32 0.0, %v2153
        %v2155 = vpop.f32.mrf.mxu0
        %v2156 = vpop.f32.mrf.mxu0
        %v2157 = vadd.f32 0.0, %v2156
        %v2158 = vpop.f32.mrf.mxu0
        %2159 = vmatprep.mubr.bf16.mxu0 %v841
        %2160 = vmatmul.mubr.bf16.gmra.mxu0 %v840
        %v2161 = vpop.f32.mrf.mxu0
        %v2162 = vadd.f32 0.0, %v2161
        %v2163 = vpop.f32.mrf.mxu0
        %v2164 = vpop.f32.mrf.mxu0
        %v2165 = vadd.f32 0.0, %v2164
        %v2166 = vpop.f32.mrf.mxu0
        %2167 = vmatprep.mubr.bf16.mxu0 %v843
        %2168 = vmatmul.mubr.bf16.gmra.mxu0 %v842
        %v2169 = vpop.f32.mrf.mxu0
        %v2170 = vadd.f32 0.0, %v2169
        %v2171 = vpop.f32.mrf.mxu0
        %v2172 = vpop.f32.mrf.mxu0
        %v2173 = vadd.f32 0.0, %v2172
        %v2174 = vpop.f32.mrf.mxu0
        %2175 = vmatprep.mubr.bf16.mxu0 %v845
        %2176 = vmatmul.mubr.bf16.gmra.mxu0 %v844
        %v2177 = vpop.f32.mrf.mxu0
        %v2178 = vadd.f32 0.0, %v2177
        %v2179 = vpop.f32.mrf.mxu0
        %v2180 = vpop.f32.mrf.mxu0
        %v2181 = vadd.f32 0.0, %v2180
        %v2182 = vpop.f32.mrf.mxu0
        %2183 = vmatprep.mubr.bf16.mxu0 %v847
        %2184 = vmatmul.mubr.bf16.gmra.mxu0 %v846
        %v2185 = vpop.f32.mrf.mxu0
        %v2186 = vadd.f32 0.0, %v2185
        %v2187 = vpop.f32.mrf.mxu0
        %v2188 = vpop.f32.mrf.mxu0
        %v2189 = vadd.f32 0.0, %v2188
        %v2190 = vpop.f32.mrf.mxu0
        %2191 = vmatprep.mubr.bf16.mxu0 %v849
        %2192 = vmatmul.mubr.bf16.gmra.mxu0 %v848
        %v2193 = vpop.f32.mrf.mxu0
        %v2194 = vadd.f32 0.0, %v2193
        %v2195 = vpop.f32.mrf.mxu0
        %v2196 = vpop.f32.mrf.mxu0
        %v2197 = vadd.f32 0.0, %v2196
        %v2198 = vpop.f32.mrf.mxu0
        %2199 = vdwg.mxu0
        %2200 = vrot.lane.b32.xlu0 %v1045, 64
        %v2201 = vpop.permute.xlu0 %2200
        %2202 = vrot.lane.b32.xlu0 %v1048, 64
        %v2203 = vpop.permute.xlu0 %2202
        %2204 = vrot.lane.b32.xlu0 %v1053, 64
        %v2205 = vpop.permute.xlu0 %2204
        %2206 = vrot.lane.b32.xlu0 %v1056, 64
        %v2207 = vpop.permute.xlu0 %2206
        %2208 = vrot.lane.b32.xlu0 %v1061, 64
        %v2209 = vpop.permute.xlu0 %2208
        %2210 = vrot.lane.b32.xlu0 %v1064, 64
        %v2211 = vpop.permute.xlu0 %2210
        %2212 = vrot.lane.b32.xlu0 %v1069, 64
        %v2213 = vpop.permute.xlu0 %2212
        %2214 = vrot.lane.b32.xlu0 %v1072, 64
        %v2215 = vpop.permute.xlu0 %2214
        %2216 = vrot.lane.b32.xlu0 %v1077, 64
        %v2217 = vpop.permute.xlu0 %2216
        %2218 = vrot.lane.b32.xlu0 %v1080, 64
        %v2219 = vpop.permute.xlu0 %2218
        %2220 = vrot.lane.b32.xlu0 %v1085, 64
        %v2221 = vpop.permute.xlu0 %2220
        %2222 = vrot.lane.b32.xlu0 %v1088, 64
        %v2223 = vpop.permute.xlu0 %2222
        %2224 = vrot.lane.b32.xlu0 %v1093, 64
        %v2225 = vpop.permute.xlu0 %2224
        %2226 = vrot.lane.b32.xlu0 %v1096, 64
        %v2227 = vpop.permute.xlu0 %2226
        %2228 = vrot.lane.b32.xlu0 %v1101, 64
        %v2229 = vpop.permute.xlu0 %2228
        %2230 = vrot.lane.b32.xlu0 %v1104, 64
        %v2231 = vpop.permute.xlu0 %2230
        %2232 = vrot.lane.b32.xlu0 %v1238, 64
        %v2233 = vpop.permute.xlu0 %2232
        %2234 = vrot.lane.b32.xlu0 %v1241, 64
        %v2235 = vpop.permute.xlu0 %2234
        %2236 = vrot.lane.b32.xlu0 %v1246, 64
        %v2237 = vpop.permute.xlu0 %2236
        %2238 = vrot.lane.b32.xlu0 %v1249, 64
        %v2239 = vpop.permute.xlu0 %2238
        %2240 = vrot.lane.b32.xlu0 %v1254, 64
        %v2241 = vpop.permute.xlu0 %2240
        %2242 = vrot.lane.b32.xlu0 %v1257, 64
        %v2243 = vpop.permute.xlu0 %2242
        %2244 = vrot.lane.b32.xlu0 %v1262, 64
        %v2245 = vpop.permute.xlu0 %2244
        %2246 = vrot.lane.b32.xlu0 %v1265, 64
        %v2247 = vpop.permute.xlu0 %2246
        %2248 = vrot.lane.b32.xlu0 %v1270, 64
        %v2249 = vpop.permute.xlu0 %2248
        %2250 = vrot.lane.b32.xlu0 %v1273, 64
        %v2251 = vpop.permute.xlu0 %2250
        %2252 = vrot.lane.b32.xlu0 %v1278, 64
        %v2253 = vpop.permute.xlu0 %2252
        %2254 = vrot.lane.b32.xlu0 %v1281, 64
        %v2255 = vpop.permute.xlu0 %2254
        %2256 = vrot.lane.b32.xlu0 %v1286, 64
        %v2257 = vpop.permute.xlu0 %2256
        %2258 = vrot.lane.b32.xlu0 %v1289, 64
        %v2259 = vpop.permute.xlu0 %2258
        %2260 = vrot.lane.b32.xlu0 %v1294, 64
        %v2261 = vpop.permute.xlu0 %2260
        %2262 = vrot.lane.b32.xlu0 %v1297, 64
        %v2263 = vpop.permute.xlu0 %2262
        %v2264 = vmul.f32 %v1045, %v596
        %v2265 = vmul.f32 %v1048, %v597
        %v2266 = vmul.f32 %v1053, %v598
        %v2267 = vmul.f32 %v1056, %v599
        %v2268 = vmul.f32 %v1061, %v600
        %v2269 = vmul.f32 %v1064, %v601
        %v2270 = vmul.f32 %v1069, %v602
        %v2271 = vmul.f32 %v1072, %v603
        %v2272 = vmul.f32 %v1077, %v604
        %v2273 = vmul.f32 %v1080, %v605
        %v2274 = vmul.f32 %v1085, %v606
        %v2275 = vmul.f32 %v1088, %v607
        %v2276 = vmul.f32 %v1093, %v608
        %v2277 = vmul.f32 %v1096, %v609
        %v2278 = vmul.f32 %v1101, %v610
        %v2279 = vmul.f32 %v1104, %v611
        %v2280 = vmul.f32 %v1238, %v596
        %v2281 = vmul.f32 %v1241, %v597
        %v2282 = vmul.f32 %v1246, %v598
        %v2283 = vmul.f32 %v1249, %v599
        %v2284 = vmul.f32 %v1254, %v600
        %v2285 = vmul.f32 %v1257, %v601
        %v2286 = vmul.f32 %v1262, %v602
        %v2287 = vmul.f32 %v1265, %v603
        %v2288 = vmul.f32 %v1270, %v604
        %v2289 = vmul.f32 %v1273, %v605
        %v2290 = vmul.f32 %v1278, %v606
        %v2291 = vmul.f32 %v1281, %v607
        %v2292 = vmul.f32 %v1286, %v608
        %v2293 = vmul.f32 %v1289, %v609
        %v2294 = vmul.f32 %v1294, %v610
        %v2295 = vmul.f32 %v1297, %v611
        %v2296 = vmul.f32 %v2201, %v612
        %v2297 = vmul.f32 %v2203, %v613
        %v2298 = vmul.f32 %v2205, %v614
        %v2299 = vmul.f32 %v2207, %v615
        %v2300 = vmul.f32 %v2209, %v616
        %v2301 = vmul.f32 %v2211, %v617
        %v2302 = vmul.f32 %v2213, %v618
        %v2303 = vmul.f32 %v2215, %v619
        %v2304 = vmul.f32 %v2217, %v620
        %v2305 = vmul.f32 %v2219, %v621
        %v2306 = vmul.f32 %v2221, %v622
        %v2307 = vmul.f32 %v2223, %v623
        %v2308 = vmul.f32 %v2225, %v624
        %v2309 = vmul.f32 %v2227, %v625
        %v2310 = vmul.f32 %v2229, %v626
        %v2311 = vmul.f32 %v2231, %v627
        %v2312 = vmul.f32 %v2233, %v612
        %v2313 = vmul.f32 %v2235, %v613
        %v2314 = vmul.f32 %v2237, %v614
        %v2315 = vmul.f32 %v2239, %v615
        %v2316 = vmul.f32 %v2241, %v616
        %v2317 = vmul.f32 %v2243, %v617
        %v2318 = vmul.f32 %v2245, %v618
        %v2319 = vmul.f32 %v2247, %v619
        %v2320 = vmul.f32 %v2249, %v620
        %v2321 = vmul.f32 %v2251, %v621
        %v2322 = vmul.f32 %v2253, %v622
        %v2323 = vmul.f32 %v2255, %v623
        %v2324 = vmul.f32 %v2257, %v624
        %v2325 = vmul.f32 %v2259, %v625
        %v2326 = vmul.f32 %v2261, %v626
        %v2327 = vmul.f32 %v2263, %v627
        %v2328 = vadd.f32 %v2264, %v2296
        %v2329 = vadd.f32 %v2265, %v2297
        %v2330 = vadd.f32 %v2266, %v2298
        %v2331 = vadd.f32 %v2267, %v2299
        %v2332 = vadd.f32 %v2268, %v2300
        %v2333 = vadd.f32 %v2269, %v2301
        %v2334 = vadd.f32 %v2270, %v2302
        %v2335 = vadd.f32 %v2271, %v2303
        %v2336 = vadd.f32 %v2272, %v2304
        %v2337 = vadd.f32 %v2273, %v2305
        %v2338 = vadd.f32 %v2274, %v2306
        %v2339 = vadd.f32 %v2275, %v2307
        %v2340 = vadd.f32 %v2276, %v2308
        %v2341 = vadd.f32 %v2277, %v2309
        %v2342 = vadd.f32 %v2278, %v2310
        %v2343 = vadd.f32 %v2279, %v2311
        %v2344 = vadd.f32 %v2280, %v2312
        %v2345 = vadd.f32 %v2281, %v2313
        %v2346 = vadd.f32 %v2282, %v2314
        %v2347 = vadd.f32 %v2283, %v2315
        %v2348 = vadd.f32 %v2284, %v2316
        %v2349 = vadd.f32 %v2285, %v2317
        %v2350 = vadd.f32 %v2286, %v2318
        %v2351 = vadd.f32 %v2287, %v2319
        %v2352 = vadd.f32 %v2288, %v2320
        %v2353 = vadd.f32 %v2289, %v2321
        %v2354 = vadd.f32 %v2290, %v2322
        %v2355 = vadd.f32 %v2291, %v2323
        %v2356 = vadd.f32 %v2292, %v2324
        %v2357 = vadd.f32 %v2293, %v2325
        %v2358 = vadd.f32 %v2294, %v2326
        %v2359 = vadd.f32 %v2295, %v2327
        %2360 = vrot.lane.b32.xlu0 %v1495, 64
        %v2361 = vpop.permute.xlu0 %2360
        %2362 = vrot.lane.b32.xlu0 %v1498, 64
        %v2363 = vpop.permute.xlu0 %2362
        %2364 = vrot.lane.b32.xlu0 %v1503, 64
        %v2365 = vpop.permute.xlu0 %2364
        %2366 = vrot.lane.b32.xlu0 %v1506, 64
        %v2367 = vpop.permute.xlu0 %2366
        %2368 = vrot.lane.b32.xlu0 %v1511, 64
        %v2369 = vpop.permute.xlu0 %2368
        %2370 = vrot.lane.b32.xlu0 %v1514, 64
        %v2371 = vpop.permute.xlu0 %2370
        %2372 = vrot.lane.b32.xlu0 %v1519, 64
        %v2373 = vpop.permute.xlu0 %2372
        %2374 = vrot.lane.b32.xlu0 %v1522, 64
        %v2375 = vpop.permute.xlu0 %2374
        %2376 = vrot.lane.b32.xlu0 %v1527, 64
        %v2377 = vpop.permute.xlu0 %2376
        %2378 = vrot.lane.b32.xlu0 %v1530, 64
        %v2379 = vpop.permute.xlu0 %2378
        %2380 = vrot.lane.b32.xlu0 %v1535, 64
        %v2381 = vpop.permute.xlu0 %2380
        %2382 = vrot.lane.b32.xlu0 %v1538, 64
        %v2383 = vpop.permute.xlu0 %2382
        %2384 = vrot.lane.b32.xlu0 %v1543, 64
        %v2385 = vpop.permute.xlu0 %2384
        %2386 = vrot.lane.b32.xlu0 %v1546, 64
        %v2387 = vpop.permute.xlu0 %2386
        %2388 = vrot.lane.b32.xlu0 %v1551, 64
        %v2389 = vpop.permute.xlu0 %2388
        %2390 = vrot.lane.b32.xlu0 %v1554, 64
        %v2391 = vpop.permute.xlu0 %2390
        %2392 = vrot.lane.b32.xlu0 %v1688, 64
        %v2393 = vpop.permute.xlu0 %2392
        %2394 = vrot.lane.b32.xlu0 %v1691, 64
        %v2395 = vpop.permute.xlu0 %2394
        %2396 = vrot.lane.b32.xlu0 %v1696, 64
        %v2397 = vpop.permute.xlu0 %2396
        %2398 = vrot.lane.b32.xlu0 %v1699, 64
        %v2399 = vpop.permute.xlu0 %2398
        %2400 = vrot.lane.b32.xlu0 %v1704, 64
        %v2401 = vpop.permute.xlu0 %2400
        %2402 = vrot.lane.b32.xlu0 %v1707, 64
        %v2403 = vpop.permute.xlu0 %2402
        %2404 = vrot.lane.b32.xlu0 %v1712, 64
        %v2405 = vpop.permute.xlu0 %2404
        %2406 = vrot.lane.b32.xlu0 %v1715, 64
        %v2407 = vpop.permute.xlu0 %2406
        %2408 = vrot.lane.b32.xlu0 %v1720, 64
        %v2409 = vpop.permute.xlu0 %2408
        %2410 = vrot.lane.b32.xlu0 %v1723, 64
        %v2411 = vpop.permute.xlu0 %2410
        %2412 = vrot.lane.b32.xlu0 %v1728, 64
        %v2413 = vpop.permute.xlu0 %2412
        %2414 = vrot.lane.b32.xlu0 %v1731, 64
        %v2415 = vpop.permute.xlu0 %2414
        %2416 = vrot.lane.b32.xlu0 %v1736, 64
        %v2417 = vpop.permute.xlu0 %2416
        %2418 = vrot.lane.b32.xlu0 %v1739, 64
        %v2419 = vpop.permute.xlu0 %2418
        %2420 = vrot.lane.b32.xlu0 %v1744, 64
        %v2421 = vpop.permute.xlu0 %2420
        %2422 = vrot.lane.b32.xlu0 %v1747, 64
        %v2423 = vpop.permute.xlu0 %2422
        %v2424 = vmul.f32 %v1495, %v596
        %v2425 = vmul.f32 %v1498, %v597
        %v2426 = vmul.f32 %v1503, %v598
        %v2427 = vmul.f32 %v1506, %v599
        %v2428 = vmul.f32 %v1511, %v600
        %v2429 = vmul.f32 %v1514, %v601
        %v2430 = vmul.f32 %v1519, %v602
        %v2431 = vmul.f32 %v1522, %v603
        %v2432 = vmul.f32 %v1527, %v604
        %v2433 = vmul.f32 %v1530, %v605
        %v2434 = vmul.f32 %v1535, %v606
        %v2435 = vmul.f32 %v1538, %v607
        %v2436 = vmul.f32 %v1543, %v608
        %v2437 = vmul.f32 %v1546, %v609
        %v2438 = vmul.f32 %v1551, %v610
        %v2439 = vmul.f32 %v1554, %v611
        %v2440 = vmul.f32 %v1688, %v596
        %v2441 = vmul.f32 %v1691, %v597
        %v2442 = vmul.f32 %v1696, %v598
        %v2443 = vmul.f32 %v1699, %v599
        %v2444 = vmul.f32 %v1704, %v600
        %v2445 = vmul.f32 %v1707, %v601
        %v2446 = vmul.f32 %v1712, %v602
        %v2447 = vmul.f32 %v1715, %v603
        %v2448 = vmul.f32 %v1720, %v604
        %v2449 = vmul.f32 %v1723, %v605
        %v2450 = vmul.f32 %v1728, %v606
        %v2451 = vmul.f32 %v1731, %v607
        %v2452 = vmul.f32 %v1736, %v608
        %v2453 = vmul.f32 %v1739, %v609
        %v2454 = vmul.f32 %v1744, %v610
        %v2455 = vmul.f32 %v1747, %v611
        %v2456 = vmul.f32 %v2361, %v612
        %v2457 = vmul.f32 %v2363, %v613
        %v2458 = vmul.f32 %v2365, %v614
        %v2459 = vmul.f32 %v2367, %v615
        %v2460 = vmul.f32 %v2369, %v616
        %v2461 = vmul.f32 %v2371, %v617
        %v2462 = vmul.f32 %v2373, %v618
        %v2463 = vmul.f32 %v2375, %v619
        %v2464 = vmul.f32 %v2377, %v620
        %v2465 = vmul.f32 %v2379, %v621
        %v2466 = vmul.f32 %v2381, %v622
        %v2467 = vmul.f32 %v2383, %v623
        %v2468 = vmul.f32 %v2385, %v624
        %v2469 = vmul.f32 %v2387, %v625
        %v2470 = vmul.f32 %v2389, %v626
        %v2471 = vmul.f32 %v2391, %v627
        %v2472 = vmul.f32 %v2393, %v612
        %v2473 = vmul.f32 %v2395, %v613
        %v2474 = vmul.f32 %v2397, %v614
        %v2475 = vmul.f32 %v2399, %v615
        %v2476 = vmul.f32 %v2401, %v616
        %v2477 = vmul.f32 %v2403, %v617
        %v2478 = vmul.f32 %v2405, %v618
        %v2479 = vmul.f32 %v2407, %v619
        %v2480 = vmul.f32 %v2409, %v620
        %v2481 = vmul.f32 %v2411, %v621
        %v2482 = vmul.f32 %v2413, %v622
        %v2483 = vmul.f32 %v2415, %v623
        %v2484 = vmul.f32 %v2417, %v624
        %v2485 = vmul.f32 %v2419, %v625
        %v2486 = vmul.f32 %v2421, %v626
        %v2487 = vmul.f32 %v2423, %v627
        %v2488 = vadd.f32 %v2424, %v2456
        %v2489 = vadd.f32 %v2425, %v2457
        %v2490 = vadd.f32 %v2426, %v2458
        %v2491 = vadd.f32 %v2427, %v2459
        %v2492 = vadd.f32 %v2428, %v2460
        %v2493 = vadd.f32 %v2429, %v2461
        %v2494 = vadd.f32 %v2430, %v2462
        %v2495 = vadd.f32 %v2431, %v2463
        %v2496 = vadd.f32 %v2432, %v2464
        %v2497 = vadd.f32 %v2433, %v2465
        %v2498 = vadd.f32 %v2434, %v2466
        %v2499 = vadd.f32 %v2435, %v2467
        %v2500 = vadd.f32 %v2436, %v2468
        %v2501 = vadd.f32 %v2437, %v2469
        %v2502 = vadd.f32 %v2438, %v2470
        %v2503 = vadd.f32 %v2439, %v2471
        %v2504 = vadd.f32 %v2440, %v2472
        %v2505 = vadd.f32 %v2441, %v2473
        %v2506 = vadd.f32 %v2442, %v2474
        %v2507 = vadd.f32 %v2443, %v2475
        %v2508 = vadd.f32 %v2444, %v2476
        %v2509 = vadd.f32 %v2445, %v2477
        %v2510 = vadd.f32 %v2446, %v2478
        %v2511 = vadd.f32 %v2447, %v2479
        %v2512 = vadd.f32 %v2448, %v2480
        %v2513 = vadd.f32 %v2449, %v2481
        %v2514 = vadd.f32 %v2450, %v2482
        %v2515 = vadd.f32 %v2451, %v2483
        %v2516 = vadd.f32 %v2452, %v2484
        %v2517 = vadd.f32 %v2453, %v2485
        %v2518 = vadd.f32 %v2454, %v2486
        %v2519 = vadd.f32 %v2455, %v2487
        %v2520 = vpack.c.bf16 %v2329, %v2328
        %v2521 = vpack.c.bf16 %v2331, %v2330
        %v2522 = vpack.c.bf16 %v2333, %v2332
        %v2523 = vpack.c.bf16 %v2335, %v2334
        %v2524 = vpack.c.bf16 %v2337, %v2336
        %v2525 = vpack.c.bf16 %v2339, %v2338
        %v2526 = vpack.c.bf16 %v2341, %v2340
        %v2527 = vpack.c.bf16 %v2343, %v2342
        %v2528 = vpack.c.bf16 %v2345, %v2344
        %v2529 = vpack.c.bf16 %v2347, %v2346
        %v2530 = vpack.c.bf16 %v2349, %v2348
        %v2531 = vpack.c.bf16 %v2351, %v2350
        %v2532 = vpack.c.bf16 %v2353, %v2352
        %v2533 = vpack.c.bf16 %v2355, %v2354
        %v2534 = vpack.c.bf16 %v2357, %v2356
        %v2535 = vpack.c.bf16 %v2359, %v2358
        %v2536 = vpack.c.bf16 %v2489, %v2488
        %v2537 = vpack.c.bf16 %v2491, %v2490
        %v2538 = vpack.c.bf16 %v2493, %v2492
        %v2539 = vpack.c.bf16 %v2495, %v2494
        %v2540 = vpack.c.bf16 %v2497, %v2496
        %v2541 = vpack.c.bf16 %v2499, %v2498
        %v2542 = vpack.c.bf16 %v2501, %v2500
        %v2543 = vpack.c.bf16 %v2503, %v2502
        %v2544 = vpack.c.bf16 %v2505, %v2504
        %v2545 = vpack.c.bf16 %v2507, %v2506
        %v2546 = vpack.c.bf16 %v2509, %v2508
        %v2547 = vpack.c.bf16 %v2511, %v2510
        %v2548 = vpack.c.bf16 %v2513, %v2512
        %v2549 = vpack.c.bf16 %v2515, %v2514
        %v2550 = vpack.c.bf16 %v2517, %v2516
        %v2551 = vpack.c.bf16 %v2519, %v2518
        %2552 = vmatprep.subr.bf16.mxu0 0
        %2553 = vmatpush1.bf16.xpose.msra.mxu0 %v2543
        %2554 = vmatprep.subr.bf16.mxu0 0
        %2555 = vmatpush1.bf16.xpose.msra.mxu0 %v2542
        %2556 = vmatprep.subr.bf16.mxu0 0
        %2557 = vmatpush1.bf16.xpose.msra.mxu0 %v2541
        %2558 = vmatprep.subr.bf16.mxu0 0
        %2559 = vmatpush1.bf16.xpose.msra.mxu0 %v2540
        %2560 = vmatprep.subr.bf16.mxu0 0
        %2561 = vmatpush1.bf16.xpose.msra.mxu0 %v2539
        %2562 = vmatprep.subr.bf16.mxu0 0
        %2563 = vmatpush1.bf16.xpose.msra.mxu0 %v2538
        %2564 = vmatprep.subr.bf16.mxu0 0
        %2565 = vmatpush1.bf16.xpose.msra.mxu0 %v2537
        %2566 = vmatprep.subr.bf16.mxu0 0
        %2567 = vmatpush1.bf16.xpose.msra.mxu0 %v2536
        %2568 = vmatprep.subr.bf16.mxu0 0
        %2569 = vmatpush2.bf16.xpose.msra.mxu0 0
        %2570 = vmatprep.subr.bf16.mxu0 0
        %2571 = vmatpush2.bf16.xpose.msra.mxu0 0
        %2572 = vmatprep.subr.bf16.mxu0 0
        %2573 = vmatpush2.bf16.xpose.msra.mxu0 0
        %2574 = vmatprep.subr.bf16.mxu0 0
        %2575 = vmatpush2.bf16.xpose.msra.mxu0 0
        %2576 = vmatprep.subr.bf16.mxu0 0
        %2577 = vmatpush2.bf16.xpose.msra.mxu0 0
        %2578 = vmatprep.subr.bf16.mxu0 0
        %2579 = vmatpush2.bf16.xpose.msra.mxu0 0
        %2580 = vmatprep.subr.bf16.mxu0 0
        %2581 = vmatpush2.bf16.xpose.msra.mxu0 0
        %2582 = vmatprep.subr.bf16.mxu0 0
        %2583 = vmatpush2.bf16.xpose.msra.mxu0 0
        %2584 = vmatprep.mubr.bf16.mxu0 0
        %2585 = vmatmul.mubr.bf16.gmra.mxu0 %v2520
        %v2586 = vpop.f32.mrf.mxu0
        %v2587 = vadd.f32 0.0, %v2586
        %v2588 = vpop.f32.mrf.mxu0
        %v2589 = vpop.f32.mrf.mxu0
        %v2590 = vadd.f32 0.0, %v2589
        %v2591 = vpop.f32.mrf.mxu0
        %2592 = vmatprep.mubr.bf16.mxu0 0
        %2593 = vmatmul.mubr.bf16.gmra.mxu0 %v2521
        %v2594 = vpop.f32.mrf.mxu0
        %v2595 = vadd.f32 0.0, %v2594
        %v2596 = vpop.f32.mrf.mxu0
        %v2597 = vpop.f32.mrf.mxu0
        %v2598 = vadd.f32 0.0, %v2597
        %v2599 = vpop.f32.mrf.mxu0
        %2600 = vmatprep.mubr.bf16.mxu0 0
        %2601 = vmatmul.mubr.bf16.gmra.mxu0 %v2522
        %v2602 = vpop.f32.mrf.mxu0
        %v2603 = vadd.f32 0.0, %v2602
        %v2604 = vpop.f32.mrf.mxu0
        %v2605 = vpop.f32.mrf.mxu0
        %v2606 = vadd.f32 0.0, %v2605
        %v2607 = vpop.f32.mrf.mxu0
        %2608 = vmatprep.mubr.bf16.mxu0 0
        %2609 = vmatmul.mubr.bf16.gmra.mxu0 %v2523
        %v2610 = vpop.f32.mrf.mxu0
        %v2611 = vadd.f32 0.0, %v2610
        %v2612 = vpop.f32.mrf.mxu0
        %v2613 = vpop.f32.mrf.mxu0
        %v2614 = vadd.f32 0.0, %v2613
        %v2615 = vpop.f32.mrf.mxu0
        %2616 = vmatprep.mubr.bf16.mxu0 0
        %2617 = vmatmul.mubr.bf16.gmra.mxu0 %v2524
        %v2618 = vpop.f32.mrf.mxu0
        %v2619 = vadd.f32 0.0, %v2618
        %v2620 = vpop.f32.mrf.mxu0
        %v2621 = vpop.f32.mrf.mxu0
        %v2622 = vadd.f32 0.0, %v2621
        %v2623 = vpop.f32.mrf.mxu0
        %2624 = vmatprep.mubr.bf16.mxu0 0
        %2625 = vmatmul.mubr.bf16.gmra.mxu0 %v2525
        %v2626 = vpop.f32.mrf.mxu0
        %v2627 = vadd.f32 0.0, %v2626
        %v2628 = vpop.f32.mrf.mxu0
        %v2629 = vpop.f32.mrf.mxu0
        %v2630 = vadd.f32 0.0, %v2629
        %v2631 = vpop.f32.mrf.mxu0
        %2632 = vmatprep.mubr.bf16.mxu0 0
        %2633 = vmatmul.mubr.bf16.gmra.mxu0 %v2526
        %v2634 = vpop.f32.mrf.mxu0
        %v2635 = vadd.f32 0.0, %v2634
        %v2636 = vpop.f32.mrf.mxu0
        %v2637 = vpop.f32.mrf.mxu0
        %v2638 = vadd.f32 0.0, %v2637
        %v2639 = vpop.f32.mrf.mxu0
        %2640 = vmatprep.mubr.bf16.mxu0 0
        %2641 = vmatmul.mubr.bf16.gmra.mxu0 %v2527
        %v2642 = vpop.f32.mrf.mxu0
        %v2643 = vadd.f32 0.0, %v2642
        %v2644 = vpop.f32.mrf.mxu0
        %v2645 = vpop.f32.mrf.mxu0
        %v2646 = vadd.f32 0.0, %v2645
        %v2647 = vpop.f32.mrf.mxu0
        %2648 = vdwg.mxu0
        %2649 = vmatprep.subr.bf16.mxu0 0
        %2650 = vmatpush1.bf16.xpose.msra.mxu0 %v2551
        %2651 = vmatprep.subr.bf16.mxu0 0
        %2652 = vmatpush1.bf16.xpose.msra.mxu0 %v2550
        %2653 = vmatprep.subr.bf16.mxu0 0
        %2654 = vmatpush1.bf16.xpose.msra.mxu0 %v2549
        %2655 = vmatprep.subr.bf16.mxu0 0
        %2656 = vmatpush1.bf16.xpose.msra.mxu0 %v2548
        %2657 = vmatprep.subr.bf16.mxu0 0
        %2658 = vmatpush1.bf16.xpose.msra.mxu0 %v2547
        %2659 = vmatprep.subr.bf16.mxu0 0
        %2660 = vmatpush1.bf16.xpose.msra.mxu0 %v2546
        %2661 = vmatprep.subr.bf16.mxu0 0
        %2662 = vmatpush1.bf16.xpose.msra.mxu0 %v2545
        %2663 = vmatprep.subr.bf16.mxu0 0
        %2664 = vmatpush1.bf16.xpose.msra.mxu0 %v2544
        %2665 = vmatprep.subr.bf16.mxu0 0
        %2666 = vmatpush2.bf16.xpose.msra.mxu0 0
        %2667 = vmatprep.subr.bf16.mxu0 0
        %2668 = vmatpush2.bf16.xpose.msra.mxu0 0
        %2669 = vmatprep.subr.bf16.mxu0 0
        %2670 = vmatpush2.bf16.xpose.msra.mxu0 0
        %2671 = vmatprep.subr.bf16.mxu0 0
        %2672 = vmatpush2.bf16.xpose.msra.mxu0 0
        %2673 = vmatprep.subr.bf16.mxu0 0
        %2674 = vmatpush2.bf16.xpose.msra.mxu0 0
        %2675 = vmatprep.subr.bf16.mxu0 0
        %2676 = vmatpush2.bf16.xpose.msra.mxu0 0
        %2677 = vmatprep.subr.bf16.mxu0 0
        %2678 = vmatpush2.bf16.xpose.msra.mxu0 0
        %2679 = vmatprep.subr.bf16.mxu0 0
        %2680 = vmatpush2.bf16.xpose.msra.mxu0 0
        %2681 = vmatprep.mubr.bf16.mxu0 0
        %2682 = vmatmul.mubr.bf16.gmra.mxu0 %v2528
        %v2683 = vpop.f32.mrf.mxu0
        %v2684 = vadd.f32 0.0, %v2683
        %v2685 = vpop.f32.mrf.mxu0
        %v2686 = vpop.f32.mrf.mxu0
        %v2687 = vadd.f32 0.0, %v2686
        %v2688 = vpop.f32.mrf.mxu0
        %2689 = vmatprep.mubr.bf16.mxu0 0
        %2690 = vmatmul.mubr.bf16.gmra.mxu0 %v2529
        %v2691 = vpop.f32.mrf.mxu0
        %v2692 = vadd.f32 0.0, %v2691
        %v2693 = vpop.f32.mrf.mxu0
        %v2694 = vpop.f32.mrf.mxu0
        %v2695 = vadd.f32 0.0, %v2694
        %v2696 = vpop.f32.mrf.mxu0
        %2697 = vmatprep.mubr.bf16.mxu0 0
        %2698 = vmatmul.mubr.bf16.gmra.mxu0 %v2530
        %v2699 = vpop.f32.mrf.mxu0
        %v2700 = vadd.f32 0.0, %v2699
        %v2701 = vpop.f32.mrf.mxu0
        %v2702 = vpop.f32.mrf.mxu0
        %v2703 = vadd.f32 0.0, %v2702
        %v2704 = vpop.f32.mrf.mxu0
        %2705 = vmatprep.mubr.bf16.mxu0 0
        %2706 = vmatmul.mubr.bf16.gmra.mxu0 %v2531
        %v2707 = vpop.f32.mrf.mxu0
        %v2708 = vadd.f32 0.0, %v2707
        %v2709 = vpop.f32.mrf.mxu0
        %v2710 = vpop.f32.mrf.mxu0
        %v2711 = vadd.f32 0.0, %v2710
        %v2712 = vpop.f32.mrf.mxu0
        %2713 = vmatprep.mubr.bf16.mxu0 0
        %2714 = vmatmul.mubr.bf16.gmra.mxu0 %v2532
        %v2715 = vpop.f32.mrf.mxu0
        %v2716 = vadd.f32 0.0, %v2715
        %v2717 = vpop.f32.mrf.mxu0
        %v2718 = vpop.f32.mrf.mxu0
        %v2719 = vadd.f32 0.0, %v2718
        %v2720 = vpop.f32.mrf.mxu0
        %2721 = vmatprep.mubr.bf16.mxu0 0
        %2722 = vmatmul.mubr.bf16.gmra.mxu0 %v2533
        %v2723 = vpop.f32.mrf.mxu0
        %v2724 = vadd.f32 0.0, %v2723
        %v2725 = vpop.f32.mrf.mxu0
        %v2726 = vpop.f32.mrf.mxu0
        %v2727 = vadd.f32 0.0, %v2726
        %v2728 = vpop.f32.mrf.mxu0
        %2729 = vmatprep.mubr.bf16.mxu0 0
        %2730 = vmatmul.mubr.bf16.gmra.mxu0 %v2534
        %v2731 = vpop.f32.mrf.mxu0
        %v2732 = vadd.f32 0.0, %v2731
        %v2733 = vpop.f32.mrf.mxu0
        %v2734 = vpop.f32.mrf.mxu0
        %v2735 = vadd.f32 0.0, %v2734
        %v2736 = vpop.f32.mrf.mxu0
        %2737 = vmatprep.mubr.bf16.mxu0 0
        %2738 = vmatmul.mubr.bf16.gmra.mxu0 %v2535
        %v2739 = vpop.f32.mrf.mxu0
        %v2740 = vadd.f32 0.0, %v2739
        %v2741 = vpop.f32.mrf.mxu0
        %v2742 = vpop.f32.mrf.mxu0
        %v2743 = vadd.f32 0.0, %v2742
        %v2744 = vpop.f32.mrf.mxu0
        %2745 = vdwg.mxu0
        %v2746 = vmul.f32 %v2587, 0.088388346
        %v2747 = vmul.f32 %v2590, 0.088388346
        %v2748 = vmul.f32 %v2595, 0.088388346
        %v2749 = vmul.f32 %v2598, 0.088388346
        %v2750 = vmul.f32 %v2603, 0.088388346
        %v2751 = vmul.f32 %v2606, 0.088388346
        %v2752 = vmul.f32 %v2611, 0.088388346
        %v2753 = vmul.f32 %v2614, 0.088388346
        %v2754 = vmul.f32 %v2619, 0.088388346
        %v2755 = vmul.f32 %v2622, 0.088388346
        %v2756 = vmul.f32 %v2627, 0.088388346
        %v2757 = vmul.f32 %v2630, 0.088388346
        %v2758 = vmul.f32 %v2635, 0.088388346
        %v2759 = vmul.f32 %v2638, 0.088388346
        %v2760 = vmul.f32 %v2643, 0.088388346
        %v2761 = vmul.f32 %v2646, 0.088388346
        %v2762 = vmul.f32 %v2684, 0.088388346
        %v2763 = vmul.f32 %v2687, 0.088388346
        %v2764 = vmul.f32 %v2692, 0.088388346
        %v2765 = vmul.f32 %v2695, 0.088388346
        %v2766 = vmul.f32 %v2700, 0.088388346
        %v2767 = vmul.f32 %v2703, 0.088388346
        %v2768 = vmul.f32 %v2708, 0.088388346
        %v2769 = vmul.f32 %v2711, 0.088388346
        %v2770 = vmul.f32 %v2716, 0.088388346
        %v2771 = vmul.f32 %v2719, 0.088388346
        %v2772 = vmul.f32 %v2724, 0.088388346
        %v2773 = vmul.f32 %v2727, 0.088388346
        %v2774 = vmul.f32 %v2732, 0.088388346
        %v2775 = vmul.f32 %v2735, 0.088388346
        %v2776 = vmul.f32 %v2740, 0.088388346
        %v2777 = vmul.f32 %v2743, 0.088388346
        %v2778 = vlaneseq
        %v2779 = vshrl.u32 %v2778, 7
        %v2780 = vadd.s32 %v2779, 8
        %v2781 = vadd.s32 %v2779, 16
        %v2782 = vadd.s32 %v2779, 24
        %v2783 = vadd.s32 %v2779, 32
        %v2784 = vadd.s32 %v2779, 40
        %v2785 = vadd.s32 %v2779, 48
        %v2786 = vadd.s32 %v2779, 56
        %v2787 = vadd.s32 %v2779, 64
        %v2788 = vadd.s32 %v2779, 72
        %v2789 = vadd.s32 %v2779, 80
        %v2790 = vadd.s32 %v2779, 88
        %v2791 = vadd.s32 %v2779, 96
        %v2792 = vadd.s32 %v2779, 104
        %v2793 = vadd.s32 %v2779, 112
        %v2794 = vadd.s32 %v2779, 120
        %v2795 = vlaneseq
        %v2796 = vand.u32 %v2795, 127
        %vm2797 = vcmp.le.s32.totalorder %v2796, %v2779
        %vm2798 = vcmp.le.s32.totalorder %v2796, %v2780
        %vm2799 = vcmp.le.s32.totalorder %v2796, %v2781
        %vm2800 = vcmp.le.s32.totalorder %v2796, %v2782
        %vm2801 = vcmp.le.s32.totalorder %v2796, %v2783
        %vm2802 = vcmp.le.s32.totalorder %v2796, %v2784
        %vm2803 = vcmp.le.s32.totalorder %v2796, %v2785
        %vm2804 = vcmp.le.s32.totalorder %v2796, %v2786
        %vm2805 = vcmp.le.s32.totalorder %v2796, %v2787
        %vm2806 = vcmp.le.s32.totalorder %v2796, %v2788
        %vm2807 = vcmp.le.s32.totalorder %v2796, %v2789
        %vm2808 = vcmp.le.s32.totalorder %v2796, %v2790
        %vm2809 = vcmp.le.s32.totalorder %v2796, %v2791
        %vm2810 = vcmp.le.s32.totalorder %v2796, %v2792
        %vm2811 = vcmp.le.s32.totalorder %v2796, %v2793
        %vm2812 = vcmp.le.s32.totalorder %v2796, %v2794
        %v2813 = vsel %vm2797, 1, 0
        %v2814 = vsel %vm2798, 1, 0
        %v2815 = vsel %vm2799, 1, 0
        %v2816 = vsel %vm2800, 1, 0
        %v2817 = vsel %vm2801, 1, 0
        %v2818 = vsel %vm2802, 1, 0
        %v2819 = vsel %vm2803, 1, 0
        %v2820 = vsel %vm2804, 1, 0
        %v2821 = vsel %vm2805, 1, 0
        %v2822 = vsel %vm2806, 1, 0
        %v2823 = vsel %vm2807, 1, 0
        %v2824 = vsel %vm2808, 1, 0
        %v2825 = vsel %vm2809, 1, 0
        %v2826 = vsel %vm2810, 1, 0
        %v2827 = vsel %vm2811, 1, 0
        %v2828 = vsel %vm2812, 1, 0
        %vm2829 = vcmp.eq.s32.totalorder %v2813, 1
        %vm2830 = vcmp.eq.s32.totalorder %v2814, 1
        %vm2831 = vcmp.eq.s32.totalorder %v2815, 1
        %vm2832 = vcmp.eq.s32.totalorder %v2816, 1
        %vm2833 = vcmp.eq.s32.totalorder %v2817, 1
        %vm2834 = vcmp.eq.s32.totalorder %v2818, 1
        %vm2835 = vcmp.eq.s32.totalorder %v2819, 1
        %vm2836 = vcmp.eq.s32.totalorder %v2820, 1
        %vm2837 = vcmp.eq.s32.totalorder %v2821, 1
        %vm2838 = vcmp.eq.s32.totalorder %v2822, 1
        %vm2839 = vcmp.eq.s32.totalorder %v2823, 1
        %vm2840 = vcmp.eq.s32.totalorder %v2824, 1
        %vm2841 = vcmp.eq.s32.totalorder %v2825, 1
        %vm2842 = vcmp.eq.s32.totalorder %v2826, 1
        %vm2843 = vcmp.eq.s32.totalorder %v2827, 1
        %vm2844 = vcmp.eq.s32.totalorder %v2828, 1
        %v2845 = vsel %vm2829, %v2746, -1e+30
        %v2846 = vsel %vm2830, %v2747, -1e+30
        %v2847 = vsel %vm2831, %v2748, -1e+30
        %v2848 = vsel %vm2832, %v2749, -1e+30
        %v2849 = vsel %vm2833, %v2750, -1e+30
        %v2850 = vsel %vm2834, %v2751, -1e+30
        %v2851 = vsel %vm2835, %v2752, -1e+30
        %v2852 = vsel %vm2836, %v2753, -1e+30
        %v2853 = vsel %vm2837, %v2754, -1e+30
        %v2854 = vsel %vm2838, %v2755, -1e+30
        %v2855 = vsel %vm2839, %v2756, -1e+30
        %v2856 = vsel %vm2840, %v2757, -1e+30
        %v2857 = vsel %vm2841, %v2758, -1e+30
        %v2858 = vsel %vm2842, %v2759, -1e+30
        %v2859 = vsel %vm2843, %v2760, -1e+30
        %v2860 = vsel %vm2844, %v2761, -1e+30
        %v2861 = vsel %vm2829, %v2762, -1e+30
        %v2862 = vsel %vm2830, %v2763, -1e+30
        %v2863 = vsel %vm2831, %v2764, -1e+30
        %v2864 = vsel %vm2832, %v2765, -1e+30
        %v2865 = vsel %vm2833, %v2766, -1e+30
        %v2866 = vsel %vm2834, %v2767, -1e+30
        %v2867 = vsel %vm2835, %v2768, -1e+30
        %v2868 = vsel %vm2836, %v2769, -1e+30
        %v2869 = vsel %vm2837, %v2770, -1e+30
        %v2870 = vsel %vm2838, %v2771, -1e+30
        %v2871 = vsel %vm2839, %v2772, -1e+30
        %v2872 = vsel %vm2840, %v2773, -1e+30
        %v2873 = vsel %vm2841, %v2774, -1e+30
        %v2874 = vsel %vm2842, %v2775, -1e+30
        %v2875 = vsel %vm2843, %v2776, -1e+30
        %v2876 = vsel %vm2844, %v2777, -1e+30
        %2877 = vmax.xlane.f32.xlu0 %v2845
        %v2878 = vpop.xlane.xlu0 %2877
        %2879 = vmax.xlane.f32.xlu0 %v2846
        %v2880 = vpop.xlane.xlu0 %2879
        %2881 = vmax.xlane.f32.xlu0 %v2847
        %v2882 = vpop.xlane.xlu0 %2881
        %2883 = vmax.xlane.f32.xlu0 %v2848
        %v2884 = vpop.xlane.xlu0 %2883
        %2885 = vmax.xlane.f32.xlu0 %v2849
        %v2886 = vpop.xlane.xlu0 %2885
        %2887 = vmax.xlane.f32.xlu0 %v2850
        %v2888 = vpop.xlane.xlu0 %2887
        %2889 = vmax.xlane.f32.xlu0 %v2851
        %v2890 = vpop.xlane.xlu0 %2889
        %2891 = vmax.xlane.f32.xlu0 %v2852
        %v2892 = vpop.xlane.xlu0 %2891
        %2893 = vmax.xlane.f32.xlu0 %v2853
        %v2894 = vpop.xlane.xlu0 %2893
        %2895 = vmax.xlane.f32.xlu0 %v2854
        %v2896 = vpop.xlane.xlu0 %2895
        %2897 = vmax.xlane.f32.xlu0 %v2855
        %v2898 = vpop.xlane.xlu0 %2897
        %2899 = vmax.xlane.f32.xlu0 %v2856
        %v2900 = vpop.xlane.xlu0 %2899
        %2901 = vmax.xlane.f32.xlu0 %v2857
        %v2902 = vpop.xlane.xlu0 %2901
        %2903 = vmax.xlane.f32.xlu0 %v2858
        %v2904 = vpop.xlane.xlu0 %2903
        %2905 = vmax.xlane.f32.xlu0 %v2859
        %v2906 = vpop.xlane.xlu0 %2905
        %2907 = vmax.xlane.f32.xlu0 %v2860
        %v2908 = vpop.xlane.xlu0 %2907
        %2909 = vmax.xlane.f32.xlu0 %v2861
        %v2910 = vpop.xlane.xlu0 %2909
        %2911 = vmax.xlane.f32.xlu0 %v2862
        %v2912 = vpop.xlane.xlu0 %2911
        %2913 = vmax.xlane.f32.xlu0 %v2863
        %v2914 = vpop.xlane.xlu0 %2913
        %2915 = vmax.xlane.f32.xlu0 %v2864
        %v2916 = vpop.xlane.xlu0 %2915
        %2917 = vmax.xlane.f32.xlu0 %v2865
        %v2918 = vpop.xlane.xlu0 %2917
        %2919 = vmax.xlane.f32.xlu0 %v2866
        %v2920 = vpop.xlane.xlu0 %2919
        %2921 = vmax.xlane.f32.xlu0 %v2867
        %v2922 = vpop.xlane.xlu0 %2921
        %2923 = vmax.xlane.f32.xlu0 %v2868
        %v2924 = vpop.xlane.xlu0 %2923
        %2925 = vmax.xlane.f32.xlu0 %v2869
        %v2926 = vpop.xlane.xlu0 %2925
        %2927 = vmax.xlane.f32.xlu0 %v2870
        %v2928 = vpop.xlane.xlu0 %2927
        %2929 = vmax.xlane.f32.xlu0 %v2871
        %v2930 = vpop.xlane.xlu0 %2929
        %2931 = vmax.xlane.f32.xlu0 %v2872
        %v2932 = vpop.xlane.xlu0 %2931
        %2933 = vmax.xlane.f32.xlu0 %v2873
        %v2934 = vpop.xlane.xlu0 %2933
        %2935 = vmax.xlane.f32.xlu0 %v2874
        %v2936 = vpop.xlane.xlu0 %2935
        %2937 = vmax.xlane.f32.xlu0 %v2875
        %v2938 = vpop.xlane.xlu0 %2937
        %2939 = vmax.xlane.f32.xlu0 %v2876
        %v2940 = vpop.xlane.xlu0 %2939
        %v2941 = vsub.f32 %v2845, %v2878
        %v2942 = vsub.f32 %v2846, %v2880
        %v2943 = vsub.f32 %v2847, %v2882
        %v2944 = vsub.f32 %v2848, %v2884
        %v2945 = vsub.f32 %v2849, %v2886
        %v2946 = vsub.f32 %v2850, %v2888
        %v2947 = vsub.f32 %v2851, %v2890
        %v2948 = vsub.f32 %v2852, %v2892
        %v2949 = vsub.f32 %v2853, %v2894
        %v2950 = vsub.f32 %v2854, %v2896
        %v2951 = vsub.f32 %v2855, %v2898
        %v2952 = vsub.f32 %v2856, %v2900
        %v2953 = vsub.f32 %v2857, %v2902
        %v2954 = vsub.f32 %v2858, %v2904
        %v2955 = vsub.f32 %v2859, %v2906
        %v2956 = vsub.f32 %v2860, %v2908
        %v2957 = vsub.f32 %v2861, %v2910
        %v2958 = vsub.f32 %v2862, %v2912
        %v2959 = vsub.f32 %v2863, %v2914
        %v2960 = vsub.f32 %v2864, %v2916
        %v2961 = vsub.f32 %v2865, %v2918
        %v2962 = vsub.f32 %v2866, %v2920
        %v2963 = vsub.f32 %v2867, %v2922
        %v2964 = vsub.f32 %v2868, %v2924
        %v2965 = vsub.f32 %v2869, %v2926
        %v2966 = vsub.f32 %v2870, %v2928
        %v2967 = vsub.f32 %v2871, %v2930
        %v2968 = vsub.f32 %v2872, %v2932
        %v2969 = vsub.f32 %v2873, %v2934
        %v2970 = vsub.f32 %v2874, %v2936
        %v2971 = vsub.f32 %v2875, %v2938
        %v2972 = vsub.f32 %v2876, %v2940
        %v2973 = vmul.f32 %v2941, 1.442695
        %v2974 = vpow.pop %v2973
        %v2975 = vmul.f32 %v2942, 1.442695
        %v2976 = vpow.pop %v2975
        %v2977 = vmul.f32 %v2943, 1.442695
        %v2978 = vpow.pop %v2977
        %v2979 = vmul.f32 %v2944, 1.442695
        %v2980 = vpow.pop %v2979
        %v2981 = vmul.f32 %v2945, 1.442695
        %v2982 = vpow.pop %v2981
        %v2983 = vmul.f32 %v2946, 1.442695
        %v2984 = vpow.pop %v2983
        %v2985 = vmul.f32 %v2947, 1.442695
        %v2986 = vpow.pop %v2985
        %v2987 = vmul.f32 %v2948, 1.442695
        %v2988 = vpow.pop %v2987
        %v2989 = vmul.f32 %v2949, 1.442695
        %v2990 = vpow.pop %v2989
        %v2991 = vmul.f32 %v2950, 1.442695
        %v2992 = vpow.pop %v2991
        %v2993 = vmul.f32 %v2951, 1.442695
        %v2994 = vpow.pop %v2993
        %v2995 = vmul.f32 %v2952, 1.442695
        %v2996 = vpow.pop %v2995
        %v2997 = vmul.f32 %v2953, 1.442695
        %v2998 = vpow.pop %v2997
        %v2999 = vmul.f32 %v2954, 1.442695
        %v3000 = vpow.pop %v2999
        %v3001 = vmul.f32 %v2955, 1.442695
        %v3002 = vpow.pop %v3001
        %v3003 = vmul.f32 %v2956, 1.442695
        %v3004 = vpow.pop %v3003
        %v3005 = vmul.f32 %v2957, 1.442695
        %v3006 = vpow.pop %v3005
        %v3007 = vmul.f32 %v2958, 1.442695
        %v3008 = vpow.pop %v3007
        %v3009 = vmul.f32 %v2959, 1.442695
        %v3010 = vpow.pop %v3009
        %v3011 = vmul.f32 %v2960, 1.442695
        %v3012 = vpow.pop %v3011
        %v3013 = vmul.f32 %v2961, 1.442695
        %v3014 = vpow.pop %v3013
        %v3015 = vmul.f32 %v2962, 1.442695
        %v3016 = vpow.pop %v3015
        %v3017 = vmul.f32 %v2963, 1.442695
        %v3018 = vpow.pop %v3017
        %v3019 = vmul.f32 %v2964, 1.442695
        %v3020 = vpow.pop %v3019
        %v3021 = vmul.f32 %v2965, 1.442695
        %v3022 = vpow.pop %v3021
        %v3023 = vmul.f32 %v2966, 1.442695
        %v3024 = vpow.pop %v3023
        %v3025 = vmul.f32 %v2967, 1.442695
        %v3026 = vpow.pop %v3025
        %v3027 = vmul.f32 %v2968, 1.442695
        %v3028 = vpow.pop %v3027
        %v3029 = vmul.f32 %v2969, 1.442695
        %v3030 = vpow.pop %v3029
        %v3031 = vmul.f32 %v2970, 1.442695
        %v3032 = vpow.pop %v3031
        %v3033 = vmul.f32 %v2971, 1.442695
        %v3034 = vpow.pop %v3033
        %v3035 = vmul.f32 %v2972, 1.442695
        %v3036 = vpow.pop %v3035
        %3037 = vadd.xlane.f32.xlu0 %v2974
        %v3038 = vpop.xlane.xlu0 %3037
        %3039 = vadd.xlane.f32.xlu0 %v2976
        %v3040 = vpop.xlane.xlu0 %3039
        %3041 = vadd.xlane.f32.xlu0 %v2978
        %v3042 = vpop.xlane.xlu0 %3041
        %3043 = vadd.xlane.f32.xlu0 %v2980
        %v3044 = vpop.xlane.xlu0 %3043
        %3045 = vadd.xlane.f32.xlu0 %v2982
        %v3046 = vpop.xlane.xlu0 %3045
        %3047 = vadd.xlane.f32.xlu0 %v2984
        %v3048 = vpop.xlane.xlu0 %3047
        %3049 = vadd.xlane.f32.xlu0 %v2986
        %v3050 = vpop.xlane.xlu0 %3049
        %3051 = vadd.xlane.f32.xlu0 %v2988
        %v3052 = vpop.xlane.xlu0 %3051
        %3053 = vadd.xlane.f32.xlu0 %v2990
        %v3054 = vpop.xlane.xlu0 %3053
        %3055 = vadd.xlane.f32.xlu0 %v2992
        %v3056 = vpop.xlane.xlu0 %3055
        %3057 = vadd.xlane.f32.xlu0 %v2994
        %v3058 = vpop.xlane.xlu0 %3057
        %3059 = vadd.xlane.f32.xlu0 %v2996
        %v3060 = vpop.xlane.xlu0 %3059
        %3061 = vadd.xlane.f32.xlu0 %v2998
        %v3062 = vpop.xlane.xlu0 %3061
        %3063 = vadd.xlane.f32.xlu0 %v3000
        %v3064 = vpop.xlane.xlu0 %3063
        %3065 = vadd.xlane.f32.xlu0 %v3002
        %v3066 = vpop.xlane.xlu0 %3065
        %3067 = vadd.xlane.f32.xlu0 %v3004
        %v3068 = vpop.xlane.xlu0 %3067
        %3069 = vadd.xlane.f32.xlu0 %v3006
        %v3070 = vpop.xlane.xlu0 %3069
        %3071 = vadd.xlane.f32.xlu0 %v3008
        %v3072 = vpop.xlane.xlu0 %3071
        %3073 = vadd.xlane.f32.xlu0 %v3010
        %v3074 = vpop.xlane.xlu0 %3073
        %3075 = vadd.xlane.f32.xlu0 %v3012
        %v3076 = vpop.xlane.xlu0 %3075
        %3077 = vadd.xlane.f32.xlu0 %v3014
        %v3078 = vpop.xlane.xlu0 %3077
        %3079 = vadd.xlane.f32.xlu0 %v3016
        %v3080 = vpop.xlane.xlu0 %3079
        %3081 = vadd.xlane.f32.xlu0 %v3018
        %v3082 = vpop.xlane.xlu0 %3081
        %3083 = vadd.xlane.f32.xlu0 %v3020
        %v3084 = vpop.xlane.xlu0 %3083
        %3085 = vadd.xlane.f32.xlu0 %v3022
        %v3086 = vpop.xlane.xlu0 %3085
        %3087 = vadd.xlane.f32.xlu0 %v3024
        %v3088 = vpop.xlane.xlu0 %3087
        %3089 = vadd.xlane.f32.xlu0 %v3026
        %v3090 = vpop.xlane.xlu0 %3089
        %3091 = vadd.xlane.f32.xlu0 %v3028
        %v3092 = vpop.xlane.xlu0 %3091
        %3093 = vadd.xlane.f32.xlu0 %v3030
        %v3094 = vpop.xlane.xlu0 %3093
        %3095 = vadd.xlane.f32.xlu0 %v3032
        %v3096 = vpop.xlane.xlu0 %3095
        %3097 = vadd.xlane.f32.xlu0 %v3034
        %v3098 = vpop.xlane.xlu0 %3097
        %3099 = vadd.xlane.f32.xlu0 %v3036
        %v3100 = vpop.xlane.xlu0 %3099
        %v3101 = vrcp.pop %v3038
        %v3102 = vrcp.pop %v3040
        %v3103 = vrcp.pop %v3042
        %v3104 = vrcp.pop %v3044
        %v3105 = vrcp.pop %v3046
        %v3106 = vrcp.pop %v3048
        %v3107 = vrcp.pop %v3050
        %v3108 = vrcp.pop %v3052
        %v3109 = vrcp.pop %v3054
        %v3110 = vrcp.pop %v3056
        %v3111 = vrcp.pop %v3058
        %v3112 = vrcp.pop %v3060
        %v3113 = vrcp.pop %v3062
        %v3114 = vrcp.pop %v3064
        %v3115 = vrcp.pop %v3066
        %v3116 = vrcp.pop %v3068
        %v3117 = vrcp.pop %v3070
        %v3118 = vrcp.pop %v3072
        %v3119 = vrcp.pop %v3074
        %v3120 = vrcp.pop %v3076
        %v3121 = vrcp.pop %v3078
        %v3122 = vrcp.pop %v3080
        %v3123 = vrcp.pop %v3082
        %v3124 = vrcp.pop %v3084
        %v3125 = vrcp.pop %v3086
        %v3126 = vrcp.pop %v3088
        %v3127 = vrcp.pop %v3090
        %v3128 = vrcp.pop %v3092
        %v3129 = vrcp.pop %v3094
        %v3130 = vrcp.pop %v3096
        %v3131 = vrcp.pop %v3098
        %v3132 = vrcp.pop %v3100
        %v3133 = vmul.f32 %v2974, %v3101
        %v3134 = vmul.f32 %v2976, %v3102
        %v3135 = vmul.f32 %v2978, %v3103
        %v3136 = vmul.f32 %v2980, %v3104
        %v3137 = vmul.f32 %v2982, %v3105
        %v3138 = vmul.f32 %v2984, %v3106
        %v3139 = vmul.f32 %v2986, %v3107
        %v3140 = vmul.f32 %v2988, %v3108
        %v3141 = vmul.f32 %v2990, %v3109
        %v3142 = vmul.f32 %v2992, %v3110
        %v3143 = vmul.f32 %v2994, %v3111
        %v3144 = vmul.f32 %v2996, %v3112
        %v3145 = vmul.f32 %v2998, %v3113
        %v3146 = vmul.f32 %v3000, %v3114
        %v3147 = vmul.f32 %v3002, %v3115
        %v3148 = vmul.f32 %v3004, %v3116
        %v3149 = vmul.f32 %v3006, %v3117
        %v3150 = vmul.f32 %v3008, %v3118
        %v3151 = vmul.f32 %v3010, %v3119
        %v3152 = vmul.f32 %v3012, %v3120
        %v3153 = vmul.f32 %v3014, %v3121
        %v3154 = vmul.f32 %v3016, %v3122
        %v3155 = vmul.f32 %v3018, %v3123
        %v3156 = vmul.f32 %v3020, %v3124
        %v3157 = vmul.f32 %v3022, %v3125
        %v3158 = vmul.f32 %v3024, %v3126
        %v3159 = vmul.f32 %v3026, %v3127
        %v3160 = vmul.f32 %v3028, %v3128
        %v3161 = vmul.f32 %v3030, %v3129
        %v3162 = vmul.f32 %v3032, %v3130
        %v3163 = vmul.f32 %v3034, %v3131
        %v3164 = vmul.f32 %v3036, %v3132
        %v3165 = vpack.c.bf16 %v3134, %v3133
        %v3166 = vpack.c.bf16 %v3136, %v3135
        %v3167 = vpack.c.bf16 %v3138, %v3137
        %v3168 = vpack.c.bf16 %v3140, %v3139
        %v3169 = vpack.c.bf16 %v3142, %v3141
        %v3170 = vpack.c.bf16 %v3144, %v3143
        %v3171 = vpack.c.bf16 %v3146, %v3145
        %v3172 = vpack.c.bf16 %v3148, %v3147
        %v3173 = vpack.c.bf16 %v3150, %v3149
        %v3174 = vpack.c.bf16 %v3152, %v3151
        %v3175 = vpack.c.bf16 %v3154, %v3153
        %v3176 = vpack.c.bf16 %v3156, %v3155
        %v3177 = vpack.c.bf16 %v3158, %v3157
        %v3178 = vpack.c.bf16 %v3160, %v3159
        %v3179 = vpack.c.bf16 %v3162, %v3161
        %v3180 = vpack.c.bf16 %v3164, %v3163
        %v3181 = vpack.c.bf16 %v1948, %v1945
        %v3182 = vpack.c.bf16 %v1956, %v1953
        %v3183 = vpack.c.bf16 %v1964, %v1961
        %v3184 = vpack.c.bf16 %v1972, %v1969
        %v3185 = vpack.c.bf16 %v1980, %v1977
        %v3186 = vpack.c.bf16 %v1988, %v1985
        %v3187 = vpack.c.bf16 %v1996, %v1993
        %v3188 = vpack.c.bf16 %v2004, %v2001
        %v3189 = vpack.c.bf16 %v2141, %v2138
        %v3190 = vpack.c.bf16 %v2149, %v2146
        %v3191 = vpack.c.bf16 %v2157, %v2154
        %v3192 = vpack.c.bf16 %v2165, %v2162
        %v3193 = vpack.c.bf16 %v2173, %v2170
        %v3194 = vpack.c.bf16 %v2181, %v2178
        %v3195 = vpack.c.bf16 %v2189, %v2186
        %v3196 = vpack.c.bf16 %v2197, %v2194
        %3197 = vmatprep.subr.bf16.mxu0 0
        %3198 = vmatpush1.bf16.msra.mxu0 %v3188
        %3199 = vmatprep.subr.bf16.mxu0 0
        %3200 = vmatpush1.bf16.msra.mxu0 %v3187
        %3201 = vmatprep.subr.bf16.mxu0 0
        %3202 = vmatpush1.bf16.msra.mxu0 %v3186
        %3203 = vmatprep.subr.bf16.mxu0 0
        %3204 = vmatpush1.bf16.msra.mxu0 %v3185
        %3205 = vmatprep.subr.bf16.mxu0 0
        %3206 = vmatpush1.bf16.msra.mxu0 %v3184
        %3207 = vmatprep.subr.bf16.mxu0 0
        %3208 = vmatpush1.bf16.msra.mxu0 %v3183
        %3209 = vmatprep.subr.bf16.mxu0 0
        %3210 = vmatpush1.bf16.msra.mxu0 %v3182
        %3211 = vmatprep.subr.bf16.mxu0 0
        %3212 = vmatpush1.bf16.msra.mxu0 %v3181
        %3213 = vmatprep.subr.bf16.mxu0 0
        %3214 = vmatpush2.bf16.msra.mxu0 0
        %3215 = vmatprep.subr.bf16.mxu0 0
        %3216 = vmatpush2.bf16.msra.mxu0 0
        %3217 = vmatprep.subr.bf16.mxu0 0
        %3218 = vmatpush2.bf16.msra.mxu0 0
        %3219 = vmatprep.subr.bf16.mxu0 0
        %3220 = vmatpush2.bf16.msra.mxu0 0
        %3221 = vmatprep.subr.bf16.mxu0 0
        %3222 = vmatpush2.bf16.msra.mxu0 0
        %3223 = vmatprep.subr.bf16.mxu0 0
        %3224 = vmatpush2.bf16.msra.mxu0 0
        %3225 = vmatprep.subr.bf16.mxu0 0
        %3226 = vmatpush2.bf16.msra.mxu0 0
        %3227 = vmatprep.subr.bf16.mxu0 0
        %3228 = vmatpush2.bf16.msra.mxu0 0
        %3229 = vmatprep.mubr.bf16.mxu0 0
        %3230 = vmatmul.mubr.bf16.gmra.mxu0 %v3165
        %v3231 = vpop.f32.mrf.mxu0
        %v3232 = vadd.f32 0.0, %v3231
        %v3233 = vpop.f32.mrf.mxu0
        %v3234 = vpop.f32.mrf.mxu0
        %v3235 = vadd.f32 0.0, %v3234
        %v3236 = vpop.f32.mrf.mxu0
        %3237 = vmatprep.mubr.bf16.mxu0 0
        %3238 = vmatmul.mubr.bf16.gmra.mxu0 %v3166
        %v3239 = vpop.f32.mrf.mxu0
        %v3240 = vadd.f32 0.0, %v3239
        %v3241 = vpop.f32.mrf.mxu0
        %v3242 = vpop.f32.mrf.mxu0
        %v3243 = vadd.f32 0.0, %v3242
        %v3244 = vpop.f32.mrf.mxu0
        %3245 = vmatprep.mubr.bf16.mxu0 0
        %3246 = vmatmul.mubr.bf16.gmra.mxu0 %v3167
        %v3247 = vpop.f32.mrf.mxu0
        %v3248 = vadd.f32 0.0, %v3247
        %v3249 = vpop.f32.mrf.mxu0
        %v3250 = vpop.f32.mrf.mxu0
        %v3251 = vadd.f32 0.0, %v3250
        %v3252 = vpop.f32.mrf.mxu0
        %3253 = vmatprep.mubr.bf16.mxu0 0
        %3254 = vmatmul.mubr.bf16.gmra.mxu0 %v3168
        %v3255 = vpop.f32.mrf.mxu0
        %v3256 = vadd.f32 0.0, %v3255
        %v3257 = vpop.f32.mrf.mxu0
        %v3258 = vpop.f32.mrf.mxu0
        %v3259 = vadd.f32 0.0, %v3258
        %v3260 = vpop.f32.mrf.mxu0
        %3261 = vmatprep.mubr.bf16.mxu0 0
        %3262 = vmatmul.mubr.bf16.gmra.mxu0 %v3169
        %v3263 = vpop.f32.mrf.mxu0
        %v3264 = vadd.f32 0.0, %v3263
        %v3265 = vpop.f32.mrf.mxu0
        %v3266 = vpop.f32.mrf.mxu0
        %v3267 = vadd.f32 0.0, %v3266
        %v3268 = vpop.f32.mrf.mxu0
        %3269 = vmatprep.mubr.bf16.mxu0 0
        %3270 = vmatmul.mubr.bf16.gmra.mxu0 %v3170
        %v3271 = vpop.f32.mrf.mxu0
        %v3272 = vadd.f32 0.0, %v3271
        %v3273 = vpop.f32.mrf.mxu0
        %v3274 = vpop.f32.mrf.mxu0
        %v3275 = vadd.f32 0.0, %v3274
        %v3276 = vpop.f32.mrf.mxu0
        %3277 = vmatprep.mubr.bf16.mxu0 0
        %3278 = vmatmul.mubr.bf16.gmra.mxu0 %v3171
        %v3279 = vpop.f32.mrf.mxu0
        %v3280 = vadd.f32 0.0, %v3279
        %v3281 = vpop.f32.mrf.mxu0
        %v3282 = vpop.f32.mrf.mxu0
        %v3283 = vadd.f32 0.0, %v3282
        %v3284 = vpop.f32.mrf.mxu0
        %3285 = vmatprep.mubr.bf16.mxu0 0
        %3286 = vmatmul.mubr.bf16.gmra.mxu0 %v3172
        %v3287 = vpop.f32.mrf.mxu0
        %v3288 = vadd.f32 0.0, %v3287
        %v3289 = vpop.f32.mrf.mxu0
        %v3290 = vpop.f32.mrf.mxu0
        %v3291 = vadd.f32 0.0, %v3290
        %v3292 = vpop.f32.mrf.mxu0
        %3293 = vdwg.mxu0
        %3294 = vmatprep.subr.bf16.mxu0 0
        %3295 = vmatpush1.bf16.msra.mxu0 %v3196
        %3296 = vmatprep.subr.bf16.mxu0 0
        %3297 = vmatpush1.bf16.msra.mxu0 %v3195
        %3298 = vmatprep.subr.bf16.mxu0 0
        %3299 = vmatpush1.bf16.msra.mxu0 %v3194
        %3300 = vmatprep.subr.bf16.mxu0 0
        %3301 = vmatpush1.bf16.msra.mxu0 %v3193
        %3302 = vmatprep.subr.bf16.mxu0 0
        %3303 = vmatpush1.bf16.msra.mxu0 %v3192
        %3304 = vmatprep.subr.bf16.mxu0 0
        %3305 = vmatpush1.bf16.msra.mxu0 %v3191
        %3306 = vmatprep.subr.bf16.mxu0 0
        %3307 = vmatpush1.bf16.msra.mxu0 %v3190
        %3308 = vmatprep.subr.bf16.mxu0 0
        %3309 = vmatpush1.bf16.msra.mxu0 %v3189
        %3310 = vmatprep.subr.bf16.mxu0 0
        %3311 = vmatpush2.bf16.msra.mxu0 0
        %3312 = vmatprep.subr.bf16.mxu0 0
        %3313 = vmatpush2.bf16.msra.mxu0 0
        %3314 = vmatprep.subr.bf16.mxu0 0
        %3315 = vmatpush2.bf16.msra.mxu0 0
        %3316 = vmatprep.subr.bf16.mxu0 0
        %3317 = vmatpush2.bf16.msra.mxu0 0
        %3318 = vmatprep.subr.bf16.mxu0 0
        %3319 = vmatpush2.bf16.msra.mxu0 0
        %3320 = vmatprep.subr.bf16.mxu0 0
        %3321 = vmatpush2.bf16.msra.mxu0 0
        %3322 = vmatprep.subr.bf16.mxu0 0
        %3323 = vmatpush2.bf16.msra.mxu0 0
        %3324 = vmatprep.subr.bf16.mxu0 0
        %3325 = vmatpush2.bf16.msra.mxu0 0
        %3326 = vmatprep.mubr.bf16.mxu0 0
        %3327 = vmatmul.mubr.bf16.gmra.mxu0 %v3173
        %v3328 = vpop.f32.mrf.mxu0
        %v3329 = vadd.f32 0.0, %v3328
        %v3330 = vpop.f32.mrf.mxu0
        %v3331 = vpop.f32.mrf.mxu0
        %v3332 = vadd.f32 0.0, %v3331
        %v3333 = vpop.f32.mrf.mxu0
        %3334 = vmatprep.mubr.bf16.mxu0 0
        %3335 = vmatmul.mubr.bf16.gmra.mxu0 %v3174
        %v3336 = vpop.f32.mrf.mxu0
        %v3337 = vadd.f32 0.0, %v3336
        %v3338 = vpop.f32.mrf.mxu0
        %v3339 = vpop.f32.mrf.mxu0
        %v3340 = vadd.f32 0.0, %v3339
        %v3341 = vpop.f32.mrf.mxu0
        %3342 = vmatprep.mubr.bf16.mxu0 0
        %3343 = vmatmul.mubr.bf16.gmra.mxu0 %v3175
        %v3344 = vpop.f32.mrf.mxu0
        %v3345 = vadd.f32 0.0, %v3344
        %v3346 = vpop.f32.mrf.mxu0
        %v3347 = vpop.f32.mrf.mxu0
        %v3348 = vadd.f32 0.0, %v3347
        %v3349 = vpop.f32.mrf.mxu0
        %3350 = vmatprep.mubr.bf16.mxu0 0
        %3351 = vmatmul.mubr.bf16.gmra.mxu0 %v3176
        %v3352 = vpop.f32.mrf.mxu0
        %v3353 = vadd.f32 0.0, %v3352
        %v3354 = vpop.f32.mrf.mxu0
        %v3355 = vpop.f32.mrf.mxu0
        %v3356 = vadd.f32 0.0, %v3355
        %v3357 = vpop.f32.mrf.mxu0
        %3358 = vmatprep.mubr.bf16.mxu0 0
        %3359 = vmatmul.mubr.bf16.gmra.mxu0 %v3177
        %v3360 = vpop.f32.mrf.mxu0
        %v3361 = vadd.f32 0.0, %v3360
        %v3362 = vpop.f32.mrf.mxu0
        %v3363 = vpop.f32.mrf.mxu0
        %v3364 = vadd.f32 0.0, %v3363
        %v3365 = vpop.f32.mrf.mxu0
        %3366 = vmatprep.mubr.bf16.mxu0 0
        %3367 = vmatmul.mubr.bf16.gmra.mxu0 %v3178
        %v3368 = vpop.f32.mrf.mxu0
        %v3369 = vadd.f32 0.0, %v3368
        %v3370 = vpop.f32.mrf.mxu0
        %v3371 = vpop.f32.mrf.mxu0
        %v3372 = vadd.f32 0.0, %v3371
        %v3373 = vpop.f32.mrf.mxu0
        %3374 = vmatprep.mubr.bf16.mxu0 0
        %3375 = vmatmul.mubr.bf16.gmra.mxu0 %v3179
        %v3376 = vpop.f32.mrf.mxu0
        %v3377 = vadd.f32 0.0, %v3376
        %v3378 = vpop.f32.mrf.mxu0
        %v3379 = vpop.f32.mrf.mxu0
        %v3380 = vadd.f32 0.0, %v3379
        %v3381 = vpop.f32.mrf.mxu0
        %3382 = vmatprep.mubr.bf16.mxu0 0
        %3383 = vmatmul.mubr.bf16.gmra.mxu0 %v3180
        %v3384 = vpop.f32.mrf.mxu0
        %v3385 = vadd.f32 0.0, %v3384
        %v3386 = vpop.f32.mrf.mxu0
        %v3387 = vpop.f32.mrf.mxu0
        %v3388 = vadd.f32 0.0, %v3387
        %v3389 = vpop.f32.mrf.mxu0
        %3390 = vdwg.mxu0
        %v3391 = vpack.c.bf16 %v3235, %v3232
        %v3392 = vpack.c.bf16 %v3243, %v3240
        %v3393 = vpack.c.bf16 %v3251, %v3248
        %v3394 = vpack.c.bf16 %v3259, %v3256
        %v3395 = vpack.c.bf16 %v3267, %v3264
        %v3396 = vpack.c.bf16 %v3275, %v3272
        %v3397 = vpack.c.bf16 %v3283, %v3280
        %v3398 = vpack.c.bf16 %v3291, %v3288
        %v3399 = vpack.c.bf16 %v3332, %v3329
        %v3400 = vpack.c.bf16 %v3340, %v3337
        %v3401 = vpack.c.bf16 %v3348, %v3345
        %v3402 = vpack.c.bf16 %v3356, %v3353
        %v3403 = vpack.c.bf16 %v3364, %v3361
        %v3404 = vpack.c.bf16 %v3372, %v3369
        %v3405 = vpack.c.bf16 %v3380, %v3377
        %v3406 = vpack.c.bf16 %v3388, %v3385
        %v3407 = vld [vmem:[#allocation13] sm:$0xff]
        %v3408 = vld [vmem:[#allocation13 + $0x8] sm:$0xff]
        %v3409 = vld [vmem:[#allocation13 + $0x10] sm:$0xff]
        %v3410 = vld [vmem:[#allocation13 + $0x18] sm:$0xff]
        %v3411 = vld [vmem:[#allocation13 + $0x20] sm:$0xff]
        %v3412 = vld [vmem:[#allocation13 + $0x28] sm:$0xff]
        %v3413 = vld [vmem:[#allocation13 + $0x30] sm:$0xff]
        %v3414 = vld [vmem:[#allocation13 + $0x38] sm:$0xff]
        %v3415 = vld [vmem:[#allocation13 + $0x40] sm:$0xff]
        %v3416 = vld [vmem:[#allocation13 + $0x48] sm:$0xff]
        %v3417 = vld [vmem:[#allocation13 + $0x50] sm:$0xff]
        %v3418 = vld [vmem:[#allocation13 + $0x58] sm:$0xff]
        %v3419 = vld [vmem:[#allocation13 + $0x60] sm:$0xff]
        %v3420 = vld [vmem:[#allocation13 + $0x68] sm:$0xff]
        %v3421 = vld [vmem:[#allocation13 + $0x70] sm:$0xff]
        %v3422 = vld [vmem:[#allocation13 + $0x78] sm:$0xff]
        %v3423 = vld [vmem:[#allocation13 + $0x80] sm:$0xff]
        %v3424 = vld [vmem:[#allocation13 + $0x88] sm:$0xff]
        %v3425 = vld [vmem:[#allocation13 + $0x90] sm:$0xff]
        %v3426 = vld [vmem:[#allocation13 + $0x98] sm:$0xff]
        %v3427 = vld [vmem:[#allocation13 + $0xa0] sm:$0xff]
        %v3428 = vld [vmem:[#allocation13 + $0xa8] sm:$0xff]
        %v3429 = vld [vmem:[#allocation13 + $0xb0] sm:$0xff]
        %v3430 = vld [vmem:[#allocation13 + $0xb8] sm:$0xff]
        %v3431 = vld [vmem:[#allocation13 + $0xc0] sm:$0xff]
        %v3432 = vld [vmem:[#allocation13 + $0xc8] sm:$0xff]
        %v3433 = vld [vmem:[#allocation13 + $0xd0] sm:$0xff]
        %v3434 = vld [vmem:[#allocation13 + $0xd8] sm:$0xff]
        %v3435 = vld [vmem:[#allocation13 + $0xe0] sm:$0xff]
        %v3436 = vld [vmem:[#allocation13 + $0xe8] sm:$0xff]
        %v3437 = vld [vmem:[#allocation13 + $0xf0] sm:$0xff]
        %v3438 = vld [vmem:[#allocation13 + $0xf8] sm:$0xff]
        %v3455 = vunpack.c.l.b16 %v3407
        %v3456 = vunpack.c.h.b16 %v3407
        %v3457 = vunpack.c.l.b16 %v3408
        %v3458 = vunpack.c.h.b16 %v3408
        %v3459 = vunpack.c.l.b16 %v3409
        %v3460 = vunpack.c.h.b16 %v3409
        %v3461 = vunpack.c.l.b16 %v3410
        %v3462 = vunpack.c.h.b16 %v3410
        %v3463 = vunpack.c.l.b16 %v3411
        %v3464 = vunpack.c.h.b16 %v3411
        %v3465 = vunpack.c.l.b16 %v3412
        %v3466 = vunpack.c.h.b16 %v3412
        %v3467 = vunpack.c.l.b16 %v3413
        %v3468 = vunpack.c.h.b16 %v3413
        %v3469 = vunpack.c.l.b16 %v3414
        %v3470 = vunpack.c.h.b16 %v3414
        %v3471 = vunpack.c.l.b16 %v3415
        %v3472 = vunpack.c.h.b16 %v3415
        %v3473 = vunpack.c.l.b16 %v3416
        %v3474 = vunpack.c.h.b16 %v3416
        %v3475 = vunpack.c.l.b16 %v3417
        %v3476 = vunpack.c.h.b16 %v3417
        %v3477 = vunpack.c.l.b16 %v3418
        %v3478 = vunpack.c.h.b16 %v3418
        %v3479 = vunpack.c.l.b16 %v3419
        %v3480 = vunpack.c.h.b16 %v3419
        %v3481 = vunpack.c.l.b16 %v3420
        %v3482 = vunpack.c.h.b16 %v3420
        %v3483 = vunpack.c.l.b16 %v3421
        %v3484 = vunpack.c.h.b16 %v3421
        %v3485 = vunpack.c.l.b16 %v3422
        %v3486 = vunpack.c.h.b16 %v3422
        %v3487 = vpack.c.b16 %v3457, %v3455
        %v3488 = vpack.c.b16 %v3458, %v3456
        %v3489 = vpack.c.b16 %v3461, %v3459
        %v3490 = vpack.c.b16 %v3462, %v3460
        %v3491 = vpack.c.b16 %v3465, %v3463
        %v3492 = vpack.c.b16 %v3466, %v3464
        %v3493 = vpack.c.b16 %v3469, %v3467
        %v3494 = vpack.c.b16 %v3470, %v3468
        %v3495 = vpack.c.b16 %v3473, %v3471
        %v3496 = vpack.c.b16 %v3474, %v3472
        %v3497 = vpack.c.b16 %v3477, %v3475
        %v3498 = vpack.c.b16 %v3478, %v3476
        %v3499 = vpack.c.b16 %v3481, %v3479
        %v3500 = vpack.c.b16 %v3482, %v3480
        %v3501 = vpack.c.b16 %v3485, %v3483
        %v3502 = vpack.c.b16 %v3486, %v3484
        %3519 = vmatprep.subr.bf16.mxu0 %v3502
        %3520 = vmatpush1.bf16.msra.mxu0 %v3501
        %3521 = vmatprep.subr.bf16.mxu0 %v3500
        %3522 = vmatpush1.bf16.msra.mxu0 %v3499
        %3523 = vmatprep.subr.bf16.mxu0 %v3498
        %3524 = vmatpush1.bf16.msra.mxu0 %v3497
        %3525 = vmatprep.subr.bf16.mxu0 %v3496
        %3526 = vmatpush1.bf16.msra.mxu0 %v3495
        %3527 = vmatprep.subr.bf16.mxu0 %v3494
        %3528 = vmatpush1.bf16.msra.mxu0 %v3493
        %3529 = vmatprep.subr.bf16.mxu0 %v3492
        %3530 = vmatpush1.bf16.msra.mxu0 %v3491
        %3531 = vmatprep.subr.bf16.mxu0 %v3490
        %3532 = vmatpush1.bf16.msra.mxu0 %v3489
        %3533 = vmatprep.subr.bf16.mxu0 %v3488
        %3534 = vmatpush1.bf16.msra.mxu0 %v3487
        %3535 = vmatprep.subr.bf16.mxu0 0
        %3536 = vmatpush2.bf16.msra.mxu0 0
        %3537 = vmatprep.subr.bf16.mxu0 0
        %3538 = vmatpush2.bf16.msra.mxu0 0
        %3539 = vmatprep.subr.bf16.mxu0 0
        %3540 = vmatpush2.bf16.msra.mxu0 0
        %3541 = vmatprep.subr.bf16.mxu0 0
        %3542 = vmatpush2.bf16.msra.mxu0 0
        %3543 = vmatprep.subr.bf16.mxu0 0
        %3544 = vmatpush2.bf16.msra.mxu0 0
        %3545 = vmatprep.subr.bf16.mxu0 0
        %3546 = vmatpush2.bf16.msra.mxu0 0
        %3547 = vmatprep.subr.bf16.mxu0 0
        %3548 = vmatpush2.bf16.msra.mxu0 0
        %3549 = vmatprep.subr.bf16.mxu0 0
        %3550 = vmatpush2.bf16.msra.mxu0 0
        %3551 = vmatprep.mubr.bf16.mxu0 0
        %3552 = vmatmul.mubr.bf16.gmra.mxu0 %v3391
        %v3553 = vpop.f32.mrf.mxu0
        %v3554 = vadd.f32 0.0, %v3553
        %v3555 = vpop.f32.mrf.mxu0
        %v3556 = vadd.f32 0.0, %v3555
        %v3557 = vpop.f32.mrf.mxu0
        %v3558 = vadd.f32 0.0, %v3557
        %v3559 = vpop.f32.mrf.mxu0
        %v3560 = vadd.f32 0.0, %v3559
        %3561 = vmatprep.mubr.bf16.mxu0 0
        %3562 = vmatmul.mubr.bf16.gmra.mxu0 %v3392
        %v3563 = vpop.f32.mrf.mxu0
        %v3564 = vadd.f32 0.0, %v3563
        %v3565 = vpop.f32.mrf.mxu0
        %v3566 = vadd.f32 0.0, %v3565
        %v3567 = vpop.f32.mrf.mxu0
        %v3568 = vadd.f32 0.0, %v3567
        %v3569 = vpop.f32.mrf.mxu0
        %v3570 = vadd.f32 0.0, %v3569
        %3571 = vmatprep.mubr.bf16.mxu0 0
        %3572 = vmatmul.mubr.bf16.gmra.mxu0 %v3393
        %v3573 = vpop.f32.mrf.mxu0
        %v3574 = vadd.f32 0.0, %v3573
        %v3575 = vpop.f32.mrf.mxu0
        %v3576 = vadd.f32 0.0, %v3575
        %v3577 = vpop.f32.mrf.mxu0
        %v3578 = vadd.f32 0.0, %v3577
        %v3579 = vpop.f32.mrf.mxu0
        %v3580 = vadd.f32 0.0, %v3579
        %3581 = vmatprep.mubr.bf16.mxu0 0
        %3582 = vmatmul.mubr.bf16.gmra.mxu0 %v3394
        %v3583 = vpop.f32.mrf.mxu0
        %v3584 = vadd.f32 0.0, %v3583
        %v3585 = vpop.f32.mrf.mxu0
        %v3586 = vadd.f32 0.0, %v3585
        %v3587 = vpop.f32.mrf.mxu0
        %v3588 = vadd.f32 0.0, %v3587
        %v3589 = vpop.f32.mrf.mxu0
        %v3590 = vadd.f32 0.0, %v3589
        %3591 = vmatprep.mubr.bf16.mxu0 0
        %3592 = vmatmul.mubr.bf16.gmra.mxu0 %v3395
        %v3593 = vpop.f32.mrf.mxu0
        %v3594 = vadd.f32 0.0, %v3593
        %v3595 = vpop.f32.mrf.mxu0
        %v3596 = vadd.f32 0.0, %v3595
        %v3597 = vpop.f32.mrf.mxu0
        %v3598 = vadd.f32 0.0, %v3597
        %v3599 = vpop.f32.mrf.mxu0
        %v3600 = vadd.f32 0.0, %v3599
        %3601 = vmatprep.mubr.bf16.mxu0 0
        %3602 = vmatmul.mubr.bf16.gmra.mxu0 %v3396
        %v3603 = vpop.f32.mrf.mxu0
        %v3604 = vadd.f32 0.0, %v3603
        %v3605 = vpop.f32.mrf.mxu0
        %v3606 = vadd.f32 0.0, %v3605
        %v3607 = vpop.f32.mrf.mxu0
        %v3608 = vadd.f32 0.0, %v3607
        %v3609 = vpop.f32.mrf.mxu0
        %v3610 = vadd.f32 0.0, %v3609
        %3611 = vmatprep.mubr.bf16.mxu0 0
        %3612 = vmatmul.mubr.bf16.gmra.mxu0 %v3397
        %v3613 = vpop.f32.mrf.mxu0
        %v3614 = vadd.f32 0.0, %v3613
        %v3615 = vpop.f32.mrf.mxu0
        %v3616 = vadd.f32 0.0, %v3615
        %v3617 = vpop.f32.mrf.mxu0
        %v3618 = vadd.f32 0.0, %v3617
        %v3619 = vpop.f32.mrf.mxu0
        %v3620 = vadd.f32 0.0, %v3619
        %3621 = vmatprep.mubr.bf16.mxu0 0
        %3622 = vmatmul.mubr.bf16.gmra.mxu0 %v3398
        %v3623 = vpop.f32.mrf.mxu0
        %v3624 = vadd.f32 0.0, %v3623
        %v3625 = vpop.f32.mrf.mxu0
        %v3626 = vadd.f32 0.0, %v3625
        %v3627 = vpop.f32.mrf.mxu0
        %v3628 = vadd.f32 0.0, %v3627
        %v3629 = vpop.f32.mrf.mxu0
        %v3630 = vadd.f32 0.0, %v3629
        %3631 = vdwg.mxu0
        %v3648 = vunpack.c.l.b16 %v3423
        %v3649 = vunpack.c.h.b16 %v3423
        %v3650 = vunpack.c.l.b16 %v3424
        %v3651 = vunpack.c.h.b16 %v3424
        %v3652 = vunpack.c.l.b16 %v3425
        %v3653 = vunpack.c.h.b16 %v3425
        %v3654 = vunpack.c.l.b16 %v3426
        %v3655 = vunpack.c.h.b16 %v3426
        %v3656 = vunpack.c.l.b16 %v3427
        %v3657 = vunpack.c.h.b16 %v3427
        %v3658 = vunpack.c.l.b16 %v3428
        %v3659 = vunpack.c.h.b16 %v3428
        %v3660 = vunpack.c.l.b16 %v3429
        %v3661 = vunpack.c.h.b16 %v3429
        %v3662 = vunpack.c.l.b16 %v3430
        %v3663 = vunpack.c.h.b16 %v3430
        %v3664 = vunpack.c.l.b16 %v3431
        %v3665 = vunpack.c.h.b16 %v3431
        %v3666 = vunpack.c.l.b16 %v3432
        %v3667 = vunpack.c.h.b16 %v3432
        %v3668 = vunpack.c.l.b16 %v3433
        %v3669 = vunpack.c.h.b16 %v3433
        %v3670 = vunpack.c.l.b16 %v3434
        %v3671 = vunpack.c.h.b16 %v3434
        %v3672 = vunpack.c.l.b16 %v3435
        %v3673 = vunpack.c.h.b16 %v3435
        %v3674 = vunpack.c.l.b16 %v3436
        %v3675 = vunpack.c.h.b16 %v3436
        %v3676 = vunpack.c.l.b16 %v3437
        %v3677 = vunpack.c.h.b16 %v3437
        %v3678 = vunpack.c.l.b16 %v3438
        %v3679 = vunpack.c.h.b16 %v3438
        %v3680 = vpack.c.b16 %v3650, %v3648
        %v3681 = vpack.c.b16 %v3651, %v3649
        %v3682 = vpack.c.b16 %v3654, %v3652
        %v3683 = vpack.c.b16 %v3655, %v3653
        %v3684 = vpack.c.b16 %v3658, %v3656
        %v3685 = vpack.c.b16 %v3659, %v3657
        %v3686 = vpack.c.b16 %v3662, %v3660
        %v3687 = vpack.c.b16 %v3663, %v3661
        %v3688 = vpack.c.b16 %v3666, %v3664
        %v3689 = vpack.c.b16 %v3667, %v3665
        %v3690 = vpack.c.b16 %v3670, %v3668
        %v3691 = vpack.c.b16 %v3671, %v3669
        %v3692 = vpack.c.b16 %v3674, %v3672
        %v3693 = vpack.c.b16 %v3675, %v3673
        %v3694 = vpack.c.b16 %v3678, %v3676
        %v3695 = vpack.c.b16 %v3679, %v3677
        %3712 = vmatprep.subr.bf16.mxu0 %v3695
        %3713 = vmatpush1.bf16.msra.mxu0 %v3694
        %3714 = vmatprep.subr.bf16.mxu0 %v3693
        %3715 = vmatpush1.bf16.msra.mxu0 %v3692
        %3716 = vmatprep.subr.bf16.mxu0 %v3691
        %3717 = vmatpush1.bf16.msra.mxu0 %v3690
        %3718 = vmatprep.subr.bf16.mxu0 %v3689
        %3719 = vmatpush1.bf16.msra.mxu0 %v3688
        %3720 = vmatprep.subr.bf16.mxu0 %v3687
        %3721 = vmatpush1.bf16.msra.mxu0 %v3686
        %3722 = vmatprep.subr.bf16.mxu0 %v3685
        %3723 = vmatpush1.bf16.msra.mxu0 %v3684
        %3724 = vmatprep.subr.bf16.mxu0 %v3683
        %3725 = vmatpush1.bf16.msra.mxu0 %v3682
        %3726 = vmatprep.subr.bf16.mxu0 %v3681
        %3727 = vmatpush1.bf16.msra.mxu0 %v3680
        %3728 = vmatprep.subr.bf16.mxu0 0
        %3729 = vmatpush2.bf16.msra.mxu0 0
        %3730 = vmatprep.subr.bf16.mxu0 0
        %3731 = vmatpush2.bf16.msra.mxu0 0
        %3732 = vmatprep.subr.bf16.mxu0 0
        %3733 = vmatpush2.bf16.msra.mxu0 0
        %3734 = vmatprep.subr.bf16.mxu0 0
        %3735 = vmatpush2.bf16.msra.mxu0 0
        %3736 = vmatprep.subr.bf16.mxu0 0
        %3737 = vmatpush2.bf16.msra.mxu0 0
        %3738 = vmatprep.subr.bf16.mxu0 0
        %3739 = vmatpush2.bf16.msra.mxu0 0
        %3740 = vmatprep.subr.bf16.mxu0 0
        %3741 = vmatpush2.bf16.msra.mxu0 0
        %3742 = vmatprep.subr.bf16.mxu0 0
        %3743 = vmatpush2.bf16.msra.mxu0 0
        %3744 = vmatprep.mubr.bf16.mxu0 0
        %3745 = vmatmul.mubr.bf16.gmra.mxu0 %v3399
        %v3746 = vpop.f32.mrf.mxu0
        %v3747 = vadd.f32 0.0, %v3746
        %v3748 = vpop.f32.mrf.mxu0
        %v3749 = vadd.f32 0.0, %v3748
        %v3750 = vpop.f32.mrf.mxu0
        %v3751 = vadd.f32 0.0, %v3750
        %v3752 = vpop.f32.mrf.mxu0
        %v3753 = vadd.f32 0.0, %v3752
        %3754 = vmatprep.mubr.bf16.mxu0 0
        %3755 = vmatmul.mubr.bf16.gmra.mxu0 %v3400
        %v3756 = vpop.f32.mrf.mxu0
        %v3757 = vadd.f32 0.0, %v3756
        %v3758 = vpop.f32.mrf.mxu0
        %v3759 = vadd.f32 0.0, %v3758
        %v3760 = vpop.f32.mrf.mxu0
        %v3761 = vadd.f32 0.0, %v3760
        %v3762 = vpop.f32.mrf.mxu0
        %v3763 = vadd.f32 0.0, %v3762
        %3764 = vmatprep.mubr.bf16.mxu0 0
        %3765 = vmatmul.mubr.bf16.gmra.mxu0 %v3401
        %v3766 = vpop.f32.mrf.mxu0
        %v3767 = vadd.f32 0.0, %v3766
        %v3768 = vpop.f32.mrf.mxu0
        %v3769 = vadd.f32 0.0, %v3768
        %v3770 = vpop.f32.mrf.mxu0
        %v3771 = vadd.f32 0.0, %v3770
        %v3772 = vpop.f32.mrf.mxu0
        %v3773 = vadd.f32 0.0, %v3772
        %3774 = vmatprep.mubr.bf16.mxu0 0
        %3775 = vmatmul.mubr.bf16.gmra.mxu0 %v3402
        %v3776 = vpop.f32.mrf.mxu0
        %v3777 = vadd.f32 0.0, %v3776
        %v3778 = vpop.f32.mrf.mxu0
        %v3779 = vadd.f32 0.0, %v3778
        %v3780 = vpop.f32.mrf.mxu0
        %v3781 = vadd.f32 0.0, %v3780
        %v3782 = vpop.f32.mrf.mxu0
        %v3783 = vadd.f32 0.0, %v3782
        %3784 = vmatprep.mubr.bf16.mxu0 0
        %3785 = vmatmul.mubr.bf16.gmra.mxu0 %v3403
        %v3786 = vpop.f32.mrf.mxu0
        %v3787 = vadd.f32 0.0, %v3786
        %v3788 = vpop.f32.mrf.mxu0
        %v3789 = vadd.f32 0.0, %v3788
        %v3790 = vpop.f32.mrf.mxu0
        %v3791 = vadd.f32 0.0, %v3790
        %v3792 = vpop.f32.mrf.mxu0
        %v3793 = vadd.f32 0.0, %v3792
        %3794 = vmatprep.mubr.bf16.mxu0 0
        %3795 = vmatmul.mubr.bf16.gmra.mxu0 %v3404
        %v3796 = vpop.f32.mrf.mxu0
        %v3797 = vadd.f32 0.0, %v3796
        %v3798 = vpop.f32.mrf.mxu0
        %v3799 = vadd.f32 0.0, %v3798
        %v3800 = vpop.f32.mrf.mxu0
        %v3801 = vadd.f32 0.0, %v3800
        %v3802 = vpop.f32.mrf.mxu0
        %v3803 = vadd.f32 0.0, %v3802
        %3804 = vmatprep.mubr.bf16.mxu0 0
        %3805 = vmatmul.mubr.bf16.gmra.mxu0 %v3405
        %v3806 = vpop.f32.mrf.mxu0
        %v3807 = vadd.f32 0.0, %v3806
        %v3808 = vpop.f32.mrf.mxu0
        %v3809 = vadd.f32 0.0, %v3808
        %v3810 = vpop.f32.mrf.mxu0
        %v3811 = vadd.f32 0.0, %v3810
        %v3812 = vpop.f32.mrf.mxu0
        %v3813 = vadd.f32 0.0, %v3812
        %3814 = vmatprep.mubr.bf16.mxu0 0
        %3815 = vmatmul.mubr.bf16.gmra.mxu0 %v3406
        %v3816 = vpop.f32.mrf.mxu0
        %v3817 = vadd.f32 0.0, %v3816
        %v3818 = vpop.f32.mrf.mxu0
        %v3819 = vadd.f32 0.0, %v3818
        %v3820 = vpop.f32.mrf.mxu0
        %v3821 = vadd.f32 0.0, %v3820
        %v3822 = vpop.f32.mrf.mxu0
        %v3823 = vadd.f32 0.0, %v3822
        %3824 = vdwg.mxu0
        %v3825 = vadd.f32 %v3554, %v3747
        %v3826 = vadd.f32 %v3556, %v3749
        %v3827 = vadd.f32 %v3558, %v3751
        %v3828 = vadd.f32 %v3560, %v3753
        %v3829 = vadd.f32 %v3564, %v3757
        %v3830 = vadd.f32 %v3566, %v3759
        %v3831 = vadd.f32 %v3568, %v3761
        %v3832 = vadd.f32 %v3570, %v3763
        %v3833 = vadd.f32 %v3574, %v3767
        %v3834 = vadd.f32 %v3576, %v3769
        %v3835 = vadd.f32 %v3578, %v3771
        %v3836 = vadd.f32 %v3580, %v3773
        %v3837 = vadd.f32 %v3584, %v3777
        %v3838 = vadd.f32 %v3586, %v3779
        %v3839 = vadd.f32 %v3588, %v3781
        %v3840 = vadd.f32 %v3590, %v3783
        %v3841 = vadd.f32 %v3594, %v3787
        %v3842 = vadd.f32 %v3596, %v3789
        %v3843 = vadd.f32 %v3598, %v3791
        %v3844 = vadd.f32 %v3600, %v3793
        %v3845 = vadd.f32 %v3604, %v3797
        %v3846 = vadd.f32 %v3606, %v3799
        %v3847 = vadd.f32 %v3608, %v3801
        %v3848 = vadd.f32 %v3610, %v3803
        %v3849 = vadd.f32 %v3614, %v3807
        %v3850 = vadd.f32 %v3616, %v3809
        %v3851 = vadd.f32 %v3618, %v3811
        %v3852 = vadd.f32 %v3620, %v3813
        %v3853 = vadd.f32 %v3624, %v3817
        %v3854 = vadd.f32 %v3626, %v3819
        %v3855 = vadd.f32 %v3628, %v3821
        %v3856 = vadd.f32 %v3630, %v3823
        %v3857 = vadd.f32 %v564, %v3825
        %v3858 = vadd.f32 %v565, %v3826
        %v3859 = vadd.f32 %v566, %v3827
        %v3860 = vadd.f32 %v567, %v3828
        %v3861 = vadd.f32 %v568, %v3829
        %v3862 = vadd.f32 %v569, %v3830
        %v3863 = vadd.f32 %v570, %v3831
        %v3864 = vadd.f32 %v571, %v3832
        %v3865 = vadd.f32 %v572, %v3833
        %v3866 = vadd.f32 %v573, %v3834
        %v3867 = vadd.f32 %v574, %v3835
        %v3868 = vadd.f32 %v575, %v3836
        %v3869 = vadd.f32 %v576, %v3837
        %v3870 = vadd.f32 %v577, %v3838
        %v3871 = vadd.f32 %v578, %v3839
        %v3872 = vadd.f32 %v579, %v3840
        %v3873 = vadd.f32 %v580, %v3841
        %v3874 = vadd.f32 %v581, %v3842
        %v3875 = vadd.f32 %v582, %v3843
        %v3876 = vadd.f32 %v583, %v3844
        %v3877 = vadd.f32 %v584, %v3845
        %v3878 = vadd.f32 %v585, %v3846
        %v3879 = vadd.f32 %v586, %v3847
        %v3880 = vadd.f32 %v587, %v3848
        %v3881 = vadd.f32 %v588, %v3849
        %v3882 = vadd.f32 %v589, %v3850
        %v3883 = vadd.f32 %v590, %v3851
        %v3884 = vadd.f32 %v591, %v3852
        %v3885 = vadd.f32 %v592, %v3853
        %v3886 = vadd.f32 %v593, %v3854
        %v3887 = vadd.f32 %v594, %v3855
        %v3888 = vadd.f32 %v595, %v3856
        %v3889 = vmul.f32 %v3857, %v3857
        %v3890 = vmul.f32 %v3858, %v3858
        %v3891 = vmul.f32 %v3859, %v3859
        %v3892 = vmul.f32 %v3860, %v3860
        %v3893 = vmul.f32 %v3861, %v3861
        %v3894 = vmul.f32 %v3862, %v3862
        %v3895 = vmul.f32 %v3863, %v3863
        %v3896 = vmul.f32 %v3864, %v3864
        %v3897 = vmul.f32 %v3865, %v3865
        %v3898 = vmul.f32 %v3866, %v3866
        %v3899 = vmul.f32 %v3867, %v3867
        %v3900 = vmul.f32 %v3868, %v3868
        %v3901 = vmul.f32 %v3869, %v3869
        %v3902 = vmul.f32 %v3870, %v3870
        %v3903 = vmul.f32 %v3871, %v3871
        %v3904 = vmul.f32 %v3872, %v3872
        %v3905 = vmul.f32 %v3873, %v3873
        %v3906 = vmul.f32 %v3874, %v3874
        %v3907 = vmul.f32 %v3875, %v3875
        %v3908 = vmul.f32 %v3876, %v3876
        %v3909 = vmul.f32 %v3877, %v3877
        %v3910 = vmul.f32 %v3878, %v3878
        %v3911 = vmul.f32 %v3879, %v3879
        %v3912 = vmul.f32 %v3880, %v3880
        %v3913 = vmul.f32 %v3881, %v3881
        %v3914 = vmul.f32 %v3882, %v3882
        %v3915 = vmul.f32 %v3883, %v3883
        %v3916 = vmul.f32 %v3884, %v3884
        %v3917 = vmul.f32 %v3885, %v3885
        %v3918 = vmul.f32 %v3886, %v3886
        %v3919 = vmul.f32 %v3887, %v3887
        %v3920 = vmul.f32 %v3888, %v3888
        %v3921 = vadd.f32 %v3889, %v3890
        %3922 = vadd.xlane.f32.xlu0 %v3921
        %v3923 = vpop.xlane.xlu0 %3922
        %v3924 = vadd.f32 %v3891, %v3892
        %3925 = vadd.xlane.f32.xlu0 %v3924
        %v3926 = vpop.xlane.xlu0 %3925
        %v3927 = vadd.f32 %v3893, %v3894
        %3928 = vadd.xlane.f32.xlu0 %v3927
        %v3929 = vpop.xlane.xlu0 %3928
        %v3930 = vadd.f32 %v3895, %v3896
        %3931 = vadd.xlane.f32.xlu0 %v3930
        %v3932 = vpop.xlane.xlu0 %3931
        %v3933 = vadd.f32 %v3897, %v3898
        %3934 = vadd.xlane.f32.xlu0 %v3933
        %v3935 = vpop.xlane.xlu0 %3934
        %v3936 = vadd.f32 %v3899, %v3900
        %3937 = vadd.xlane.f32.xlu0 %v3936
        %v3938 = vpop.xlane.xlu0 %3937
        %v3939 = vadd.f32 %v3901, %v3902
        %3940 = vadd.xlane.f32.xlu0 %v3939
        %v3941 = vpop.xlane.xlu0 %3940
        %v3942 = vadd.f32 %v3903, %v3904
        %3943 = vadd.xlane.f32.xlu0 %v3942
        %v3944 = vpop.xlane.xlu0 %3943
        %v3945 = vadd.f32 %v3905, %v3906
        %3946 = vadd.xlane.f32.xlu0 %v3945
        %v3947 = vpop.xlane.xlu0 %3946
        %v3948 = vadd.f32 %v3907, %v3908
        %3949 = vadd.xlane.f32.xlu0 %v3948
        %v3950 = vpop.xlane.xlu0 %3949
        %v3951 = vadd.f32 %v3909, %v3910
        %3952 = vadd.xlane.f32.xlu0 %v3951
        %v3953 = vpop.xlane.xlu0 %3952
        %v3954 = vadd.f32 %v3911, %v3912
        %3955 = vadd.xlane.f32.xlu0 %v3954
        %v3956 = vpop.xlane.xlu0 %3955
        %v3957 = vadd.f32 %v3913, %v3914
        %3958 = vadd.xlane.f32.xlu0 %v3957
        %v3959 = vpop.xlane.xlu0 %3958
        %v3960 = vadd.f32 %v3915, %v3916
        %3961 = vadd.xlane.f32.xlu0 %v3960
        %v3962 = vpop.xlane.xlu0 %3961
        %v3963 = vadd.f32 %v3917, %v3918
        %3964 = vadd.xlane.f32.xlu0 %v3963
        %v3965 = vpop.xlane.xlu0 %3964
        %v3966 = vadd.f32 %v3919, %v3920
        %3967 = vadd.xlane.f32.xlu0 %v3966
        %v3968 = vpop.xlane.xlu0 %3967
        %v3969 = vmul.f32 %v3923, %v710
        %v3970 = vmul.f32 %v3926, %v710
        %v3971 = vmul.f32 %v3929, %v710
        %v3972 = vmul.f32 %v3932, %v710
        %v3973 = vmul.f32 %v3935, %v710
        %v3974 = vmul.f32 %v3938, %v710
        %v3975 = vmul.f32 %v3941, %v710
        %v3976 = vmul.f32 %v3944, %v710
        %v3977 = vmul.f32 %v3947, %v710
        %v3978 = vmul.f32 %v3950, %v710
        %v3979 = vmul.f32 %v3953, %v710
        %v3980 = vmul.f32 %v3956, %v710
        %v3981 = vmul.f32 %v3959, %v710
        %v3982 = vmul.f32 %v3962, %v710
        %v3983 = vmul.f32 %v3965, %v710
        %v3984 = vmul.f32 %v3968, %v710
        %v3985 = vadd.f32 %v3969, 1e-06
        %v3986 = vadd.f32 %v3970, 1e-06
        %v3987 = vadd.f32 %v3971, 1e-06
        %v3988 = vadd.f32 %v3972, 1e-06
        %v3989 = vadd.f32 %v3973, 1e-06
        %v3990 = vadd.f32 %v3974, 1e-06
        %v3991 = vadd.f32 %v3975, 1e-06
        %v3992 = vadd.f32 %v3976, 1e-06
        %v3993 = vadd.f32 %v3977, 1e-06
        %v3994 = vadd.f32 %v3978, 1e-06
        %v3995 = vadd.f32 %v3979, 1e-06
        %v3996 = vadd.f32 %v3980, 1e-06
        %v3997 = vadd.f32 %v3981, 1e-06
        %v3998 = vadd.f32 %v3982, 1e-06
        %v3999 = vadd.f32 %v3983, 1e-06
        %v4000 = vadd.f32 %v3984, 1e-06
        %v4001 = vrsqrt.pop %v3985
        %v4002 = vrsqrt.pop %v3986
        %v4003 = vrsqrt.pop %v3987
        %v4004 = vrsqrt.pop %v3988
        %v4005 = vrsqrt.pop %v3989
        %v4006 = vrsqrt.pop %v3990
        %v4007 = vrsqrt.pop %v3991
        %v4008 = vrsqrt.pop %v3992
        %v4009 = vrsqrt.pop %v3993
        %v4010 = vrsqrt.pop %v3994
        %v4011 = vrsqrt.pop %v3995
        %v4012 = vrsqrt.pop %v3996
        %v4013 = vrsqrt.pop %v3997
        %v4014 = vrsqrt.pop %v3998
        %v4015 = vrsqrt.pop %v3999
        %v4016 = vrsqrt.pop %v4000
        %v4017 = vmul.f32 %v3857, %v4001
        %v4018 = vmul.f32 %v3858, %v4001
        %v4019 = vmul.f32 %v3859, %v4002
        %v4020 = vmul.f32 %v3860, %v4002
        %v4021 = vmul.f32 %v3861, %v4003
        %v4022 = vmul.f32 %v3862, %v4003
        %v4023 = vmul.f32 %v3863, %v4004
        %v4024 = vmul.f32 %v3864, %v4004
        %v4025 = vmul.f32 %v3865, %v4005
        %v4026 = vmul.f32 %v3866, %v4005
        %v4027 = vmul.f32 %v3867, %v4006
        %v4028 = vmul.f32 %v3868, %v4006
        %v4029 = vmul.f32 %v3869, %v4007
        %v4030 = vmul.f32 %v3870, %v4007
        %v4031 = vmul.f32 %v3871, %v4008
        %v4032 = vmul.f32 %v3872, %v4008
        %v4033 = vmul.f32 %v3873, %v4009
        %v4034 = vmul.f32 %v3874, %v4009
        %v4035 = vmul.f32 %v3875, %v4010
        %v4036 = vmul.f32 %v3876, %v4010
        %v4037 = vmul.f32 %v3877, %v4011
        %v4038 = vmul.f32 %v3878, %v4011
        %v4039 = vmul.f32 %v3879, %v4012
        %v4040 = vmul.f32 %v3880, %v4012
        %v4041 = vmul.f32 %v3881, %v4013
        %v4042 = vmul.f32 %v3882, %v4013
        %v4043 = vmul.f32 %v3883, %v4014
        %v4044 = vmul.f32 %v3884, %v4014
        %v4045 = vmul.f32 %v3885, %v4015
        %v4046 = vmul.f32 %v3886, %v4015
        %v4047 = vmul.f32 %v3887, %v4016
        %v4048 = vmul.f32 %v3888, %v4016
        %v4050 = vlaneseq
        %v4051 = vshrl.u32 %v4050, 7
        %v4052 = vsub.s32 0, %v4051
        %v4053 = vrot.slane %v629, %v4052
        %v4054 = vlaneseq
        %v4055 = vshrl.u32 %v4054, 7
        %v4056 = vsub.s32 1, %v4055
        %v4057 = vrot.slane %v629, %v4056
        %v4060 = vmul.f32 %v4017, %v4053
        %v4061 = vmul.f32 %v4018, %v4057
        %v4062 = vmul.f32 %v4019, %v4053
        %v4063 = vmul.f32 %v4020, %v4057
        %v4064 = vmul.f32 %v4021, %v4053
        %v4065 = vmul.f32 %v4022, %v4057
        %v4066 = vmul.f32 %v4023, %v4053
        %v4067 = vmul.f32 %v4024, %v4057
        %v4068 = vmul.f32 %v4025, %v4053
        %v4069 = vmul.f32 %v4026, %v4057
        %v4070 = vmul.f32 %v4027, %v4053
        %v4071 = vmul.f32 %v4028, %v4057
        %v4072 = vmul.f32 %v4029, %v4053
        %v4073 = vmul.f32 %v4030, %v4057
        %v4074 = vmul.f32 %v4031, %v4053
        %v4075 = vmul.f32 %v4032, %v4057
        %v4076 = vmul.f32 %v4033, %v4053
        %v4077 = vmul.f32 %v4034, %v4057
        %v4078 = vmul.f32 %v4035, %v4053
        %v4079 = vmul.f32 %v4036, %v4057
        %v4080 = vmul.f32 %v4037, %v4053
        %v4081 = vmul.f32 %v4038, %v4057
        %v4082 = vmul.f32 %v4039, %v4053
        %v4083 = vmul.f32 %v4040, %v4057
        %v4084 = vmul.f32 %v4041, %v4053
        %v4085 = vmul.f32 %v4042, %v4057
        %v4086 = vmul.f32 %v4043, %v4053
        %v4087 = vmul.f32 %v4044, %v4057
        %v4088 = vmul.f32 %v4045, %v4053
        %v4089 = vmul.f32 %v4046, %v4057
        %v4090 = vmul.f32 %v4047, %v4053
        %v4091 = vmul.f32 %v4048, %v4057
        %v4092 = vpack.c.bf16 %v4062, %v4060
        %v4093 = vpack.c.bf16 %v4063, %v4061
        %v4094 = vpack.c.bf16 %v4066, %v4064
        %v4095 = vpack.c.bf16 %v4067, %v4065
        %v4096 = vpack.c.bf16 %v4070, %v4068
        %v4097 = vpack.c.bf16 %v4071, %v4069
        %v4098 = vpack.c.bf16 %v4074, %v4072
        %v4099 = vpack.c.bf16 %v4075, %v4073
        %v4100 = vpack.c.bf16 %v4078, %v4076
        %v4101 = vpack.c.bf16 %v4079, %v4077
        %v4102 = vpack.c.bf16 %v4082, %v4080
        %v4103 = vpack.c.bf16 %v4083, %v4081
        %v4104 = vpack.c.bf16 %v4086, %v4084
        %v4105 = vpack.c.bf16 %v4087, %v4085
        %v4106 = vpack.c.bf16 %v4090, %v4088
        %v4107 = vpack.c.bf16 %v4091, %v4089
        %v4108 = vld [vmem:[#allocation14] sm:$0xff]
        %v4109 = vld [vmem:[#allocation14 + $0x8] sm:$0xff]
        %v4110 = vld [vmem:[#allocation14 + $0x10] sm:$0xff]
        %v4111 = vld [vmem:[#allocation14 + $0x18] sm:$0xff]
        %v4112 = vld [vmem:[#allocation14 + $0x20] sm:$0xff]
        %v4113 = vld [vmem:[#allocation14 + $0x28] sm:$0xff]
        %v4114 = vld [vmem:[#allocation14 + $0x30] sm:$0xff]
        %v4115 = vld [vmem:[#allocation14 + $0x38] sm:$0xff]
        %v4116 = vld [vmem:[#allocation14 + $0x40] sm:$0xff]
        %v4117 = vld [vmem:[#allocation14 + $0x48] sm:$0xff]
        %v4118 = vld [vmem:[#allocation14 + $0x50] sm:$0xff]
        %v4119 = vld [vmem:[#allocation14 + $0x58] sm:$0xff]
        %v4120 = vld [vmem:[#allocation14 + $0x60] sm:$0xff]
        %v4121 = vld [vmem:[#allocation14 + $0x68] sm:$0xff]
        %v4122 = vld [vmem:[#allocation14 + $0x70] sm:$0xff]
        %v4123 = vld [vmem:[#allocation14 + $0x78] sm:$0xff]
        %v4124 = vld [vmem:[#allocation14 + $0x80] sm:$0xff]
        %v4125 = vld [vmem:[#allocation14 + $0x88] sm:$0xff]
        %v4126 = vld [vmem:[#allocation14 + $0x90] sm:$0xff]
        %v4127 = vld [vmem:[#allocation14 + $0x98] sm:$0xff]
        %v4128 = vld [vmem:[#allocation14 + $0xa0] sm:$0xff]
        %v4129 = vld [vmem:[#allocation14 + $0xa8] sm:$0xff]
        %v4130 = vld [vmem:[#allocation14 + $0xb0] sm:$0xff]
        %v4131 = vld [vmem:[#allocation14 + $0xb8] sm:$0xff]
        %v4132 = vld [vmem:[#allocation14 + $0xc0] sm:$0xff]
        %v4133 = vld [vmem:[#allocation14 + $0xc8] sm:$0xff]
        %v4134 = vld [vmem:[#allocation14 + $0xd0] sm:$0xff]
        %v4135 = vld [vmem:[#allocation14 + $0xd8] sm:$0xff]
        %v4136 = vld [vmem:[#allocation14 + $0xe0] sm:$0xff]
        %v4137 = vld [vmem:[#allocation14 + $0xe8] sm:$0xff]
        %v4138 = vld [vmem:[#allocation14 + $0xf0] sm:$0xff]
        %v4139 = vld [vmem:[#allocation14 + $0xf8] sm:$0xff]
        %v4140 = vld [vmem:[#allocation14 + $0x100] sm:$0xff]
        %v4141 = vld [vmem:[#allocation14 + $0x108] sm:$0xff]
        %v4142 = vld [vmem:[#allocation14 + $0x110] sm:$0xff]
        %v4143 = vld [vmem:[#allocation14 + $0x118] sm:$0xff]
        %v4144 = vld [vmem:[#allocation14 + $0x120] sm:$0xff]
        %v4145 = vld [vmem:[#allocation14 + $0x128] sm:$0xff]
        %v4146 = vld [vmem:[#allocation14 + $0x130] sm:$0xff]
        %v4147 = vld [vmem:[#allocation14 + $0x138] sm:$0xff]
        %v4148 = vld [vmem:[#allocation14 + $0x140] sm:$0xff]
        %v4149 = vld [vmem:[#allocation14 + $0x148] sm:$0xff]
        %v4150 = vld [vmem:[#allocation14 + $0x150] sm:$0xff]
        %v4151 = vld [vmem:[#allocation14 + $0x158] sm:$0xff]
        %v4152 = vld [vmem:[#allocation14 + $0x160] sm:$0xff]
        %v4153 = vld [vmem:[#allocation14 + $0x168] sm:$0xff]
        %v4154 = vld [vmem:[#allocation14 + $0x170] sm:$0xff]
        %v4155 = vld [vmem:[#allocation14 + $0x178] sm:$0xff]
        %v4156 = vld [vmem:[#allocation14 + $0x180] sm:$0xff]
        %v4157 = vld [vmem:[#allocation14 + $0x188] sm:$0xff]
        %v4158 = vld [vmem:[#allocation14 + $0x190] sm:$0xff]
        %v4159 = vld [vmem:[#allocation14 + $0x198] sm:$0xff]
        %v4160 = vld [vmem:[#allocation14 + $0x1a0] sm:$0xff]
        %v4161 = vld [vmem:[#allocation14 + $0x1a8] sm:$0xff]
        %v4162 = vld [vmem:[#allocation14 + $0x1b0] sm:$0xff]
        %v4163 = vld [vmem:[#allocation14 + $0x1b8] sm:$0xff]
        %v4164 = vld [vmem:[#allocation14 + $0x1c0] sm:$0xff]
        %v4165 = vld [vmem:[#allocation14 + $0x1c8] sm:$0xff]
        %v4166 = vld [vmem:[#allocation14 + $0x1d0] sm:$0xff]
        %v4167 = vld [vmem:[#allocation14 + $0x1d8] sm:$0xff]
        %v4168 = vld [vmem:[#allocation14 + $0x1e0] sm:$0xff]
        %v4169 = vld [vmem:[#allocation14 + $0x1e8] sm:$0xff]
        %v4170 = vld [vmem:[#allocation14 + $0x1f0] sm:$0xff]
        %v4171 = vld [vmem:[#allocation14 + $0x1f8] sm:$0xff]
        %v4236 = vunpack.c.l.b16 %v4108
        %v4237 = vunpack.c.h.b16 %v4108
        %v4238 = vunpack.c.l.b16 %v4109
        %v4239 = vunpack.c.h.b16 %v4109
        %v4240 = vunpack.c.l.b16 %v4110
        %v4241 = vunpack.c.h.b16 %v4110
        %v4242 = vunpack.c.l.b16 %v4111
        %v4243 = vunpack.c.h.b16 %v4111
        %v4244 = vunpack.c.l.b16 %v4112
        %v4245 = vunpack.c.h.b16 %v4112
        %v4246 = vunpack.c.l.b16 %v4113
        %v4247 = vunpack.c.h.b16 %v4113
        %v4248 = vunpack.c.l.b16 %v4114
        %v4249 = vunpack.c.h.b16 %v4114
        %v4250 = vunpack.c.l.b16 %v4115
        %v4251 = vunpack.c.h.b16 %v4115
        %v4252 = vunpack.c.l.b16 %v4116
        %v4253 = vunpack.c.h.b16 %v4116
        %v4254 = vunpack.c.l.b16 %v4117
        %v4255 = vunpack.c.h.b16 %v4117
        %v4256 = vunpack.c.l.b16 %v4118
        %v4257 = vunpack.c.h.b16 %v4118
        %v4258 = vunpack.c.l.b16 %v4119
        %v4259 = vunpack.c.h.b16 %v4119
        %v4260 = vunpack.c.l.b16 %v4120
        %v4261 = vunpack.c.h.b16 %v4120
        %v4262 = vunpack.c.l.b16 %v4121
        %v4263 = vunpack.c.h.b16 %v4121
        %v4264 = vunpack.c.l.b16 %v4122
        %v4265 = vunpack.c.h.b16 %v4122
        %v4266 = vunpack.c.l.b16 %v4123
        %v4267 = vunpack.c.h.b16 %v4123
        %v4268 = vunpack.c.l.b16 %v4124
        %v4269 = vunpack.c.h.b16 %v4124
        %v4270 = vunpack.c.l.b16 %v4125
        %v4271 = vunpack.c.h.b16 %v4125
        %v4272 = vunpack.c.l.b16 %v4126
        %v4273 = vunpack.c.h.b16 %v4126
        %v4274 = vunpack.c.l.b16 %v4127
        %v4275 = vunpack.c.h.b16 %v4127
        %v4276 = vunpack.c.l.b16 %v4128
        %v4277 = vunpack.c.h.b16 %v4128
        %v4278 = vunpack.c.l.b16 %v4129
        %v4279 = vunpack.c.h.b16 %v4129
        %v4280 = vunpack.c.l.b16 %v4130
        %v4281 = vunpack.c.h.b16 %v4130
        %v4282 = vunpack.c.l.b16 %v4131
        %v4283 = vunpack.c.h.b16 %v4131
        %v4284 = vunpack.c.l.b16 %v4132
        %v4285 = vunpack.c.h.b16 %v4132
        %v4286 = vunpack.c.l.b16 %v4133
        %v4287 = vunpack.c.h.b16 %v4133
        %v4288 = vunpack.c.l.b16 %v4134
        %v4289 = vunpack.c.h.b16 %v4134
        %v4290 = vunpack.c.l.b16 %v4135
        %v4291 = vunpack.c.h.b16 %v4135
        %v4292 = vunpack.c.l.b16 %v4136
        %v4293 = vunpack.c.h.b16 %v4136
        %v4294 = vunpack.c.l.b16 %v4137
        %v4295 = vunpack.c.h.b16 %v4137
        %v4296 = vunpack.c.l.b16 %v4138
        %v4297 = vunpack.c.h.b16 %v4138
        %v4298 = vunpack.c.l.b16 %v4139
        %v4299 = vunpack.c.h.b16 %v4139
        %v4300 = vunpack.c.l.b16 %v4140
        %v4301 = vunpack.c.h.b16 %v4140
        %v4302 = vunpack.c.l.b16 %v4141
        %v4303 = vunpack.c.h.b16 %v4141
        %v4304 = vunpack.c.l.b16 %v4142
        %v4305 = vunpack.c.h.b16 %v4142
        %v4306 = vunpack.c.l.b16 %v4143
        %v4307 = vunpack.c.h.b16 %v4143
        %v4308 = vunpack.c.l.b16 %v4144
        %v4309 = vunpack.c.h.b16 %v4144
        %v4310 = vunpack.c.l.b16 %v4145
        %v4311 = vunpack.c.h.b16 %v4145
        %v4312 = vunpack.c.l.b16 %v4146
        %v4313 = vunpack.c.h.b16 %v4146
        %v4314 = vunpack.c.l.b16 %v4147
        %v4315 = vunpack.c.h.b16 %v4147
        %v4316 = vunpack.c.l.b16 %v4148
        %v4317 = vunpack.c.h.b16 %v4148
        %v4318 = vunpack.c.l.b16 %v4149
        %v4319 = vunpack.c.h.b16 %v4149
        %v4320 = vunpack.c.l.b16 %v4150
        %v4321 = vunpack.c.h.b16 %v4150
        %v4322 = vunpack.c.l.b16 %v4151
        %v4323 = vunpack.c.h.b16 %v4151
        %v4324 = vunpack.c.l.b16 %v4152
        %v4325 = vunpack.c.h.b16 %v4152
        %v4326 = vunpack.c.l.b16 %v4153
        %v4327 = vunpack.c.h.b16 %v4153
        %v4328 = vunpack.c.l.b16 %v4154
        %v4329 = vunpack.c.h.b16 %v4154
        %v4330 = vunpack.c.l.b16 %v4155
        %v4331 = vunpack.c.h.b16 %v4155
        %v4332 = vunpack.c.l.b16 %v4156
        %v4333 = vunpack.c.h.b16 %v4156
        %v4334 = vunpack.c.l.b16 %v4157
        %v4335 = vunpack.c.h.b16 %v4157
        %v4336 = vunpack.c.l.b16 %v4158
        %v4337 = vunpack.c.h.b16 %v4158
        %v4338 = vunpack.c.l.b16 %v4159
        %v4339 = vunpack.c.h.b16 %v4159
        %v4340 = vunpack.c.l.b16 %v4160
        %v4341 = vunpack.c.h.b16 %v4160
        %v4342 = vunpack.c.l.b16 %v4161
        %v4343 = vunpack.c.h.b16 %v4161
        %v4344 = vunpack.c.l.b16 %v4162
        %v4345 = vunpack.c.h.b16 %v4162
        %v4346 = vunpack.c.l.b16 %v4163
        %v4347 = vunpack.c.h.b16 %v4163
        %v4348 = vunpack.c.l.b16 %v4164
        %v4349 = vunpack.c.h.b16 %v4164
        %v4350 = vunpack.c.l.b16 %v4165
        %v4351 = vunpack.c.h.b16 %v4165
        %v4352 = vunpack.c.l.b16 %v4166
        %v4353 = vunpack.c.h.b16 %v4166
        %v4354 = vunpack.c.l.b16 %v4167
        %v4355 = vunpack.c.h.b16 %v4167
        %v4356 = vunpack.c.l.b16 %v4168
        %v4357 = vunpack.c.h.b16 %v4168
        %v4358 = vunpack.c.l.b16 %v4169
        %v4359 = vunpack.c.h.b16 %v4169
        %v4360 = vunpack.c.l.b16 %v4170
        %v4361 = vunpack.c.h.b16 %v4170
        %v4362 = vunpack.c.l.b16 %v4171
        %v4363 = vunpack.c.h.b16 %v4171
        %v4364 = vpack.c.b16 %v4240, %v4236
        %v4365 = vpack.c.b16 %v4241, %v4237
        %v4366 = vpack.c.b16 %v4242, %v4238
        %v4367 = vpack.c.b16 %v4243, %v4239
        %v4368 = vpack.c.b16 %v4248, %v4244
        %v4369 = vpack.c.b16 %v4249, %v4245
        %v4370 = vpack.c.b16 %v4250, %v4246
        %v4371 = vpack.c.b16 %v4251, %v4247
        %v4372 = vpack.c.b16 %v4256, %v4252
        %v4373 = vpack.c.b16 %v4257, %v4253
        %v4374 = vpack.c.b16 %v4258, %v4254
        %v4375 = vpack.c.b16 %v4259, %v4255
        %v4376 = vpack.c.b16 %v4264, %v4260
        %v4377 = vpack.c.b16 %v4265, %v4261
        %v4378 = vpack.c.b16 %v4266, %v4262
        %v4379 = vpack.c.b16 %v4267, %v4263
        %v4380 = vpack.c.b16 %v4272, %v4268
        %v4381 = vpack.c.b16 %v4273, %v4269
        %v4382 = vpack.c.b16 %v4274, %v4270
        %v4383 = vpack.c.b16 %v4275, %v4271
        %v4384 = vpack.c.b16 %v4280, %v4276
        %v4385 = vpack.c.b16 %v4281, %v4277
        %v4386 = vpack.c.b16 %v4282, %v4278
        %v4387 = vpack.c.b16 %v4283, %v4279
        %v4388 = vpack.c.b16 %v4288, %v4284
        %v4389 = vpack.c.b16 %v4289, %v4285
        %v4390 = vpack.c.b16 %v4290, %v4286
        %v4391 = vpack.c.b16 %v4291, %v4287
        %v4392 = vpack.c.b16 %v4296, %v4292
        %v4393 = vpack.c.b16 %v4297, %v4293
        %v4394 = vpack.c.b16 %v4298, %v4294
        %v4395 = vpack.c.b16 %v4299, %v4295
        %v4396 = vpack.c.b16 %v4304, %v4300
        %v4397 = vpack.c.b16 %v4305, %v4301
        %v4398 = vpack.c.b16 %v4306, %v4302
        %v4399 = vpack.c.b16 %v4307, %v4303
        %v4400 = vpack.c.b16 %v4312, %v4308
        %v4401 = vpack.c.b16 %v4313, %v4309
        %v4402 = vpack.c.b16 %v4314, %v4310
        %v4403 = vpack.c.b16 %v4315, %v4311
        %v4404 = vpack.c.b16 %v4320, %v4316
        %v4405 = vpack.c.b16 %v4321, %v4317
        %v4406 = vpack.c.b16 %v4322, %v4318
        %v4407 = vpack.c.b16 %v4323, %v4319
        %v4408 = vpack.c.b16 %v4328, %v4324
        %v4409 = vpack.c.b16 %v4329, %v4325
        %v4410 = vpack.c.b16 %v4330, %v4326
        %v4411 = vpack.c.b16 %v4331, %v4327
        %v4412 = vpack.c.b16 %v4336, %v4332
        %v4413 = vpack.c.b16 %v4337, %v4333
        %v4414 = vpack.c.b16 %v4338, %v4334
        %v4415 = vpack.c.b16 %v4339, %v4335
        %v4416 = vpack.c.b16 %v4344, %v4340
        %v4417 = vpack.c.b16 %v4345, %v4341
        %v4418 = vpack.c.b16 %v4346, %v4342
        %v4419 = vpack.c.b16 %v4347, %v4343
        %v4420 = vpack.c.b16 %v4352, %v4348
        %v4421 = vpack.c.b16 %v4353, %v4349
        %v4422 = vpack.c.b16 %v4354, %v4350
        %v4423 = vpack.c.b16 %v4355, %v4351
        %v4424 = vpack.c.b16 %v4360, %v4356
        %v4425 = vpack.c.b16 %v4361, %v4357
        %v4426 = vpack.c.b16 %v4362, %v4358
        %v4427 = vpack.c.b16 %v4363, %v4359
        %4492 = vmatprep.subr.bf16.mxu0 %v4393
        %4493 = vmatpush1.bf16.msra.mxu0 %v4392
        %4494 = vmatprep.subr.bf16.mxu0 %v4389
        %4495 = vmatpush1.bf16.msra.mxu0 %v4388
        %4496 = vmatprep.subr.bf16.mxu0 %v4385
        %4497 = vmatpush1.bf16.msra.mxu0 %v4384
        %4498 = vmatprep.subr.bf16.mxu0 %v4381
        %4499 = vmatpush1.bf16.msra.mxu0 %v4380
        %4500 = vmatprep.subr.bf16.mxu0 %v4377
        %4501 = vmatpush1.bf16.msra.mxu0 %v4376
        %4502 = vmatprep.subr.bf16.mxu0 %v4373
        %4503 = vmatpush1.bf16.msra.mxu0 %v4372
        %4504 = vmatprep.subr.bf16.mxu0 %v4369
        %4505 = vmatpush1.bf16.msra.mxu0 %v4368
        %4506 = vmatprep.subr.bf16.mxu0 %v4365
        %4507 = vmatpush1.bf16.msra.mxu0 %v4364
        %4508 = vmatprep.subr.bf16.mxu0 %v4425
        %4509 = vmatpush2.bf16.msra.mxu0 %v4424
        %4510 = vmatprep.subr.bf16.mxu0 %v4421
        %4511 = vmatpush2.bf16.msra.mxu0 %v4420
        %4512 = vmatprep.subr.bf16.mxu0 %v4417
        %4513 = vmatpush2.bf16.msra.mxu0 %v4416
        %4514 = vmatprep.subr.bf16.mxu0 %v4413
        %4515 = vmatpush2.bf16.msra.mxu0 %v4412
        %4516 = vmatprep.subr.bf16.mxu0 %v4409
        %4517 = vmatpush2.bf16.msra.mxu0 %v4408
        %4518 = vmatprep.subr.bf16.mxu0 %v4405
        %4519 = vmatpush2.bf16.msra.mxu0 %v4404
        %4520 = vmatprep.subr.bf16.mxu0 %v4401
        %4521 = vmatpush2.bf16.msra.mxu0 %v4400
        %4522 = vmatprep.subr.bf16.mxu0 %v4397
        %4523 = vmatpush2.bf16.msra.mxu0 %v4396
        %4524 = vmatprep.mubr.bf16.mxu0 %v4093
        %4525 = vmatmul.mubr.bf16.gmra.mxu0 %v4092
        %v4526 = vpop.f32.mrf.mxu0
        %v4527 = vadd.f32 0.0, %v4526
        %v4528 = vpop.f32.mrf.mxu0
        %v4529 = vadd.f32 0.0, %v4528
        %v4530 = vpop.f32.mrf.mxu0
        %v4531 = vadd.f32 0.0, %v4530
        %v4532 = vpop.f32.mrf.mxu0
        %v4533 = vadd.f32 0.0, %v4532
        %4534 = vmatprep.mubr.bf16.mxu0 %v4095
        %4535 = vmatmul.mubr.bf16.gmra.mxu0 %v4094
        %v4536 = vpop.f32.mrf.mxu0
        %v4537 = vadd.f32 0.0, %v4536
        %v4538 = vpop.f32.mrf.mxu0
        %v4539 = vadd.f32 0.0, %v4538
        %v4540 = vpop.f32.mrf.mxu0
        %v4541 = vadd.f32 0.0, %v4540
        %v4542 = vpop.f32.mrf.mxu0
        %v4543 = vadd.f32 0.0, %v4542
        %4544 = vmatprep.mubr.bf16.mxu0 %v4097
        %4545 = vmatmul.mubr.bf16.gmra.mxu0 %v4096
        %v4546 = vpop.f32.mrf.mxu0
        %v4547 = vadd.f32 0.0, %v4546
        %v4548 = vpop.f32.mrf.mxu0
        %v4549 = vadd.f32 0.0, %v4548
        %v4550 = vpop.f32.mrf.mxu0
        %v4551 = vadd.f32 0.0, %v4550
        %v4552 = vpop.f32.mrf.mxu0
        %v4553 = vadd.f32 0.0, %v4552
        %4554 = vmatprep.mubr.bf16.mxu0 %v4099
        %4555 = vmatmul.mubr.bf16.gmra.mxu0 %v4098
        %v4556 = vpop.f32.mrf.mxu0
        %v4557 = vadd.f32 0.0, %v4556
        %v4558 = vpop.f32.mrf.mxu0
        %v4559 = vadd.f32 0.0, %v4558
        %v4560 = vpop.f32.mrf.mxu0
        %v4561 = vadd.f32 0.0, %v4560
        %v4562 = vpop.f32.mrf.mxu0
        %v4563 = vadd.f32 0.0, %v4562
        %4564 = vmatprep.mubr.bf16.mxu0 %v4101
        %4565 = vmatmul.mubr.bf16.gmra.mxu0 %v4100
        %v4566 = vpop.f32.mrf.mxu0
        %v4567 = vadd.f32 0.0, %v4566
        %v4568 = vpop.f32.mrf.mxu0
        %v4569 = vadd.f32 0.0, %v4568
        %v4570 = vpop.f32.mrf.mxu0
        %v4571 = vadd.f32 0.0, %v4570
        %v4572 = vpop.f32.mrf.mxu0
        %v4573 = vadd.f32 0.0, %v4572
        %4574 = vmatprep.mubr.bf16.mxu0 %v4103
        %4575 = vmatmul.mubr.bf16.gmra.mxu0 %v4102
        %v4576 = vpop.f32.mrf.mxu0
        %v4577 = vadd.f32 0.0, %v4576
        %v4578 = vpop.f32.mrf.mxu0
        %v4579 = vadd.f32 0.0, %v4578
        %v4580 = vpop.f32.mrf.mxu0
        %v4581 = vadd.f32 0.0, %v4580
        %v4582 = vpop.f32.mrf.mxu0
        %v4583 = vadd.f32 0.0, %v4582
        %4584 = vmatprep.mubr.bf16.mxu0 %v4105
        %4585 = vmatmul.mubr.bf16.gmra.mxu0 %v4104
        %v4586 = vpop.f32.mrf.mxu0
        %v4587 = vadd.f32 0.0, %v4586
        %v4588 = vpop.f32.mrf.mxu0
        %v4589 = vadd.f32 0.0, %v4588
        %v4590 = vpop.f32.mrf.mxu0
        %v4591 = vadd.f32 0.0, %v4590
        %v4592 = vpop.f32.mrf.mxu0
        %v4593 = vadd.f32 0.0, %v4592
        %4594 = vmatprep.mubr.bf16.mxu0 %v4107
        %4595 = vmatmul.mubr.bf16.gmra.mxu0 %v4106
        %v4596 = vpop.f32.mrf.mxu0
        %v4597 = vadd.f32 0.0, %v4596
        %v4598 = vpop.f32.mrf.mxu0
        %v4599 = vadd.f32 0.0, %v4598
        %v4600 = vpop.f32.mrf.mxu0
        %v4601 = vadd.f32 0.0, %v4600
        %v4602 = vpop.f32.mrf.mxu0
        %v4603 = vadd.f32 0.0, %v4602
        %4604 = vdwg.mxu0
        %4605 = vmatprep.subr.bf16.mxu0 %v4395
        %4606 = vmatpush1.bf16.msra.mxu0 %v4394
        %4607 = vmatprep.subr.bf16.mxu0 %v4391
        %4608 = vmatpush1.bf16.msra.mxu0 %v4390
        %4609 = vmatprep.subr.bf16.mxu0 %v4387
        %4610 = vmatpush1.bf16.msra.mxu0 %v4386
        %4611 = vmatprep.subr.bf16.mxu0 %v4383
        %4612 = vmatpush1.bf16.msra.mxu0 %v4382
        %4613 = vmatprep.subr.bf16.mxu0 %v4379
        %4614 = vmatpush1.bf16.msra.mxu0 %v4378
        %4615 = vmatprep.subr.bf16.mxu0 %v4375
        %4616 = vmatpush1.bf16.msra.mxu0 %v4374
        %4617 = vmatprep.subr.bf16.mxu0 %v4371
        %4618 = vmatpush1.bf16.msra.mxu0 %v4370
        %4619 = vmatprep.subr.bf16.mxu0 %v4367
        %4620 = vmatpush1.bf16.msra.mxu0 %v4366
        %4621 = vmatprep.subr.bf16.mxu0 %v4427
        %4622 = vmatpush2.bf16.msra.mxu0 %v4426
        %4623 = vmatprep.subr.bf16.mxu0 %v4423
        %4624 = vmatpush2.bf16.msra.mxu0 %v4422
        %4625 = vmatprep.subr.bf16.mxu0 %v4419
        %4626 = vmatpush2.bf16.msra.mxu0 %v4418
        %4627 = vmatprep.subr.bf16.mxu0 %v4415
        %4628 = vmatpush2.bf16.msra.mxu0 %v4414
        %4629 = vmatprep.subr.bf16.mxu0 %v4411
        %4630 = vmatpush2.bf16.msra.mxu0 %v4410
        %4631 = vmatprep.subr.bf16.mxu0 %v4407
        %4632 = vmatpush2.bf16.msra.mxu0 %v4406
        %4633 = vmatprep.subr.bf16.mxu0 %v4403
        %4634 = vmatpush2.bf16.msra.mxu0 %v4402
        %4635 = vmatprep.subr.bf16.mxu0 %v4399
        %4636 = vmatpush2.bf16.msra.mxu0 %v4398
        %4637 = vmatprep.mubr.bf16.mxu0 %v4093
        %4638 = vmatmul.mubr.bf16.gmra.mxu0 %v4092
        %v4639 = vpop.f32.mrf.mxu0
        %v4640 = vadd.f32 0.0, %v4639
        %v4641 = vpop.f32.mrf.mxu0
        %v4642 = vadd.f32 0.0, %v4641
        %v4643 = vpop.f32.mrf.mxu0
        %v4644 = vadd.f32 0.0, %v4643
        %v4645 = vpop.f32.mrf.mxu0
        %v4646 = vadd.f32 0.0, %v4645
        %4647 = vmatprep.mubr.bf16.mxu0 %v4095
        %4648 = vmatmul.mubr.bf16.gmra.mxu0 %v4094
        %v4649 = vpop.f32.mrf.mxu0
        %v4650 = vadd.f32 0.0, %v4649
        %v4651 = vpop.f32.mrf.mxu0
        %v4652 = vadd.f32 0.0, %v4651
        %v4653 = vpop.f32.mrf.mxu0
        %v4654 = vadd.f32 0.0, %v4653
        %v4655 = vpop.f32.mrf.mxu0
        %v4656 = vadd.f32 0.0, %v4655
        %4657 = vmatprep.mubr.bf16.mxu0 %v4097
        %4658 = vmatmul.mubr.bf16.gmra.mxu0 %v4096
        %v4659 = vpop.f32.mrf.mxu0
        %v4660 = vadd.f32 0.0, %v4659
        %v4661 = vpop.f32.mrf.mxu0
        %v4662 = vadd.f32 0.0, %v4661
        %v4663 = vpop.f32.mrf.mxu0
        %v4664 = vadd.f32 0.0, %v4663
        %v4665 = vpop.f32.mrf.mxu0
        %v4666 = vadd.f32 0.0, %v4665
        %4667 = vmatprep.mubr.bf16.mxu0 %v4099
        %4668 = vmatmul.mubr.bf16.gmra.mxu0 %v4098
        %v4669 = vpop.f32.mrf.mxu0
        %v4670 = vadd.f32 0.0, %v4669
        %v4671 = vpop.f32.mrf.mxu0
        %v4672 = vadd.f32 0.0, %v4671
        %v4673 = vpop.f32.mrf.mxu0
        %v4674 = vadd.f32 0.0, %v4673
        %v4675 = vpop.f32.mrf.mxu0
        %v4676 = vadd.f32 0.0, %v4675
        %4677 = vmatprep.mubr.bf16.mxu0 %v4101
        %4678 = vmatmul.mubr.bf16.gmra.mxu0 %v4100
        %v4679 = vpop.f32.mrf.mxu0
        %v4680 = vadd.f32 0.0, %v4679
        %v4681 = vpop.f32.mrf.mxu0
        %v4682 = vadd.f32 0.0, %v4681
        %v4683 = vpop.f32.mrf.mxu0
        %v4684 = vadd.f32 0.0, %v4683
        %v4685 = vpop.f32.mrf.mxu0
        %v4686 = vadd.f32 0.0, %v4685
        %4687 = vmatprep.mubr.bf16.mxu0 %v4103
        %4688 = vmatmul.mubr.bf16.gmra.mxu0 %v4102
        %v4689 = vpop.f32.mrf.mxu0
        %v4690 = vadd.f32 0.0, %v4689
        %v4691 = vpop.f32.mrf.mxu0
        %v4692 = vadd.f32 0.0, %v4691
        %v4693 = vpop.f32.mrf.mxu0
        %v4694 = vadd.f32 0.0, %v4693
        %v4695 = vpop.f32.mrf.mxu0
        %v4696 = vadd.f32 0.0, %v4695
        %4697 = vmatprep.mubr.bf16.mxu0 %v4105
        %4698 = vmatmul.mubr.bf16.gmra.mxu0 %v4104
        %v4699 = vpop.f32.mrf.mxu0
        %v4700 = vadd.f32 0.0, %v4699
        %v4701 = vpop.f32.mrf.mxu0
        %v4702 = vadd.f32 0.0, %v4701
        %v4703 = vpop.f32.mrf.mxu0
        %v4704 = vadd.f32 0.0, %v4703
        %v4705 = vpop.f32.mrf.mxu0
        %v4706 = vadd.f32 0.0, %v4705
        %4707 = vmatprep.mubr.bf16.mxu0 %v4107
        %4708 = vmatmul.mubr.bf16.gmra.mxu0 %v4106
        %v4709 = vpop.f32.mrf.mxu0
        %v4710 = vadd.f32 0.0, %v4709
        %v4711 = vpop.f32.mrf.mxu0
        %v4712 = vadd.f32 0.0, %v4711
        %v4713 = vpop.f32.mrf.mxu0
        %v4714 = vadd.f32 0.0, %v4713
        %v4715 = vpop.f32.mrf.mxu0
        %v4716 = vadd.f32 0.0, %v4715
        %4717 = vdwg.mxu0
        %v4718 = vld [vmem:[#allocation16] sm:$0xff]
        %v4719 = vld [vmem:[#allocation16 + $0x8] sm:$0xff]
        %v4720 = vld [vmem:[#allocation16 + $0x10] sm:$0xff]
        %v4721 = vld [vmem:[#allocation16 + $0x18] sm:$0xff]
        %v4722 = vld [vmem:[#allocation16 + $0x20] sm:$0xff]
        %v4723 = vld [vmem:[#allocation16 + $0x28] sm:$0xff]
        %v4724 = vld [vmem:[#allocation16 + $0x30] sm:$0xff]
        %v4725 = vld [vmem:[#allocation16 + $0x38] sm:$0xff]
        %v4726 = vld [vmem:[#allocation16 + $0x40] sm:$0xff]
        %v4727 = vld [vmem:[#allocation16 + $0x48] sm:$0xff]
        %v4728 = vld [vmem:[#allocation16 + $0x50] sm:$0xff]
        %v4729 = vld [vmem:[#allocation16 + $0x58] sm:$0xff]
        %v4730 = vld [vmem:[#allocation16 + $0x60] sm:$0xff]
        %v4731 = vld [vmem:[#allocation16 + $0x68] sm:$0xff]
        %v4732 = vld [vmem:[#allocation16 + $0x70] sm:$0xff]
        %v4733 = vld [vmem:[#allocation16 + $0x78] sm:$0xff]
        %v4734 = vld [vmem:[#allocation16 + $0x80] sm:$0xff]
        %v4735 = vld [vmem:[#allocation16 + $0x88] sm:$0xff]
        %v4736 = vld [vmem:[#allocation16 + $0x90] sm:$0xff]
        %v4737 = vld [vmem:[#allocation16 + $0x98] sm:$0xff]
        %v4738 = vld [vmem:[#allocation16 + $0xa0] sm:$0xff]
        %v4739 = vld [vmem:[#allocation16 + $0xa8] sm:$0xff]
        %v4740 = vld [vmem:[#allocation16 + $0xb0] sm:$0xff]
        %v4741 = vld [vmem:[#allocation16 + $0xb8] sm:$0xff]
        %v4742 = vld [vmem:[#allocation16 + $0xc0] sm:$0xff]
        %v4743 = vld [vmem:[#allocation16 + $0xc8] sm:$0xff]
        %v4744 = vld [vmem:[#allocation16 + $0xd0] sm:$0xff]
        %v4745 = vld [vmem:[#allocation16 + $0xd8] sm:$0xff]
        %v4746 = vld [vmem:[#allocation16 + $0xe0] sm:$0xff]
        %v4747 = vld [vmem:[#allocation16 + $0xe8] sm:$0xff]
        %v4748 = vld [vmem:[#allocation16 + $0xf0] sm:$0xff]
        %v4749 = vld [vmem:[#allocation16 + $0xf8] sm:$0xff]
        %v4750 = vld [vmem:[#allocation16 + $0x100] sm:$0xff]
        %v4751 = vld [vmem:[#allocation16 + $0x108] sm:$0xff]
        %v4752 = vld [vmem:[#allocation16 + $0x110] sm:$0xff]
        %v4753 = vld [vmem:[#allocation16 + $0x118] sm:$0xff]
        %v4754 = vld [vmem:[#allocation16 + $0x120] sm:$0xff]
        %v4755 = vld [vmem:[#allocation16 + $0x128] sm:$0xff]
        %v4756 = vld [vmem:[#allocation16 + $0x130] sm:$0xff]
        %v4757 = vld [vmem:[#allocation16 + $0x138] sm:$0xff]
        %v4758 = vld [vmem:[#allocation16 + $0x140] sm:$0xff]
        %v4759 = vld [vmem:[#allocation16 + $0x148] sm:$0xff]
        %v4760 = vld [vmem:[#allocation16 + $0x150] sm:$0xff]
        %v4761 = vld [vmem:[#allocation16 + $0x158] sm:$0xff]
        %v4762 = vld [vmem:[#allocation16 + $0x160] sm:$0xff]
        %v4763 = vld [vmem:[#allocation16 + $0x168] sm:$0xff]
        %v4764 = vld [vmem:[#allocation16 + $0x170] sm:$0xff]
        %v4765 = vld [vmem:[#allocation16 + $0x178] sm:$0xff]
        %v4766 = vld [vmem:[#allocation16 + $0x180] sm:$0xff]
        %v4767 = vld [vmem:[#allocation16 + $0x188] sm:$0xff]
        %v4768 = vld [vmem:[#allocation16 + $0x190] sm:$0xff]
        %v4769 = vld [vmem:[#allocation16 + $0x198] sm:$0xff]
        %v4770 = vld [vmem:[#allocation16 + $0x1a0] sm:$0xff]
        %v4771 = vld [vmem:[#allocation16 + $0x1a8] sm:$0xff]
        %v4772 = vld [vmem:[#allocation16 + $0x1b0] sm:$0xff]
        %v4773 = vld [vmem:[#allocation16 + $0x1b8] sm:$0xff]
        %v4774 = vld [vmem:[#allocation16 + $0x1c0] sm:$0xff]
        %v4775 = vld [vmem:[#allocation16 + $0x1c8] sm:$0xff]
        %v4776 = vld [vmem:[#allocation16 + $0x1d0] sm:$0xff]
        %v4777 = vld [vmem:[#allocation16 + $0x1d8] sm:$0xff]
        %v4778 = vld [vmem:[#allocation16 + $0x1e0] sm:$0xff]
        %v4779 = vld [vmem:[#allocation16 + $0x1e8] sm:$0xff]
        %v4780 = vld [vmem:[#allocation16 + $0x1f0] sm:$0xff]
        %v4781 = vld [vmem:[#allocation16 + $0x1f8] sm:$0xff]
        %v4846 = vunpack.c.l.b16 %v4718
        %v4847 = vunpack.c.h.b16 %v4718
        %v4848 = vunpack.c.l.b16 %v4719
        %v4849 = vunpack.c.h.b16 %v4719
        %v4850 = vunpack.c.l.b16 %v4720
        %v4851 = vunpack.c.h.b16 %v4720
        %v4852 = vunpack.c.l.b16 %v4721
        %v4853 = vunpack.c.h.b16 %v4721
        %v4854 = vunpack.c.l.b16 %v4722
        %v4855 = vunpack.c.h.b16 %v4722
        %v4856 = vunpack.c.l.b16 %v4723
        %v4857 = vunpack.c.h.b16 %v4723
        %v4858 = vunpack.c.l.b16 %v4724
        %v4859 = vunpack.c.h.b16 %v4724
        %v4860 = vunpack.c.l.b16 %v4725
        %v4861 = vunpack.c.h.b16 %v4725
        %v4862 = vunpack.c.l.b16 %v4726
        %v4863 = vunpack.c.h.b16 %v4726
        %v4864 = vunpack.c.l.b16 %v4727
        %v4865 = vunpack.c.h.b16 %v4727
        %v4866 = vunpack.c.l.b16 %v4728
        %v4867 = vunpack.c.h.b16 %v4728
        %v4868 = vunpack.c.l.b16 %v4729
        %v4869 = vunpack.c.h.b16 %v4729
        %v4870 = vunpack.c.l.b16 %v4730
        %v4871 = vunpack.c.h.b16 %v4730
        %v4872 = vunpack.c.l.b16 %v4731
        %v4873 = vunpack.c.h.b16 %v4731
        %v4874 = vunpack.c.l.b16 %v4732
        %v4875 = vunpack.c.h.b16 %v4732
        %v4876 = vunpack.c.l.b16 %v4733
        %v4877 = vunpack.c.h.b16 %v4733
        %v4878 = vunpack.c.l.b16 %v4734
        %v4879 = vunpack.c.h.b16 %v4734
        %v4880 = vunpack.c.l.b16 %v4735
        %v4881 = vunpack.c.h.b16 %v4735
        %v4882 = vunpack.c.l.b16 %v4736
        %v4883 = vunpack.c.h.b16 %v4736
        %v4884 = vunpack.c.l.b16 %v4737
        %v4885 = vunpack.c.h.b16 %v4737
        %v4886 = vunpack.c.l.b16 %v4738
        %v4887 = vunpack.c.h.b16 %v4738
        %v4888 = vunpack.c.l.b16 %v4739
        %v4889 = vunpack.c.h.b16 %v4739
        %v4890 = vunpack.c.l.b16 %v4740
        %v4891 = vunpack.c.h.b16 %v4740
        %v4892 = vunpack.c.l.b16 %v4741
        %v4893 = vunpack.c.h.b16 %v4741
        %v4894 = vunpack.c.l.b16 %v4742
        %v4895 = vunpack.c.h.b16 %v4742
        %v4896 = vunpack.c.l.b16 %v4743
        %v4897 = vunpack.c.h.b16 %v4743
        %v4898 = vunpack.c.l.b16 %v4744
        %v4899 = vunpack.c.h.b16 %v4744
        %v4900 = vunpack.c.l.b16 %v4745
        %v4901 = vunpack.c.h.b16 %v4745
        %v4902 = vunpack.c.l.b16 %v4746
        %v4903 = vunpack.c.h.b16 %v4746
        %v4904 = vunpack.c.l.b16 %v4747
        %v4905 = vunpack.c.h.b16 %v4747
        %v4906 = vunpack.c.l.b16 %v4748
        %v4907 = vunpack.c.h.b16 %v4748
        %v4908 = vunpack.c.l.b16 %v4749
        %v4909 = vunpack.c.h.b16 %v4749
        %v4910 = vunpack.c.l.b16 %v4750
        %v4911 = vunpack.c.h.b16 %v4750
        %v4912 = vunpack.c.l.b16 %v4751
        %v4913 = vunpack.c.h.b16 %v4751
        %v4914 = vunpack.c.l.b16 %v4752
        %v4915 = vunpack.c.h.b16 %v4752
        %v4916 = vunpack.c.l.b16 %v4753
        %v4917 = vunpack.c.h.b16 %v4753
        %v4918 = vunpack.c.l.b16 %v4754
        %v4919 = vunpack.c.h.b16 %v4754
        %v4920 = vunpack.c.l.b16 %v4755
        %v4921 = vunpack.c.h.b16 %v4755
        %v4922 = vunpack.c.l.b16 %v4756
        %v4923 = vunpack.c.h.b16 %v4756
        %v4924 = vunpack.c.l.b16 %v4757
        %v4925 = vunpack.c.h.b16 %v4757
        %v4926 = vunpack.c.l.b16 %v4758
        %v4927 = vunpack.c.h.b16 %v4758
        %v4928 = vunpack.c.l.b16 %v4759
        %v4929 = vunpack.c.h.b16 %v4759
        %v4930 = vunpack.c.l.b16 %v4760
        %v4931 = vunpack.c.h.b16 %v4760
        %v4932 = vunpack.c.l.b16 %v4761
        %v4933 = vunpack.c.h.b16 %v4761
        %v4934 = vunpack.c.l.b16 %v4762
        %v4935 = vunpack.c.h.b16 %v4762
        %v4936 = vunpack.c.l.b16 %v4763
        %v4937 = vunpack.c.h.b16 %v4763
        %v4938 = vunpack.c.l.b16 %v4764
        %v4939 = vunpack.c.h.b16 %v4764
        %v4940 = vunpack.c.l.b16 %v4765
        %v4941 = vunpack.c.h.b16 %v4765
        %v4942 = vunpack.c.l.b16 %v4766
        %v4943 = vunpack.c.h.b16 %v4766
        %v4944 = vunpack.c.l.b16 %v4767
        %v4945 = vunpack.c.h.b16 %v4767
        %v4946 = vunpack.c.l.b16 %v4768
        %v4947 = vunpack.c.h.b16 %v4768
        %v4948 = vunpack.c.l.b16 %v4769
        %v4949 = vunpack.c.h.b16 %v4769
        %v4950 = vunpack.c.l.b16 %v4770
        %v4951 = vunpack.c.h.b16 %v4770
        %v4952 = vunpack.c.l.b16 %v4771
        %v4953 = vunpack.c.h.b16 %v4771
        %v4954 = vunpack.c.l.b16 %v4772
        %v4955 = vunpack.c.h.b16 %v4772
        %v4956 = vunpack.c.l.b16 %v4773
        %v4957 = vunpack.c.h.b16 %v4773
        %v4958 = vunpack.c.l.b16 %v4774
        %v4959 = vunpack.c.h.b16 %v4774
        %v4960 = vunpack.c.l.b16 %v4775
        %v4961 = vunpack.c.h.b16 %v4775
        %v4962 = vunpack.c.l.b16 %v4776
        %v4963 = vunpack.c.h.b16 %v4776
        %v4964 = vunpack.c.l.b16 %v4777
        %v4965 = vunpack.c.h.b16 %v4777
        %v4966 = vunpack.c.l.b16 %v4778
        %v4967 = vunpack.c.h.b16 %v4778
        %v4968 = vunpack.c.l.b16 %v4779
        %v4969 = vunpack.c.h.b16 %v4779
        %v4970 = vunpack.c.l.b16 %v4780
        %v4971 = vunpack.c.h.b16 %v4780
        %v4972 = vunpack.c.l.b16 %v4781
        %v4973 = vunpack.c.h.b16 %v4781
        %v4974 = vpack.c.b16 %v4850, %v4846
        %v4975 = vpack.c.b16 %v4851, %v4847
        %v4976 = vpack.c.b16 %v4852, %v4848
        %v4977 = vpack.c.b16 %v4853, %v4849
        %v4978 = vpack.c.b16 %v4858, %v4854
        %v4979 = vpack.c.b16 %v4859, %v4855
        %v4980 = vpack.c.b16 %v4860, %v4856
        %v4981 = vpack.c.b16 %v4861, %v4857
        %v4982 = vpack.c.b16 %v4866, %v4862
        %v4983 = vpack.c.b16 %v4867, %v4863
        %v4984 = vpack.c.b16 %v4868, %v4864
        %v4985 = vpack.c.b16 %v4869, %v4865
        %v4986 = vpack.c.b16 %v4874, %v4870
        %v4987 = vpack.c.b16 %v4875, %v4871
        %v4988 = vpack.c.b16 %v4876, %v4872
        %v4989 = vpack.c.b16 %v4877, %v4873
        %v4990 = vpack.c.b16 %v4882, %v4878
        %v4991 = vpack.c.b16 %v4883, %v4879
        %v4992 = vpack.c.b16 %v4884, %v4880
        %v4993 = vpack.c.b16 %v4885, %v4881
        %v4994 = vpack.c.b16 %v4890, %v4886
        %v4995 = vpack.c.b16 %v4891, %v4887
        %v4996 = vpack.c.b16 %v4892, %v4888
        %v4997 = vpack.c.b16 %v4893, %v4889
        %v4998 = vpack.c.b16 %v4898, %v4894
        %v4999 = vpack.c.b16 %v4899, %v4895
        %v5000 = vpack.c.b16 %v4900, %v4896
        %v5001 = vpack.c.b16 %v4901, %v4897
        %v5002 = vpack.c.b16 %v4906, %v4902
        %v5003 = vpack.c.b16 %v4907, %v4903
        %v5004 = vpack.c.b16 %v4908, %v4904
        %v5005 = vpack.c.b16 %v4909, %v4905
        %v5006 = vpack.c.b16 %v4914, %v4910
        %v5007 = vpack.c.b16 %v4915, %v4911
        %v5008 = vpack.c.b16 %v4916, %v4912
        %v5009 = vpack.c.b16 %v4917, %v4913
        %v5010 = vpack.c.b16 %v4922, %v4918
        %v5011 = vpack.c.b16 %v4923, %v4919
        %v5012 = vpack.c.b16 %v4924, %v4920
        %v5013 = vpack.c.b16 %v4925, %v4921
        %v5014 = vpack.c.b16 %v4930, %v4926
        %v5015 = vpack.c.b16 %v4931, %v4927
        %v5016 = vpack.c.b16 %v4932, %v4928
        %v5017 = vpack.c.b16 %v4933, %v4929
        %v5018 = vpack.c.b16 %v4938, %v4934
        %v5019 = vpack.c.b16 %v4939, %v4935
        %v5020 = vpack.c.b16 %v4940, %v4936
        %v5021 = vpack.c.b16 %v4941, %v4937
        %v5022 = vpack.c.b16 %v4946, %v4942
        %v5023 = vpack.c.b16 %v4947, %v4943
        %v5024 = vpack.c.b16 %v4948, %v4944
        %v5025 = vpack.c.b16 %v4949, %v4945
        %v5026 = vpack.c.b16 %v4954, %v4950
        %v5027 = vpack.c.b16 %v4955, %v4951
        %v5028 = vpack.c.b16 %v4956, %v4952
        %v5029 = vpack.c.b16 %v4957, %v4953
        %v5030 = vpack.c.b16 %v4962, %v4958
        %v5031 = vpack.c.b16 %v4963, %v4959
        %v5032 = vpack.c.b16 %v4964, %v4960
        %v5033 = vpack.c.b16 %v4965, %v4961
        %v5034 = vpack.c.b16 %v4970, %v4966
        %v5035 = vpack.c.b16 %v4971, %v4967
        %v5036 = vpack.c.b16 %v4972, %v4968
        %v5037 = vpack.c.b16 %v4973, %v4969
        %5102 = vmatprep.subr.bf16.mxu0 %v5003
        %5103 = vmatpush1.bf16.msra.mxu0 %v5002
        %5104 = vmatprep.subr.bf16.mxu0 %v4999
        %5105 = vmatpush1.bf16.msra.mxu0 %v4998
        %5106 = vmatprep.subr.bf16.mxu0 %v4995
        %5107 = vmatpush1.bf16.msra.mxu0 %v4994
        %5108 = vmatprep.subr.bf16.mxu0 %v4991
        %5109 = vmatpush1.bf16.msra.mxu0 %v4990
        %5110 = vmatprep.subr.bf16.mxu0 %v4987
        %5111 = vmatpush1.bf16.msra.mxu0 %v4986
        %5112 = vmatprep.subr.bf16.mxu0 %v4983
        %5113 = vmatpush1.bf16.msra.mxu0 %v4982
        %5114 = vmatprep.subr.bf16.mxu0 %v4979
        %5115 = vmatpush1.bf16.msra.mxu0 %v4978
        %5116 = vmatprep.subr.bf16.mxu0 %v4975
        %5117 = vmatpush1.bf16.msra.mxu0 %v4974
        %5118 = vmatprep.subr.bf16.mxu0 %v5035
        %5119 = vmatpush2.bf16.msra.mxu0 %v5034
        %5120 = vmatprep.subr.bf16.mxu0 %v5031
        %5121 = vmatpush2.bf16.msra.mxu0 %v5030
        %5122 = vmatprep.subr.bf16.mxu0 %v5027
        %5123 = vmatpush2.bf16.msra.mxu0 %v5026
        %5124 = vmatprep.subr.bf16.mxu0 %v5023
        %5125 = vmatpush2.bf16.msra.mxu0 %v5022
        %5126 = vmatprep.subr.bf16.mxu0 %v5019
        %5127 = vmatpush2.bf16.msra.mxu0 %v5018
        %5128 = vmatprep.subr.bf16.mxu0 %v5015
        %5129 = vmatpush2.bf16.msra.mxu0 %v5014
        %5130 = vmatprep.subr.bf16.mxu0 %v5011
        %5131 = vmatpush2.bf16.msra.mxu0 %v5010
        %5132 = vmatprep.subr.bf16.mxu0 %v5007
        %5133 = vmatpush2.bf16.msra.mxu0 %v5006
        %5134 = vmatprep.mubr.bf16.mxu0 %v4093
        %5135 = vmatmul.mubr.bf16.gmra.mxu0 %v4092
        %v5136 = vpop.f32.mrf.mxu0
        %v5137 = vadd.f32 0.0, %v5136
        %v5138 = vpop.f32.mrf.mxu0
        %v5139 = vadd.f32 0.0, %v5138
        %v5140 = vpop.f32.mrf.mxu0
        %v5141 = vadd.f32 0.0, %v5140
        %v5142 = vpop.f32.mrf.mxu0
        %v5143 = vadd.f32 0.0, %v5142
        %5144 = vmatprep.mubr.bf16.mxu0 %v4095
        %5145 = vmatmul.mubr.bf16.gmra.mxu0 %v4094
        %v5146 = vpop.f32.mrf.mxu0
        %v5147 = vadd.f32 0.0, %v5146
        %v5148 = vpop.f32.mrf.mxu0
        %v5149 = vadd.f32 0.0, %v5148
        %v5150 = vpop.f32.mrf.mxu0
        %v5151 = vadd.f32 0.0, %v5150
        %v5152 = vpop.f32.mrf.mxu0
        %v5153 = vadd.f32 0.0, %v5152
        %5154 = vmatprep.mubr.bf16.mxu0 %v4097
        %5155 = vmatmul.mubr.bf16.gmra.mxu0 %v4096
        %v5156 = vpop.f32.mrf.mxu0
        %v5157 = vadd.f32 0.0, %v5156
        %v5158 = vpop.f32.mrf.mxu0
        %v5159 = vadd.f32 0.0, %v5158
        %v5160 = vpop.f32.mrf.mxu0
        %v5161 = vadd.f32 0.0, %v5160
        %v5162 = vpop.f32.mrf.mxu0
        %v5163 = vadd.f32 0.0, %v5162
        %5164 = vmatprep.mubr.bf16.mxu0 %v4099
        %5165 = vmatmul.mubr.bf16.gmra.mxu0 %v4098
        %v5166 = vpop.f32.mrf.mxu0
        %v5167 = vadd.f32 0.0, %v5166
        %v5168 = vpop.f32.mrf.mxu0
        %v5169 = vadd.f32 0.0, %v5168
        %v5170 = vpop.f32.mrf.mxu0
        %v5171 = vadd.f32 0.0, %v5170
        %v5172 = vpop.f32.mrf.mxu0
        %v5173 = vadd.f32 0.0, %v5172
        %5174 = vmatprep.mubr.bf16.mxu0 %v4101
        %5175 = vmatmul.mubr.bf16.gmra.mxu0 %v4100
        %v5176 = vpop.f32.mrf.mxu0
        %v5177 = vadd.f32 0.0, %v5176
        %v5178 = vpop.f32.mrf.mxu0
        %v5179 = vadd.f32 0.0, %v5178
        %v5180 = vpop.f32.mrf.mxu0
        %v5181 = vadd.f32 0.0, %v5180
        %v5182 = vpop.f32.mrf.mxu0
        %v5183 = vadd.f32 0.0, %v5182
        %5184 = vmatprep.mubr.bf16.mxu0 %v4103
        %5185 = vmatmul.mubr.bf16.gmra.mxu0 %v4102
        %v5186 = vpop.f32.mrf.mxu0
        %v5187 = vadd.f32 0.0, %v5186
        %v5188 = vpop.f32.mrf.mxu0
        %v5189 = vadd.f32 0.0, %v5188
        %v5190 = vpop.f32.mrf.mxu0
        %v5191 = vadd.f32 0.0, %v5190
        %v5192 = vpop.f32.mrf.mxu0
        %v5193 = vadd.f32 0.0, %v5192
        %5194 = vmatprep.mubr.bf16.mxu0 %v4105
        %5195 = vmatmul.mubr.bf16.gmra.mxu0 %v4104
        %v5196 = vpop.f32.mrf.mxu0
        %v5197 = vadd.f32 0.0, %v5196
        %v5198 = vpop.f32.mrf.mxu0
        %v5199 = vadd.f32 0.0, %v5198
        %v5200 = vpop.f32.mrf.mxu0
        %v5201 = vadd.f32 0.0, %v5200
        %v5202 = vpop.f32.mrf.mxu0
        %v5203 = vadd.f32 0.0, %v5202
        %5204 = vmatprep.mubr.bf16.mxu0 %v4107
        %5205 = vmatmul.mubr.bf16.gmra.mxu0 %v4106
        %v5206 = vpop.f32.mrf.mxu0
        %v5207 = vadd.f32 0.0, %v5206
        %v5208 = vpop.f32.mrf.mxu0
        %v5209 = vadd.f32 0.0, %v5208
        %v5210 = vpop.f32.mrf.mxu0
        %v5211 = vadd.f32 0.0, %v5210
        %v5212 = vpop.f32.mrf.mxu0
        %v5213 = vadd.f32 0.0, %v5212
        %5214 = vdwg.mxu0
        %5215 = vmatprep.subr.bf16.mxu0 %v5005
        %5216 = vmatpush1.bf16.msra.mxu0 %v5004
        %5217 = vmatprep.subr.bf16.mxu0 %v5001
        %5218 = vmatpush1.bf16.msra.mxu0 %v5000
        %5219 = vmatprep.subr.bf16.mxu0 %v4997
        %5220 = vmatpush1.bf16.msra.mxu0 %v4996
        %5221 = vmatprep.subr.bf16.mxu0 %v4993
        %5222 = vmatpush1.bf16.msra.mxu0 %v4992
        %5223 = vmatprep.subr.bf16.mxu0 %v4989
        %5224 = vmatpush1.bf16.msra.mxu0 %v4988
        %5225 = vmatprep.subr.bf16.mxu0 %v4985
        %5226 = vmatpush1.bf16.msra.mxu0 %v4984
        %5227 = vmatprep.subr.bf16.mxu0 %v4981
        %5228 = vmatpush1.bf16.msra.mxu0 %v4980
        %5229 = vmatprep.subr.bf16.mxu0 %v4977
        %5230 = vmatpush1.bf16.msra.mxu0 %v4976
        %5231 = vmatprep.subr.bf16.mxu0 %v5037
        %5232 = vmatpush2.bf16.msra.mxu0 %v5036
        %5233 = vmatprep.subr.bf16.mxu0 %v5033
        %5234 = vmatpush2.bf16.msra.mxu0 %v5032
        %5235 = vmatprep.subr.bf16.mxu0 %v5029
        %5236 = vmatpush2.bf16.msra.mxu0 %v5028
        %5237 = vmatprep.subr.bf16.mxu0 %v5025
        %5238 = vmatpush2.bf16.msra.mxu0 %v5024
        %5239 = vmatprep.subr.bf16.mxu0 %v5021
        %5240 = vmatpush2.bf16.msra.mxu0 %v5020
        %5241 = vmatprep.subr.bf16.mxu0 %v5017
        %5242 = vmatpush2.bf16.msra.mxu0 %v5016
        %5243 = vmatprep.subr.bf16.mxu0 %v5013
        %5244 = vmatpush2.bf16.msra.mxu0 %v5012
        %5245 = vmatprep.subr.bf16.mxu0 %v5009
        %5246 = vmatpush2.bf16.msra.mxu0 %v5008
        %5247 = vmatprep.mubr.bf16.mxu0 %v4093
        %5248 = vmatmul.mubr.bf16.gmra.mxu0 %v4092
        %v5249 = vpop.f32.mrf.mxu0
        %v5250 = vadd.f32 0.0, %v5249
        %v5251 = vpop.f32.mrf.mxu0
        %v5252 = vadd.f32 0.0, %v5251
        %v5253 = vpop.f32.mrf.mxu0
        %v5254 = vadd.f32 0.0, %v5253
        %v5255 = vpop.f32.mrf.mxu0
        %v5256 = vadd.f32 0.0, %v5255
        %5257 = vmatprep.mubr.bf16.mxu0 %v4095
        %5258 = vmatmul.mubr.bf16.gmra.mxu0 %v4094
        %v5259 = vpop.f32.mrf.mxu0
        %v5260 = vadd.f32 0.0, %v5259
        %v5261 = vpop.f32.mrf.mxu0
        %v5262 = vadd.f32 0.0, %v5261
        %v5263 = vpop.f32.mrf.mxu0
        %v5264 = vadd.f32 0.0, %v5263
        %v5265 = vpop.f32.mrf.mxu0
        %v5266 = vadd.f32 0.0, %v5265
        %5267 = vmatprep.mubr.bf16.mxu0 %v4097
        %5268 = vmatmul.mubr.bf16.gmra.mxu0 %v4096
        %v5269 = vpop.f32.mrf.mxu0
        %v5270 = vadd.f32 0.0, %v5269
        %v5271 = vpop.f32.mrf.mxu0
        %v5272 = vadd.f32 0.0, %v5271
        %v5273 = vpop.f32.mrf.mxu0
        %v5274 = vadd.f32 0.0, %v5273
        %v5275 = vpop.f32.mrf.mxu0
        %v5276 = vadd.f32 0.0, %v5275
        %5277 = vmatprep.mubr.bf16.mxu0 %v4099
        %5278 = vmatmul.mubr.bf16.gmra.mxu0 %v4098
        %v5279 = vpop.f32.mrf.mxu0
        %v5280 = vadd.f32 0.0, %v5279
        %v5281 = vpop.f32.mrf.mxu0
        %v5282 = vadd.f32 0.0, %v5281
        %v5283 = vpop.f32.mrf.mxu0
        %v5284 = vadd.f32 0.0, %v5283
        %v5285 = vpop.f32.mrf.mxu0
        %v5286 = vadd.f32 0.0, %v5285
        %5287 = vmatprep.mubr.bf16.mxu0 %v4101
        %5288 = vmatmul.mubr.bf16.gmra.mxu0 %v4100
        %v5289 = vpop.f32.mrf.mxu0
        %v5290 = vadd.f32 0.0, %v5289
        %v5291 = vpop.f32.mrf.mxu0
        %v5292 = vadd.f32 0.0, %v5291
        %v5293 = vpop.f32.mrf.mxu0
        %v5294 = vadd.f32 0.0, %v5293
        %v5295 = vpop.f32.mrf.mxu0
        %v5296 = vadd.f32 0.0, %v5295
        %5297 = vmatprep.mubr.bf16.mxu0 %v4103
        %5298 = vmatmul.mubr.bf16.gmra.mxu0 %v4102
        %v5299 = vpop.f32.mrf.mxu0
        %v5300 = vadd.f32 0.0, %v5299
        %v5301 = vpop.f32.mrf.mxu0
        %v5302 = vadd.f32 0.0, %v5301
        %v5303 = vpop.f32.mrf.mxu0
        %v5304 = vadd.f32 0.0, %v5303
        %v5305 = vpop.f32.mrf.mxu0
        %v5306 = vadd.f32 0.0, %v5305
        %5307 = vmatprep.mubr.bf16.mxu0 %v4105
        %5308 = vmatmul.mubr.bf16.gmra.mxu0 %v4104
        %v5309 = vpop.f32.mrf.mxu0
        %v5310 = vadd.f32 0.0, %v5309
        %v5311 = vpop.f32.mrf.mxu0
        %v5312 = vadd.f32 0.0, %v5311
        %v5313 = vpop.f32.mrf.mxu0
        %v5314 = vadd.f32 0.0, %v5313
        %v5315 = vpop.f32.mrf.mxu0
        %v5316 = vadd.f32 0.0, %v5315
        %5317 = vmatprep.mubr.bf16.mxu0 %v4107
        %5318 = vmatmul.mubr.bf16.gmra.mxu0 %v4106
        %v5319 = vpop.f32.mrf.mxu0
        %v5320 = vadd.f32 0.0, %v5319
        %v5321 = vpop.f32.mrf.mxu0
        %v5322 = vadd.f32 0.0, %v5321
        %v5323 = vpop.f32.mrf.mxu0
        %v5324 = vadd.f32 0.0, %v5323
        %v5325 = vpop.f32.mrf.mxu0
        %v5326 = vadd.f32 0.0, %v5325
        %5327 = vdwg.mxu0
        %v5328 = vxor.u32 %v4527, 2147483648
        %v5329 = vxor.u32 %v4529, 2147483648
        %v5330 = vxor.u32 %v4640, 2147483648
        %v5331 = vxor.u32 %v4642, 2147483648
        %v5332 = vxor.u32 %v4531, 2147483648
        %v5333 = vxor.u32 %v4533, 2147483648
        %v5334 = vxor.u32 %v4644, 2147483648
        %v5335 = vxor.u32 %v4646, 2147483648
        %v5336 = vxor.u32 %v4537, 2147483648
        %v5337 = vxor.u32 %v4539, 2147483648
        %v5338 = vxor.u32 %v4650, 2147483648
        %v5339 = vxor.u32 %v4652, 2147483648
        %v5340 = vxor.u32 %v4541, 2147483648
        %v5341 = vxor.u32 %v4543, 2147483648
        %v5342 = vxor.u32 %v4654, 2147483648
        %v5343 = vxor.u32 %v4656, 2147483648
        %v5344 = vxor.u32 %v4547, 2147483648
        %v5345 = vxor.u32 %v4549, 2147483648
        %v5346 = vxor.u32 %v4660, 2147483648
        %v5347 = vxor.u32 %v4662, 2147483648
        %v5348 = vxor.u32 %v4551, 2147483648
        %v5349 = vxor.u32 %v4553, 2147483648
        %v5350 = vxor.u32 %v4664, 2147483648
        %v5351 = vxor.u32 %v4666, 2147483648
        %v5352 = vxor.u32 %v4557, 2147483648
        %v5353 = vxor.u32 %v4559, 2147483648
        %v5354 = vxor.u32 %v4670, 2147483648
        %v5355 = vxor.u32 %v4672, 2147483648
        %v5356 = vxor.u32 %v4561, 2147483648
        %v5357 = vxor.u32 %v4563, 2147483648
        %v5358 = vxor.u32 %v4674, 2147483648
        %v5359 = vxor.u32 %v4676, 2147483648
        %v5360 = vxor.u32 %v4567, 2147483648
        %v5361 = vxor.u32 %v4569, 2147483648
        %v5362 = vxor.u32 %v4680, 2147483648
        %v5363 = vxor.u32 %v4682, 2147483648
        %v5364 = vxor.u32 %v4571, 2147483648
        %v5365 = vxor.u32 %v4573, 2147483648
        %v5366 = vxor.u32 %v4684, 2147483648
        %v5367 = vxor.u32 %v4686, 2147483648
        %v5368 = vxor.u32 %v4577, 2147483648
        %v5369 = vxor.u32 %v4579, 2147483648
        %v5370 = vxor.u32 %v4690, 2147483648
        %v5371 = vxor.u32 %v4692, 2147483648
        %v5372 = vxor.u32 %v4581, 2147483648
        %v5373 = vxor.u32 %v4583, 2147483648
        %v5374 = vxor.u32 %v4694, 2147483648
        %v5375 = vxor.u32 %v4696, 2147483648
        %v5376 = vxor.u32 %v4587, 2147483648
        %v5377 = vxor.u32 %v4589, 2147483648
        %v5378 = vxor.u32 %v4700, 2147483648
        %v5379 = vxor.u32 %v4702, 2147483648
        %v5380 = vxor.u32 %v4591, 2147483648
        %v5381 = vxor.u32 %v4593, 2147483648
        %v5382 = vxor.u32 %v4704, 2147483648
        %v5383 = vxor.u32 %v4706, 2147483648
        %v5384 = vxor.u32 %v4597, 2147483648
        %v5385 = vxor.u32 %v4599, 2147483648
        %v5386 = vxor.u32 %v4710, 2147483648
        %v5387 = vxor.u32 %v4712, 2147483648
        %v5388 = vxor.u32 %v4601, 2147483648
        %v5389 = vxor.u32 %v4603, 2147483648
        %v5390 = vxor.u32 %v4714, 2147483648
        %v5391 = vxor.u32 %v4716, 2147483648
        %v5392 = vmul.f32 %v5328, 1.442695
        %v5393 = vpow.pop %v5392
        %v5394 = vmul.f32 %v5329, 1.442695
        %v5395 = vpow.pop %v5394
        %v5396 = vmul.f32 %v5330, 1.442695
        %v5397 = vpow.pop %v5396
        %v5398 = vmul.f32 %v5331, 1.442695
        %v5399 = vpow.pop %v5398
        %v5400 = vmul.f32 %v5332, 1.442695
        %v5401 = vpow.pop %v5400
        %v5402 = vmul.f32 %v5333, 1.442695
        %v5403 = vpow.pop %v5402
        %v5404 = vmul.f32 %v5334, 1.442695
        %v5405 = vpow.pop %v5404
        %v5406 = vmul.f32 %v5335, 1.442695
        %v5407 = vpow.pop %v5406
        %v5408 = vmul.f32 %v5336, 1.442695
        %v5409 = vpow.pop %v5408
        %v5410 = vmul.f32 %v5337, 1.442695
        %v5411 = vpow.pop %v5410
        %v5412 = vmul.f32 %v5338, 1.442695
        %v5413 = vpow.pop %v5412
        %v5414 = vmul.f32 %v5339, 1.442695
        %v5415 = vpow.pop %v5414
        %v5416 = vmul.f32 %v5340, 1.442695
        %v5417 = vpow.pop %v5416
        %v5418 = vmul.f32 %v5341, 1.442695
        %v5419 = vpow.pop %v5418
        %v5420 = vmul.f32 %v5342, 1.442695
        %v5421 = vpow.pop %v5420
        %v5422 = vmul.f32 %v5343, 1.442695
        %v5423 = vpow.pop %v5422
        %v5424 = vmul.f32 %v5344, 1.442695
        %v5425 = vpow.pop %v5424
        %v5426 = vmul.f32 %v5345, 1.442695
        %v5427 = vpow.pop %v5426
        %v5428 = vmul.f32 %v5346, 1.442695
        %v5429 = vpow.pop %v5428
        %v5430 = vmul.f32 %v5347, 1.442695
        %v5431 = vpow.pop %v5430
        %v5432 = vmul.f32 %v5348, 1.442695
        %v5433 = vpow.pop %v5432
        %v5434 = vmul.f32 %v5349, 1.442695
        %v5435 = vpow.pop %v5434
        %v5436 = vmul.f32 %v5350, 1.442695
        %v5437 = vpow.pop %v5436
        %v5438 = vmul.f32 %v5351, 1.442695
        %v5439 = vpow.pop %v5438
        %v5440 = vmul.f32 %v5352, 1.442695
        %v5441 = vpow.pop %v5440
        %v5442 = vmul.f32 %v5353, 1.442695
        %v5443 = vpow.pop %v5442
        %v5444 = vmul.f32 %v5354, 1.442695
        %v5445 = vpow.pop %v5444
        %v5446 = vmul.f32 %v5355, 1.442695
        %v5447 = vpow.pop %v5446
        %v5448 = vmul.f32 %v5356, 1.442695
        %v5449 = vpow.pop %v5448
        %v5450 = vmul.f32 %v5357, 1.442695
        %v5451 = vpow.pop %v5450
        %v5452 = vmul.f32 %v5358, 1.442695
        %v5453 = vpow.pop %v5452
        %v5454 = vmul.f32 %v5359, 1.442695
        %v5455 = vpow.pop %v5454
        %v5456 = vmul.f32 %v5360, 1.442695
        %v5457 = vpow.pop %v5456
        %v5458 = vmul.f32 %v5361, 1.442695
        %v5459 = vpow.pop %v5458
        %v5460 = vmul.f32 %v5362, 1.442695
        %v5461 = vpow.pop %v5460
        %v5462 = vmul.f32 %v5363, 1.442695
        %v5463 = vpow.pop %v5462
        %v5464 = vmul.f32 %v5364, 1.442695
        %v5465 = vpow.pop %v5464
        %v5466 = vmul.f32 %v5365, 1.442695
        %v5467 = vpow.pop %v5466
        %v5468 = vmul.f32 %v5366, 1.442695
        %v5469 = vpow.pop %v5468
        %v5470 = vmul.f32 %v5367, 1.442695
        %v5471 = vpow.pop %v5470
        %v5472 = vmul.f32 %v5368, 1.442695
        %v5473 = vpow.pop %v5472
        %v5474 = vmul.f32 %v5369, 1.442695
        %v5475 = vpow.pop %v5474
        %v5476 = vmul.f32 %v5370, 1.442695
        %v5477 = vpow.pop %v5476
        %v5478 = vmul.f32 %v5371, 1.442695
        %v5479 = vpow.pop %v5478
        %v5480 = vmul.f32 %v5372, 1.442695
        %v5481 = vpow.pop %v5480
        %v5482 = vmul.f32 %v5373, 1.442695
        %v5483 = vpow.pop %v5482
        %v5484 = vmul.f32 %v5374, 1.442695
        %v5485 = vpow.pop %v5484
        %v5486 = vmul.f32 %v5375, 1.442695
        %v5487 = vpow.pop %v5486
        %v5488 = vmul.f32 %v5376, 1.442695
        %v5489 = vpow.pop %v5488
        %v5490 = vmul.f32 %v5377, 1.442695
        %v5491 = vpow.pop %v5490
        %v5492 = vmul.f32 %v5378, 1.442695
        %v5493 = vpow.pop %v5492
        %v5494 = vmul.f32 %v5379, 1.442695
        %v5495 = vpow.pop %v5494
        %v5496 = vmul.f32 %v5380, 1.442695
        %v5497 = vpow.pop %v5496
        %v5498 = vmul.f32 %v5381, 1.442695
        %v5499 = vpow.pop %v5498
        %v5500 = vmul.f32 %v5382, 1.442695
        %v5501 = vpow.pop %v5500
        %v5502 = vmul.f32 %v5383, 1.442695
        %v5503 = vpow.pop %v5502
        %v5504 = vmul.f32 %v5384, 1.442695
        %v5505 = vpow.pop %v5504
        %v5506 = vmul.f32 %v5385, 1.442695
        %v5507 = vpow.pop %v5506
        %v5508 = vmul.f32 %v5386, 1.442695
        %v5509 = vpow.pop %v5508
        %v5510 = vmul.f32 %v5387, 1.442695
        %v5511 = vpow.pop %v5510
        %v5512 = vmul.f32 %v5388, 1.442695
        %v5513 = vpow.pop %v5512
        %v5514 = vmul.f32 %v5389, 1.442695
        %v5515 = vpow.pop %v5514
        %v5516 = vmul.f32 %v5390, 1.442695
        %v5517 = vpow.pop %v5516
        %v5518 = vmul.f32 %v5391, 1.442695
        %v5519 = vpow.pop %v5518
        %v5520 = vadd.f32 %v5393, 1.0
        %v5521 = vadd.f32 %v5395, 1.0
        %v5522 = vadd.f32 %v5397, 1.0
        %v5523 = vadd.f32 %v5399, 1.0
        %v5524 = vadd.f32 %v5401, 1.0
        %v5525 = vadd.f32 %v5403, 1.0
        %v5526 = vadd.f32 %v5405, 1.0
        %v5527 = vadd.f32 %v5407, 1.0
        %v5528 = vadd.f32 %v5409, 1.0
        %v5529 = vadd.f32 %v5411, 1.0
        %v5530 = vadd.f32 %v5413, 1.0
        %v5531 = vadd.f32 %v5415, 1.0
        %v5532 = vadd.f32 %v5417, 1.0
        %v5533 = vadd.f32 %v5419, 1.0
        %v5534 = vadd.f32 %v5421, 1.0
        %v5535 = vadd.f32 %v5423, 1.0
        %v5536 = vadd.f32 %v5425, 1.0
        %v5537 = vadd.f32 %v5427, 1.0
        %v5538 = vadd.f32 %v5429, 1.0
        %v5539 = vadd.f32 %v5431, 1.0
        %v5540 = vadd.f32 %v5433, 1.0
        %v5541 = vadd.f32 %v5435, 1.0
        %v5542 = vadd.f32 %v5437, 1.0
        %v5543 = vadd.f32 %v5439, 1.0
        %v5544 = vadd.f32 %v5441, 1.0
        %v5545 = vadd.f32 %v5443, 1.0
        %v5546 = vadd.f32 %v5445, 1.0
        %v5547 = vadd.f32 %v5447, 1.0
        %v5548 = vadd.f32 %v5449, 1.0
        %v5549 = vadd.f32 %v5451, 1.0
        %v5550 = vadd.f32 %v5453, 1.0
        %v5551 = vadd.f32 %v5455, 1.0
        %v5552 = vadd.f32 %v5457, 1.0
        %v5553 = vadd.f32 %v5459, 1.0
        %v5554 = vadd.f32 %v5461, 1.0
        %v5555 = vadd.f32 %v5463, 1.0
        %v5556 = vadd.f32 %v5465, 1.0
        %v5557 = vadd.f32 %v5467, 1.0
        %v5558 = vadd.f32 %v5469, 1.0
        %v5559 = vadd.f32 %v5471, 1.0
        %v5560 = vadd.f32 %v5473, 1.0
        %v5561 = vadd.f32 %v5475, 1.0
        %v5562 = vadd.f32 %v5477, 1.0
        %v5563 = vadd.f32 %v5479, 1.0
        %v5564 = vadd.f32 %v5481, 1.0
        %v5565 = vadd.f32 %v5483, 1.0
        %v5566 = vadd.f32 %v5485, 1.0
        %v5567 = vadd.f32 %v5487, 1.0
        %v5568 = vadd.f32 %v5489, 1.0
        %v5569 = vadd.f32 %v5491, 1.0
        %v5570 = vadd.f32 %v5493, 1.0
        %v5571 = vadd.f32 %v5495, 1.0
        %v5572 = vadd.f32 %v5497, 1.0
        %v5573 = vadd.f32 %v5499, 1.0
        %v5574 = vadd.f32 %v5501, 1.0
        %v5575 = vadd.f32 %v5503, 1.0
        %v5576 = vadd.f32 %v5505, 1.0
        %v5577 = vadd.f32 %v5507, 1.0
        %v5578 = vadd.f32 %v5509, 1.0
        %v5579 = vadd.f32 %v5511, 1.0
        %v5580 = vadd.f32 %v5513, 1.0
        %v5581 = vadd.f32 %v5515, 1.0
        %v5582 = vadd.f32 %v5517, 1.0
        %v5583 = vadd.f32 %v5519, 1.0
        %v5584 = vrcp.pop %v5520
        %v5585 = vmul.f32 1.0, %v5584
        %v5586 = vrcp.pop %v5521
        %v5587 = vmul.f32 1.0, %v5586
        %v5588 = vrcp.pop %v5522
        %v5589 = vmul.f32 1.0, %v5588
        %v5590 = vrcp.pop %v5523
        %v5591 = vmul.f32 1.0, %v5590
        %v5592 = vrcp.pop %v5524
        %v5593 = vmul.f32 1.0, %v5592
        %v5594 = vrcp.pop %v5525
        %v5595 = vmul.f32 1.0, %v5594
        %v5596 = vrcp.pop %v5526
        %v5597 = vmul.f32 1.0, %v5596
        %v5598 = vrcp.pop %v5527
        %v5599 = vmul.f32 1.0, %v5598
        %v5600 = vrcp.pop %v5528
        %v5601 = vmul.f32 1.0, %v5600
        %v5602 = vrcp.pop %v5529
        %v5603 = vmul.f32 1.0, %v5602
        %v5604 = vrcp.pop %v5530
        %v5605 = vmul.f32 1.0, %v5604
        %v5606 = vrcp.pop %v5531
        %v5607 = vmul.f32 1.0, %v5606
        %v5608 = vrcp.pop %v5532
        %v5609 = vmul.f32 1.0, %v5608
        %v5610 = vrcp.pop %v5533
        %v5611 = vmul.f32 1.0, %v5610
        %v5612 = vrcp.pop %v5534
        %v5613 = vmul.f32 1.0, %v5612
        %v5614 = vrcp.pop %v5535
        %v5615 = vmul.f32 1.0, %v5614
        %v5616 = vrcp.pop %v5536
        %v5617 = vmul.f32 1.0, %v5616
        %v5618 = vrcp.pop %v5537
        %v5619 = vmul.f32 1.0, %v5618
        %v5620 = vrcp.pop %v5538
        %v5621 = vmul.f32 1.0, %v5620
        %v5622 = vrcp.pop %v5539
        %v5623 = vmul.f32 1.0, %v5622
        %v5624 = vrcp.pop %v5540
        %v5625 = vmul.f32 1.0, %v5624
        %v5626 = vrcp.pop %v5541
        %v5627 = vmul.f32 1.0, %v5626
        %v5628 = vrcp.pop %v5542
        %v5629 = vmul.f32 1.0, %v5628
        %v5630 = vrcp.pop %v5543
        %v5631 = vmul.f32 1.0, %v5630
        %v5632 = vrcp.pop %v5544
        %v5633 = vmul.f32 1.0, %v5632
        %v5634 = vrcp.pop %v5545
        %v5635 = vmul.f32 1.0, %v5634
        %v5636 = vrcp.pop %v5546
        %v5637 = vmul.f32 1.0, %v5636
        %v5638 = vrcp.pop %v5547
        %v5639 = vmul.f32 1.0, %v5638
        %v5640 = vrcp.pop %v5548
        %v5641 = vmul.f32 1.0, %v5640
        %v5642 = vrcp.pop %v5549
        %v5643 = vmul.f32 1.0, %v5642
        %v5644 = vrcp.pop %v5550
        %v5645 = vmul.f32 1.0, %v5644
        %v5646 = vrcp.pop %v5551
        %v5647 = vmul.f32 1.0, %v5646
        %v5648 = vrcp.pop %v5552
        %v5649 = vmul.f32 1.0, %v5648
        %v5650 = vrcp.pop %v5553
        %v5651 = vmul.f32 1.0, %v5650
        %v5652 = vrcp.pop %v5554
        %v5653 = vmul.f32 1.0, %v5652
        %v5654 = vrcp.pop %v5555
        %v5655 = vmul.f32 1.0, %v5654
        %v5656 = vrcp.pop %v5556
        %v5657 = vmul.f32 1.0, %v5656
        %v5658 = vrcp.pop %v5557
        %v5659 = vmul.f32 1.0, %v5658
        %v5660 = vrcp.pop %v5558
        %v5661 = vmul.f32 1.0, %v5660
        %v5662 = vrcp.pop %v5559
        %v5663 = vmul.f32 1.0, %v5662
        %v5664 = vrcp.pop %v5560
        %v5665 = vmul.f32 1.0, %v5664
        %v5666 = vrcp.pop %v5561
        %v5667 = vmul.f32 1.0, %v5666
        %v5668 = vrcp.pop %v5562
        %v5669 = vmul.f32 1.0, %v5668
        %v5670 = vrcp.pop %v5563
        %v5671 = vmul.f32 1.0, %v5670
        %v5672 = vrcp.pop %v5564
        %v5673 = vmul.f32 1.0, %v5672
        %v5674 = vrcp.pop %v5565
        %v5675 = vmul.f32 1.0, %v5674
        %v5676 = vrcp.pop %v5566
        %v5677 = vmul.f32 1.0, %v5676
        %v5678 = vrcp.pop %v5567
        %v5679 = vmul.f32 1.0, %v5678
        %v5680 = vrcp.pop %v5568
        %v5681 = vmul.f32 1.0, %v5680
        %v5682 = vrcp.pop %v5569
        %v5683 = vmul.f32 1.0, %v5682
        %v5684 = vrcp.pop %v5570
        %v5685 = vmul.f32 1.0, %v5684
        %v5686 = vrcp.pop %v5571
        %v5687 = vmul.f32 1.0, %v5686
        %v5688 = vrcp.pop %v5572
        %v5689 = vmul.f32 1.0, %v5688
        %v5690 = vrcp.pop %v5573
        %v5691 = vmul.f32 1.0, %v5690
        %v5692 = vrcp.pop %v5574
        %v5693 = vmul.f32 1.0, %v5692
        %v5694 = vrcp.pop %v5575
        %v5695 = vmul.f32 1.0, %v5694
        %v5696 = vrcp.pop %v5576
        %v5697 = vmul.f32 1.0, %v5696
        %v5698 = vrcp.pop %v5577
        %v5699 = vmul.f32 1.0, %v5698
        %v5700 = vrcp.pop %v5578
        %v5701 = vmul.f32 1.0, %v5700
        %v5702 = vrcp.pop %v5579
        %v5703 = vmul.f32 1.0, %v5702
        %v5704 = vrcp.pop %v5580
        %v5705 = vmul.f32 1.0, %v5704
        %v5706 = vrcp.pop %v5581
        %v5707 = vmul.f32 1.0, %v5706
        %v5708 = vrcp.pop %v5582
        %v5709 = vmul.f32 1.0, %v5708
        %v5710 = vrcp.pop %v5583
        %v5711 = vmul.f32 1.0, %v5710
        %v5712 = vmul.f32 %v4527, %v5585
        %v5713 = vmul.f32 %v4529, %v5587
        %v5714 = vmul.f32 %v4640, %v5589
        %v5715 = vmul.f32 %v4642, %v5591
        %v5716 = vmul.f32 %v4531, %v5593
        %v5717 = vmul.f32 %v4533, %v5595
        %v5718 = vmul.f32 %v4644, %v5597
        %v5719 = vmul.f32 %v4646, %v5599
        %v5720 = vmul.f32 %v4537, %v5601
        %v5721 = vmul.f32 %v4539, %v5603
        %v5722 = vmul.f32 %v4650, %v5605
        %v5723 = vmul.f32 %v4652, %v5607
        %v5724 = vmul.f32 %v4541, %v5609
        %v5725 = vmul.f32 %v4543, %v5611
        %v5726 = vmul.f32 %v4654, %v5613
        %v5727 = vmul.f32 %v4656, %v5615
        %v5728 = vmul.f32 %v4547, %v5617
        %v5729 = vmul.f32 %v4549, %v5619
        %v5730 = vmul.f32 %v4660, %v5621
        %v5731 = vmul.f32 %v4662, %v5623
        %v5732 = vmul.f32 %v4551, %v5625
        %v5733 = vmul.f32 %v4553, %v5627
        %v5734 = vmul.f32 %v4664, %v5629
        %v5735 = vmul.f32 %v4666, %v5631
        %v5736 = vmul.f32 %v4557, %v5633
        %v5737 = vmul.f32 %v4559, %v5635
        %v5738 = vmul.f32 %v4670, %v5637
        %v5739 = vmul.f32 %v4672, %v5639
        %v5740 = vmul.f32 %v4561, %v5641
        %v5741 = vmul.f32 %v4563, %v5643
        %v5742 = vmul.f32 %v4674, %v5645
        %v5743 = vmul.f32 %v4676, %v5647
        %v5744 = vmul.f32 %v4567, %v5649
        %v5745 = vmul.f32 %v4569, %v5651
        %v5746 = vmul.f32 %v4680, %v5653
        %v5747 = vmul.f32 %v4682, %v5655
        %v5748 = vmul.f32 %v4571, %v5657
        %v5749 = vmul.f32 %v4573, %v5659
        %v5750 = vmul.f32 %v4684, %v5661
        %v5751 = vmul.f32 %v4686, %v5663
        %v5752 = vmul.f32 %v4577, %v5665
        %v5753 = vmul.f32 %v4579, %v5667
        %v5754 = vmul.f32 %v4690, %v5669
        %v5755 = vmul.f32 %v4692, %v5671
        %v5756 = vmul.f32 %v4581, %v5673
        %v5757 = vmul.f32 %v4583, %v5675
        %v5758 = vmul.f32 %v4694, %v5677
        %v5759 = vmul.f32 %v4696, %v5679
        %v5760 = vmul.f32 %v4587, %v5681
        %v5761 = vmul.f32 %v4589, %v5683
        %v5762 = vmul.f32 %v4700, %v5685
        %v5763 = vmul.f32 %v4702, %v5687
        %v5764 = vmul.f32 %v4591, %v5689
        %v5765 = vmul.f32 %v4593, %v5691
        %v5766 = vmul.f32 %v4704, %v5693
        %v5767 = vmul.f32 %v4706, %v5695
        %v5768 = vmul.f32 %v4597, %v5697
        %v5769 = vmul.f32 %v4599, %v5699
        %v5770 = vmul.f32 %v4710, %v5701
        %v5771 = vmul.f32 %v4712, %v5703
        %v5772 = vmul.f32 %v4601, %v5705
        %v5773 = vmul.f32 %v4603, %v5707
        %v5774 = vmul.f32 %v4714, %v5709
        %v5775 = vmul.f32 %v4716, %v5711
        %v5776 = vmul.f32 %v5712, %v5137
        %v5777 = vmul.f32 %v5713, %v5139
        %v5778 = vmul.f32 %v5714, %v5250
        %v5779 = vmul.f32 %v5715, %v5252
        %v5780 = vmul.f32 %v5716, %v5141
        %v5781 = vmul.f32 %v5717, %v5143
        %v5782 = vmul.f32 %v5718, %v5254
        %v5783 = vmul.f32 %v5719, %v5256
        %v5784 = vmul.f32 %v5720, %v5147
        %v5785 = vmul.f32 %v5721, %v5149
        %v5786 = vmul.f32 %v5722, %v5260
        %v5787 = vmul.f32 %v5723, %v5262
        %v5788 = vmul.f32 %v5724, %v5151
        %v5789 = vmul.f32 %v5725, %v5153
        %v5790 = vmul.f32 %v5726, %v5264
        %v5791 = vmul.f32 %v5727, %v5266
        %v5792 = vmul.f32 %v5728, %v5157
        %v5793 = vmul.f32 %v5729, %v5159
        %v5794 = vmul.f32 %v5730, %v5270
        %v5795 = vmul.f32 %v5731, %v5272
        %v5796 = vmul.f32 %v5732, %v5161
        %v5797 = vmul.f32 %v5733, %v5163
        %v5798 = vmul.f32 %v5734, %v5274
        %v5799 = vmul.f32 %v5735, %v5276
        %v5800 = vmul.f32 %v5736, %v5167
        %v5801 = vmul.f32 %v5737, %v5169
        %v5802 = vmul.f32 %v5738, %v5280
        %v5803 = vmul.f32 %v5739, %v5282
        %v5804 = vmul.f32 %v5740, %v5171
        %v5805 = vmul.f32 %v5741, %v5173
        %v5806 = vmul.f32 %v5742, %v5284
        %v5807 = vmul.f32 %v5743, %v5286
        %v5808 = vmul.f32 %v5744, %v5177
        %v5809 = vmul.f32 %v5745, %v5179
        %v5810 = vmul.f32 %v5746, %v5290
        %v5811 = vmul.f32 %v5747, %v5292
        %v5812 = vmul.f32 %v5748, %v5181
        %v5813 = vmul.f32 %v5749, %v5183
        %v5814 = vmul.f32 %v5750, %v5294
        %v5815 = vmul.f32 %v5751, %v5296
        %v5816 = vmul.f32 %v5752, %v5187
        %v5817 = vmul.f32 %v5753, %v5189
        %v5818 = vmul.f32 %v5754, %v5300
        %v5819 = vmul.f32 %v5755, %v5302
        %v5820 = vmul.f32 %v5756, %v5191
        %v5821 = vmul.f32 %v5757, %v5193
        %v5822 = vmul.f32 %v5758, %v5304
        %v5823 = vmul.f32 %v5759, %v5306
        %v5824 = vmul.f32 %v5760, %v5197
        %v5825 = vmul.f32 %v5761, %v5199
        %v5826 = vmul.f32 %v5762, %v5310
        %v5827 = vmul.f32 %v5763, %v5312
        %v5828 = vmul.f32 %v5764, %v5201
        %v5829 = vmul.f32 %v5765, %v5203
        %v5830 = vmul.f32 %v5766, %v5314
        %v5831 = vmul.f32 %v5767, %v5316
        %v5832 = vmul.f32 %v5768, %v5207
        %v5833 = vmul.f32 %v5769, %v5209
        %v5834 = vmul.f32 %v5770, %v5320
        %v5835 = vmul.f32 %v5771, %v5322
        %v5836 = vmul.f32 %v5772, %v5211
        %v5837 = vmul.f32 %v5773, %v5213
        %v5838 = vmul.f32 %v5774, %v5324
        %v5839 = vmul.f32 %v5775, %v5326
        %v5840 = vpack.c.bf16 %v5780, %v5776
        %v5841 = vpack.c.bf16 %v5781, %v5777
        %v5842 = vpack.c.bf16 %v5782, %v5778
        %v5843 = vpack.c.bf16 %v5783, %v5779
        %v5844 = vpack.c.bf16 %v5788, %v5784
        %v5845 = vpack.c.bf16 %v5789, %v5785
        %v5846 = vpack.c.bf16 %v5790, %v5786
        %v5847 = vpack.c.bf16 %v5791, %v5787
        %v5848 = vpack.c.bf16 %v5796, %v5792
        %v5849 = vpack.c.bf16 %v5797, %v5793
        %v5850 = vpack.c.bf16 %v5798, %v5794
        %v5851 = vpack.c.bf16 %v5799, %v5795
        %v5852 = vpack.c.bf16 %v5804, %v5800
        %v5853 = vpack.c.bf16 %v5805, %v5801
        %v5854 = vpack.c.bf16 %v5806, %v5802
        %v5855 = vpack.c.bf16 %v5807, %v5803
        %v5856 = vpack.c.bf16 %v5812, %v5808
        %v5857 = vpack.c.bf16 %v5813, %v5809
        %v5858 = vpack.c.bf16 %v5814, %v5810
        %v5859 = vpack.c.bf16 %v5815, %v5811
        %v5860 = vpack.c.bf16 %v5820, %v5816
        %v5861 = vpack.c.bf16 %v5821, %v5817
        %v5862 = vpack.c.bf16 %v5822, %v5818
        %v5863 = vpack.c.bf16 %v5823, %v5819
        %v5864 = vpack.c.bf16 %v5828, %v5824
        %v5865 = vpack.c.bf16 %v5829, %v5825
        %v5866 = vpack.c.bf16 %v5830, %v5826
        %v5867 = vpack.c.bf16 %v5831, %v5827
        %v5868 = vpack.c.bf16 %v5836, %v5832
        %v5869 = vpack.c.bf16 %v5837, %v5833
        %v5870 = vpack.c.bf16 %v5838, %v5834
        %v5871 = vpack.c.bf16 %v5839, %v5835
        %v5872 = vld [vmem:[#allocation17] sm:$0xff]
        %v5873 = vld [vmem:[#allocation17 + $0x8] sm:$0xff]
        %v5874 = vld [vmem:[#allocation17 + $0x10] sm:$0xff]
        %v5875 = vld [vmem:[#allocation17 + $0x18] sm:$0xff]
        %v5876 = vld [vmem:[#allocation17 + $0x20] sm:$0xff]
        %v5877 = vld [vmem:[#allocation17 + $0x28] sm:$0xff]
        %v5878 = vld [vmem:[#allocation17 + $0x30] sm:$0xff]
        %v5879 = vld [vmem:[#allocation17 + $0x38] sm:$0xff]
        %v5880 = vld [vmem:[#allocation17 + $0x40] sm:$0xff]
        %v5881 = vld [vmem:[#allocation17 + $0x48] sm:$0xff]
        %v5882 = vld [vmem:[#allocation17 + $0x50] sm:$0xff]
        %v5883 = vld [vmem:[#allocation17 + $0x58] sm:$0xff]
        %v5884 = vld [vmem:[#allocation17 + $0x60] sm:$0xff]
        %v5885 = vld [vmem:[#allocation17 + $0x68] sm:$0xff]
        %v5886 = vld [vmem:[#allocation17 + $0x70] sm:$0xff]
        %v5887 = vld [vmem:[#allocation17 + $0x78] sm:$0xff]
        %v5888 = vld [vmem:[#allocation17 + $0x80] sm:$0xff]
        %v5889 = vld [vmem:[#allocation17 + $0x88] sm:$0xff]
        %v5890 = vld [vmem:[#allocation17 + $0x90] sm:$0xff]
        %v5891 = vld [vmem:[#allocation17 + $0x98] sm:$0xff]
        %v5892 = vld [vmem:[#allocation17 + $0xa0] sm:$0xff]
        %v5893 = vld [vmem:[#allocation17 + $0xa8] sm:$0xff]
        %v5894 = vld [vmem:[#allocation17 + $0xb0] sm:$0xff]
        %v5895 = vld [vmem:[#allocation17 + $0xb8] sm:$0xff]
        %v5896 = vld [vmem:[#allocation17 + $0xc0] sm:$0xff]
        %v5897 = vld [vmem:[#allocation17 + $0xc8] sm:$0xff]
        %v5898 = vld [vmem:[#allocation17 + $0xd0] sm:$0xff]
        %v5899 = vld [vmem:[#allocation17 + $0xd8] sm:$0xff]
        %v5900 = vld [vmem:[#allocation17 + $0xe0] sm:$0xff]
        %v5901 = vld [vmem:[#allocation17 + $0xe8] sm:$0xff]
        %v5902 = vld [vmem:[#allocation17 + $0xf0] sm:$0xff]
        %v5903 = vld [vmem:[#allocation17 + $0xf8] sm:$0xff]
        %v5904 = vld [vmem:[#allocation17 + $0x100] sm:$0xff]
        %v5905 = vld [vmem:[#allocation17 + $0x108] sm:$0xff]
        %v5906 = vld [vmem:[#allocation17 + $0x110] sm:$0xff]
        %v5907 = vld [vmem:[#allocation17 + $0x118] sm:$0xff]
        %v5908 = vld [vmem:[#allocation17 + $0x120] sm:$0xff]
        %v5909 = vld [vmem:[#allocation17 + $0x128] sm:$0xff]
        %v5910 = vld [vmem:[#allocation17 + $0x130] sm:$0xff]
        %v5911 = vld [vmem:[#allocation17 + $0x138] sm:$0xff]
        %v5912 = vld [vmem:[#allocation17 + $0x140] sm:$0xff]
        %v5913 = vld [vmem:[#allocation17 + $0x148] sm:$0xff]
        %v5914 = vld [vmem:[#allocation17 + $0x150] sm:$0xff]
        %v5915 = vld [vmem:[#allocation17 + $0x158] sm:$0xff]
        %v5916 = vld [vmem:[#allocation17 + $0x160] sm:$0xff]
        %v5917 = vld [vmem:[#allocation17 + $0x168] sm:$0xff]
        %v5918 = vld [vmem:[#allocation17 + $0x170] sm:$0xff]
        %v5919 = vld [vmem:[#allocation17 + $0x178] sm:$0xff]
        %v5920 = vld [vmem:[#allocation17 + $0x180] sm:$0xff]
        %v5921 = vld [vmem:[#allocation17 + $0x188] sm:$0xff]
        %v5922 = vld [vmem:[#allocation17 + $0x190] sm:$0xff]
        %v5923 = vld [vmem:[#allocation17 + $0x198] sm:$0xff]
        %v5924 = vld [vmem:[#allocation17 + $0x1a0] sm:$0xff]
        %v5925 = vld [vmem:[#allocation17 + $0x1a8] sm:$0xff]
        %v5926 = vld [vmem:[#allocation17 + $0x1b0] sm:$0xff]
        %v5927 = vld [vmem:[#allocation17 + $0x1b8] sm:$0xff]
        %v5928 = vld [vmem:[#allocation17 + $0x1c0] sm:$0xff]
        %v5929 = vld [vmem:[#allocation17 + $0x1c8] sm:$0xff]
        %v5930 = vld [vmem:[#allocation17 + $0x1d0] sm:$0xff]
        %v5931 = vld [vmem:[#allocation17 + $0x1d8] sm:$0xff]
        %v5932 = vld [vmem:[#allocation17 + $0x1e0] sm:$0xff]
        %v5933 = vld [vmem:[#allocation17 + $0x1e8] sm:$0xff]
        %v5934 = vld [vmem:[#allocation17 + $0x1f0] sm:$0xff]
        %v5935 = vld [vmem:[#allocation17 + $0x1f8] sm:$0xff]
        %v6000 = vunpack.c.l.b16 %v5872
        %v6001 = vunpack.c.h.b16 %v5872
        %v6002 = vunpack.c.l.b16 %v5873
        %v6003 = vunpack.c.h.b16 %v5873
        %v6004 = vunpack.c.l.b16 %v5874
        %v6005 = vunpack.c.h.b16 %v5874
        %v6006 = vunpack.c.l.b16 %v5875
        %v6007 = vunpack.c.h.b16 %v5875
        %v6008 = vunpack.c.l.b16 %v5876
        %v6009 = vunpack.c.h.b16 %v5876
        %v6010 = vunpack.c.l.b16 %v5877
        %v6011 = vunpack.c.h.b16 %v5877
        %v6012 = vunpack.c.l.b16 %v5878
        %v6013 = vunpack.c.h.b16 %v5878
        %v6014 = vunpack.c.l.b16 %v5879
        %v6015 = vunpack.c.h.b16 %v5879
        %v6016 = vunpack.c.l.b16 %v5880
        %v6017 = vunpack.c.h.b16 %v5880
        %v6018 = vunpack.c.l.b16 %v5881
        %v6019 = vunpack.c.h.b16 %v5881
        %v6020 = vunpack.c.l.b16 %v5882
        %v6021 = vunpack.c.h.b16 %v5882
        %v6022 = vunpack.c.l.b16 %v5883
        %v6023 = vunpack.c.h.b16 %v5883
        %v6024 = vunpack.c.l.b16 %v5884
        %v6025 = vunpack.c.h.b16 %v5884
        %v6026 = vunpack.c.l.b16 %v5885
        %v6027 = vunpack.c.h.b16 %v5885
        %v6028 = vunpack.c.l.b16 %v5886
        %v6029 = vunpack.c.h.b16 %v5886
        %v6030 = vunpack.c.l.b16 %v5887
        %v6031 = vunpack.c.h.b16 %v5887
        %v6032 = vunpack.c.l.b16 %v5888
        %v6033 = vunpack.c.h.b16 %v5888
        %v6034 = vunpack.c.l.b16 %v5889
        %v6035 = vunpack.c.h.b16 %v5889
        %v6036 = vunpack.c.l.b16 %v5890
        %v6037 = vunpack.c.h.b16 %v5890
        %v6038 = vunpack.c.l.b16 %v5891
        %v6039 = vunpack.c.h.b16 %v5891
        %v6040 = vunpack.c.l.b16 %v5892
        %v6041 = vunpack.c.h.b16 %v5892
        %v6042 = vunpack.c.l.b16 %v5893
        %v6043 = vunpack.c.h.b16 %v5893
        %v6044 = vunpack.c.l.b16 %v5894
        %v6045 = vunpack.c.h.b16 %v5894
        %v6046 = vunpack.c.l.b16 %v5895
        %v6047 = vunpack.c.h.b16 %v5895
        %v6048 = vunpack.c.l.b16 %v5896
        %v6049 = vunpack.c.h.b16 %v5896
        %v6050 = vunpack.c.l.b16 %v5897
        %v6051 = vunpack.c.h.b16 %v5897
        %v6052 = vunpack.c.l.b16 %v5898
        %v6053 = vunpack.c.h.b16 %v5898
        %v6054 = vunpack.c.l.b16 %v5899
        %v6055 = vunpack.c.h.b16 %v5899
        %v6056 = vunpack.c.l.b16 %v5900
        %v6057 = vunpack.c.h.b16 %v5900
        %v6058 = vunpack.c.l.b16 %v5901
        %v6059 = vunpack.c.h.b16 %v5901
        %v6060 = vunpack.c.l.b16 %v5902
        %v6061 = vunpack.c.h.b16 %v5902
        %v6062 = vunpack.c.l.b16 %v5903
        %v6063 = vunpack.c.h.b16 %v5903
        %v6064 = vunpack.c.l.b16 %v5904
        %v6065 = vunpack.c.h.b16 %v5904
        %v6066 = vunpack.c.l.b16 %v5905
        %v6067 = vunpack.c.h.b16 %v5905
        %v6068 = vunpack.c.l.b16 %v5906
        %v6069 = vunpack.c.h.b16 %v5906
        %v6070 = vunpack.c.l.b16 %v5907
        %v6071 = vunpack.c.h.b16 %v5907
        %v6072 = vunpack.c.l.b16 %v5908
        %v6073 = vunpack.c.h.b16 %v5908
        %v6074 = vunpack.c.l.b16 %v5909
        %v6075 = vunpack.c.h.b16 %v5909
        %v6076 = vunpack.c.l.b16 %v5910
        %v6077 = vunpack.c.h.b16 %v5910
        %v6078 = vunpack.c.l.b16 %v5911
        %v6079 = vunpack.c.h.b16 %v5911
        %v6080 = vunpack.c.l.b16 %v5912
        %v6081 = vunpack.c.h.b16 %v5912
        %v6082 = vunpack.c.l.b16 %v5913
        %v6083 = vunpack.c.h.b16 %v5913
        %v6084 = vunpack.c.l.b16 %v5914
        %v6085 = vunpack.c.h.b16 %v5914
        %v6086 = vunpack.c.l.b16 %v5915
        %v6087 = vunpack.c.h.b16 %v5915
        %v6088 = vunpack.c.l.b16 %v5916
        %v6089 = vunpack.c.h.b16 %v5916
        %v6090 = vunpack.c.l.b16 %v5917
        %v6091 = vunpack.c.h.b16 %v5917
        %v6092 = vunpack.c.l.b16 %v5918
        %v6093 = vunpack.c.h.b16 %v5918
        %v6094 = vunpack.c.l.b16 %v5919
        %v6095 = vunpack.c.h.b16 %v5919
        %v6096 = vunpack.c.l.b16 %v5920
        %v6097 = vunpack.c.h.b16 %v5920
        %v6098 = vunpack.c.l.b16 %v5921
        %v6099 = vunpack.c.h.b16 %v5921
        %v6100 = vunpack.c.l.b16 %v5922
        %v6101 = vunpack.c.h.b16 %v5922
        %v6102 = vunpack.c.l.b16 %v5923
        %v6103 = vunpack.c.h.b16 %v5923
        %v6104 = vunpack.c.l.b16 %v5924
        %v6105 = vunpack.c.h.b16 %v5924
        %v6106 = vunpack.c.l.b16 %v5925
        %v6107 = vunpack.c.h.b16 %v5925
        %v6108 = vunpack.c.l.b16 %v5926
        %v6109 = vunpack.c.h.b16 %v5926
        %v6110 = vunpack.c.l.b16 %v5927
        %v6111 = vunpack.c.h.b16 %v5927
        %v6112 = vunpack.c.l.b16 %v5928
        %v6113 = vunpack.c.h.b16 %v5928
        %v6114 = vunpack.c.l.b16 %v5929
        %v6115 = vunpack.c.h.b16 %v5929
        %v6116 = vunpack.c.l.b16 %v5930
        %v6117 = vunpack.c.h.b16 %v5930
        %v6118 = vunpack.c.l.b16 %v5931
        %v6119 = vunpack.c.h.b16 %v5931
        %v6120 = vunpack.c.l.b16 %v5932
        %v6121 = vunpack.c.h.b16 %v5932
        %v6122 = vunpack.c.l.b16 %v5933
        %v6123 = vunpack.c.h.b16 %v5933
        %v6124 = vunpack.c.l.b16 %v5934
        %v6125 = vunpack.c.h.b16 %v5934
        %v6126 = vunpack.c.l.b16 %v5935
        %v6127 = vunpack.c.h.b16 %v5935
        %v6128 = vpack.c.b16 %v6002, %v6000
        %v6129 = vpack.c.b16 %v6003, %v6001
        %v6130 = vpack.c.b16 %v6006, %v6004
        %v6131 = vpack.c.b16 %v6007, %v6005
        %v6132 = vpack.c.b16 %v6010, %v6008
        %v6133 = vpack.c.b16 %v6011, %v6009
        %v6134 = vpack.c.b16 %v6014, %v6012
        %v6135 = vpack.c.b16 %v6015, %v6013
        %v6136 = vpack.c.b16 %v6018, %v6016
        %v6137 = vpack.c.b16 %v6019, %v6017
        %v6138 = vpack.c.b16 %v6022, %v6020
        %v6139 = vpack.c.b16 %v6023, %v6021
        %v6140 = vpack.c.b16 %v6026, %v6024
        %v6141 = vpack.c.b16 %v6027, %v6025
        %v6142 = vpack.c.b16 %v6030, %v6028
        %v6143 = vpack.c.b16 %v6031, %v6029
        %v6144 = vpack.c.b16 %v6034, %v6032
        %v6145 = vpack.c.b16 %v6035, %v6033
        %v6146 = vpack.c.b16 %v6038, %v6036
        %v6147 = vpack.c.b16 %v6039, %v6037
        %v6148 = vpack.c.b16 %v6042, %v6040
        %v6149 = vpack.c.b16 %v6043, %v6041
        %v6150 = vpack.c.b16 %v6046, %v6044
        %v6151 = vpack.c.b16 %v6047, %v6045
        %v6152 = vpack.c.b16 %v6050, %v6048
        %v6153 = vpack.c.b16 %v6051, %v6049
        %v6154 = vpack.c.b16 %v6054, %v6052
        %v6155 = vpack.c.b16 %v6055, %v6053
        %v6156 = vpack.c.b16 %v6058, %v6056
        %v6157 = vpack.c.b16 %v6059, %v6057
        %v6158 = vpack.c.b16 %v6062, %v6060
        %v6159 = vpack.c.b16 %v6063, %v6061
        %v6160 = vpack.c.b16 %v6066, %v6064
        %v6161 = vpack.c.b16 %v6067, %v6065
        %v6162 = vpack.c.b16 %v6070, %v6068
        %v6163 = vpack.c.b16 %v6071, %v6069
        %v6164 = vpack.c.b16 %v6074, %v6072
        %v6165 = vpack.c.b16 %v6075, %v6073
        %v6166 = vpack.c.b16 %v6078, %v6076
        %v6167 = vpack.c.b16 %v6079, %v6077
        %v6168 = vpack.c.b16 %v6082, %v6080
        %v6169 = vpack.c.b16 %v6083, %v6081
        %v6170 = vpack.c.b16 %v6086, %v6084
        %v6171 = vpack.c.b16 %v6087, %v6085
        %v6172 = vpack.c.b16 %v6090, %v6088
        %v6173 = vpack.c.b16 %v6091, %v6089
        %v6174 = vpack.c.b16 %v6094, %v6092
        %v6175 = vpack.c.b16 %v6095, %v6093
        %v6176 = vpack.c.b16 %v6098, %v6096
        %v6177 = vpack.c.b16 %v6099, %v6097
        %v6178 = vpack.c.b16 %v6102, %v6100
        %v6179 = vpack.c.b16 %v6103, %v6101
        %v6180 = vpack.c.b16 %v6106, %v6104
        %v6181 = vpack.c.b16 %v6107, %v6105
        %v6182 = vpack.c.b16 %v6110, %v6108
        %v6183 = vpack.c.b16 %v6111, %v6109
        %v6184 = vpack.c.b16 %v6114, %v6112
        %v6185 = vpack.c.b16 %v6115, %v6113
        %v6186 = vpack.c.b16 %v6118, %v6116
        %v6187 = vpack.c.b16 %v6119, %v6117
        %v6188 = vpack.c.b16 %v6122, %v6120
        %v6189 = vpack.c.b16 %v6123, %v6121
        %v6190 = vpack.c.b16 %v6126, %v6124
        %v6191 = vpack.c.b16 %v6127, %v6125
        %6256 = vmatprep.subr.bf16.mxu0 %v6143
        %6257 = vmatpush1.bf16.msra.mxu0 %v6142
        %6258 = vmatprep.subr.bf16.mxu0 %v6141
        %6259 = vmatpush1.bf16.msra.mxu0 %v6140
        %6260 = vmatprep.subr.bf16.mxu0 %v6139
        %6261 = vmatpush1.bf16.msra.mxu0 %v6138
        %6262 = vmatprep.subr.bf16.mxu0 %v6137
        %6263 = vmatpush1.bf16.msra.mxu0 %v6136
        %6264 = vmatprep.subr.bf16.mxu0 %v6135
        %6265 = vmatpush1.bf16.msra.mxu0 %v6134
        %6266 = vmatprep.subr.bf16.mxu0 %v6133
        %6267 = vmatpush1.bf16.msra.mxu0 %v6132
        %6268 = vmatprep.subr.bf16.mxu0 %v6131
        %6269 = vmatpush1.bf16.msra.mxu0 %v6130
        %6270 = vmatprep.subr.bf16.mxu0 %v6129
        %6271 = vmatpush1.bf16.msra.mxu0 %v6128
        %6272 = vmatprep.subr.bf16.mxu0 %v6159
        %6273 = vmatpush2.bf16.msra.mxu0 %v6158
        %6274 = vmatprep.subr.bf16.mxu0 %v6157
        %6275 = vmatpush2.bf16.msra.mxu0 %v6156
        %6276 = vmatprep.subr.bf16.mxu0 %v6155
        %6277 = vmatpush2.bf16.msra.mxu0 %v6154
        %6278 = vmatprep.subr.bf16.mxu0 %v6153
        %6279 = vmatpush2.bf16.msra.mxu0 %v6152
        %6280 = vmatprep.subr.bf16.mxu0 %v6151
        %6281 = vmatpush2.bf16.msra.mxu0 %v6150
        %6282 = vmatprep.subr.bf16.mxu0 %v6149
        %6283 = vmatpush2.bf16.msra.mxu0 %v6148
        %6284 = vmatprep.subr.bf16.mxu0 %v6147
        %6285 = vmatpush2.bf16.msra.mxu0 %v6146
        %6286 = vmatprep.subr.bf16.mxu0 %v6145
        %6287 = vmatpush2.bf16.msra.mxu0 %v6144
        %6288 = vmatprep.mubr.bf16.mxu0 %v5841
        %6289 = vmatmul.mubr.bf16.gmra.mxu0 %v5840
        %v6290 = vpop.f32.mrf.mxu0
        %v6291 = vadd.f32 0.0, %v6290
        %v6292 = vpop.f32.mrf.mxu0
        %v6293 = vadd.f32 0.0, %v6292
        %v6294 = vpop.f32.mrf.mxu0
        %v6295 = vadd.f32 0.0, %v6294
        %v6296 = vpop.f32.mrf.mxu0
        %v6297 = vadd.f32 0.0, %v6296
        %6298 = vmatprep.mubr.bf16.mxu0 %v5845
        %6299 = vmatmul.mubr.bf16.gmra.mxu0 %v5844
        %v6300 = vpop.f32.mrf.mxu0
        %v6301 = vadd.f32 0.0, %v6300
        %v6302 = vpop.f32.mrf.mxu0
        %v6303 = vadd.f32 0.0, %v6302
        %v6304 = vpop.f32.mrf.mxu0
        %v6305 = vadd.f32 0.0, %v6304
        %v6306 = vpop.f32.mrf.mxu0
        %v6307 = vadd.f32 0.0, %v6306
        %6308 = vmatprep.mubr.bf16.mxu0 %v5849
        %6309 = vmatmul.mubr.bf16.gmra.mxu0 %v5848
        %v6310 = vpop.f32.mrf.mxu0
        %v6311 = vadd.f32 0.0, %v6310
        %v6312 = vpop.f32.mrf.mxu0
        %v6313 = vadd.f32 0.0, %v6312
        %v6314 = vpop.f32.mrf.mxu0
        %v6315 = vadd.f32 0.0, %v6314
        %v6316 = vpop.f32.mrf.mxu0
        %v6317 = vadd.f32 0.0, %v6316
        %6318 = vmatprep.mubr.bf16.mxu0 %v5853
        %6319 = vmatmul.mubr.bf16.gmra.mxu0 %v5852
        %v6320 = vpop.f32.mrf.mxu0
        %v6321 = vadd.f32 0.0, %v6320
        %v6322 = vpop.f32.mrf.mxu0
        %v6323 = vadd.f32 0.0, %v6322
        %v6324 = vpop.f32.mrf.mxu0
        %v6325 = vadd.f32 0.0, %v6324
        %v6326 = vpop.f32.mrf.mxu0
        %v6327 = vadd.f32 0.0, %v6326
        %6328 = vmatprep.mubr.bf16.mxu0 %v5857
        %6329 = vmatmul.mubr.bf16.gmra.mxu0 %v5856
        %v6330 = vpop.f32.mrf.mxu0
        %v6331 = vadd.f32 0.0, %v6330
        %v6332 = vpop.f32.mrf.mxu0
        %v6333 = vadd.f32 0.0, %v6332
        %v6334 = vpop.f32.mrf.mxu0
        %v6335 = vadd.f32 0.0, %v6334
        %v6336 = vpop.f32.mrf.mxu0
        %v6337 = vadd.f32 0.0, %v6336
        %6338 = vmatprep.mubr.bf16.mxu0 %v5861
        %6339 = vmatmul.mubr.bf16.gmra.mxu0 %v5860
        %v6340 = vpop.f32.mrf.mxu0
        %v6341 = vadd.f32 0.0, %v6340
        %v6342 = vpop.f32.mrf.mxu0
        %v6343 = vadd.f32 0.0, %v6342
        %v6344 = vpop.f32.mrf.mxu0
        %v6345 = vadd.f32 0.0, %v6344
        %v6346 = vpop.f32.mrf.mxu0
        %v6347 = vadd.f32 0.0, %v6346
        %6348 = vmatprep.mubr.bf16.mxu0 %v5865
        %6349 = vmatmul.mubr.bf16.gmra.mxu0 %v5864
        %v6350 = vpop.f32.mrf.mxu0
        %v6351 = vadd.f32 0.0, %v6350
        %v6352 = vpop.f32.mrf.mxu0
        %v6353 = vadd.f32 0.0, %v6352
        %v6354 = vpop.f32.mrf.mxu0
        %v6355 = vadd.f32 0.0, %v6354
        %v6356 = vpop.f32.mrf.mxu0
        %v6357 = vadd.f32 0.0, %v6356
        %6358 = vmatprep.mubr.bf16.mxu0 %v5869
        %6359 = vmatmul.mubr.bf16.gmra.mxu0 %v5868
        %v6360 = vpop.f32.mrf.mxu0
        %v6361 = vadd.f32 0.0, %v6360
        %v6362 = vpop.f32.mrf.mxu0
        %v6363 = vadd.f32 0.0, %v6362
        %v6364 = vpop.f32.mrf.mxu0
        %v6365 = vadd.f32 0.0, %v6364
        %v6366 = vpop.f32.mrf.mxu0
        %v6367 = vadd.f32 0.0, %v6366
        %6368 = vdwg.mxu0
        %6369 = vmatprep.subr.bf16.mxu0 %v6175
        %6370 = vmatpush1.bf16.msra.mxu0 %v6174
        %6371 = vmatprep.subr.bf16.mxu0 %v6173
        %6372 = vmatpush1.bf16.msra.mxu0 %v6172
        %6373 = vmatprep.subr.bf16.mxu0 %v6171
        %6374 = vmatpush1.bf16.msra.mxu0 %v6170
        %6375 = vmatprep.subr.bf16.mxu0 %v6169
        %6376 = vmatpush1.bf16.msra.mxu0 %v6168
        %6377 = vmatprep.subr.bf16.mxu0 %v6167
        %6378 = vmatpush1.bf16.msra.mxu0 %v6166
        %6379 = vmatprep.subr.bf16.mxu0 %v6165
        %6380 = vmatpush1.bf16.msra.mxu0 %v6164
        %6381 = vmatprep.subr.bf16.mxu0 %v6163
        %6382 = vmatpush1.bf16.msra.mxu0 %v6162
        %6383 = vmatprep.subr.bf16.mxu0 %v6161
        %6384 = vmatpush1.bf16.msra.mxu0 %v6160
        %6385 = vmatprep.subr.bf16.mxu0 %v6191
        %6386 = vmatpush2.bf16.msra.mxu0 %v6190
        %6387 = vmatprep.subr.bf16.mxu0 %v6189
        %6388 = vmatpush2.bf16.msra.mxu0 %v6188
        %6389 = vmatprep.subr.bf16.mxu0 %v6187
        %6390 = vmatpush2.bf16.msra.mxu0 %v6186
        %6391 = vmatprep.subr.bf16.mxu0 %v6185
        %6392 = vmatpush2.bf16.msra.mxu0 %v6184
        %6393 = vmatprep.subr.bf16.mxu0 %v6183
        %6394 = vmatpush2.bf16.msra.mxu0 %v6182
        %6395 = vmatprep.subr.bf16.mxu0 %v6181
        %6396 = vmatpush2.bf16.msra.mxu0 %v6180
        %6397 = vmatprep.subr.bf16.mxu0 %v6179
        %6398 = vmatpush2.bf16.msra.mxu0 %v6178
        %6399 = vmatprep.subr.bf16.mxu0 %v6177
        %6400 = vmatpush2.bf16.msra.mxu0 %v6176
        %6401 = vmatprep.mubr.bf16.mxu0 %v5843
        %6402 = vmatmul.mubr.bf16.gmra.mxu0 %v5842
        %v6403 = vpop.f32.mrf.mxu0
        %v6404 = vadd.f32 %v6291, %v6403
        %v6405 = vpop.f32.mrf.mxu0
        %v6406 = vadd.f32 %v6293, %v6405
        %v6407 = vpop.f32.mrf.mxu0
        %v6408 = vadd.f32 %v6295, %v6407
        %v6409 = vpop.f32.mrf.mxu0
        %v6410 = vadd.f32 %v6297, %v6409
        %6411 = vmatprep.mubr.bf16.mxu0 %v5847
        %6412 = vmatmul.mubr.bf16.gmra.mxu0 %v5846
        %v6413 = vpop.f32.mrf.mxu0
        %v6414 = vadd.f32 %v6301, %v6413
        %v6415 = vpop.f32.mrf.mxu0
        %v6416 = vadd.f32 %v6303, %v6415
        %v6417 = vpop.f32.mrf.mxu0
        %v6418 = vadd.f32 %v6305, %v6417
        %v6419 = vpop.f32.mrf.mxu0
        %v6420 = vadd.f32 %v6307, %v6419
        %6421 = vmatprep.mubr.bf16.mxu0 %v5851
        %6422 = vmatmul.mubr.bf16.gmra.mxu0 %v5850
        %v6423 = vpop.f32.mrf.mxu0
        %v6424 = vadd.f32 %v6311, %v6423
        %v6425 = vpop.f32.mrf.mxu0
        %v6426 = vadd.f32 %v6313, %v6425
        %v6427 = vpop.f32.mrf.mxu0
        %v6428 = vadd.f32 %v6315, %v6427
        %v6429 = vpop.f32.mrf.mxu0
        %v6430 = vadd.f32 %v6317, %v6429
        %6431 = vmatprep.mubr.bf16.mxu0 %v5855
        %6432 = vmatmul.mubr.bf16.gmra.mxu0 %v5854
        %v6433 = vpop.f32.mrf.mxu0
        %v6434 = vadd.f32 %v6321, %v6433
        %v6435 = vpop.f32.mrf.mxu0
        %v6436 = vadd.f32 %v6323, %v6435
        %v6437 = vpop.f32.mrf.mxu0
        %v6438 = vadd.f32 %v6325, %v6437
        %v6439 = vpop.f32.mrf.mxu0
        %v6440 = vadd.f32 %v6327, %v6439
        %6441 = vmatprep.mubr.bf16.mxu0 %v5859
        %6442 = vmatmul.mubr.bf16.gmra.mxu0 %v5858
        %v6443 = vpop.f32.mrf.mxu0
        %v6444 = vadd.f32 %v6331, %v6443
        %v6445 = vpop.f32.mrf.mxu0
        %v6446 = vadd.f32 %v6333, %v6445
        %v6447 = vpop.f32.mrf.mxu0
        %v6448 = vadd.f32 %v6335, %v6447
        %v6449 = vpop.f32.mrf.mxu0
        %v6450 = vadd.f32 %v6337, %v6449
        %6451 = vmatprep.mubr.bf16.mxu0 %v5863
        %6452 = vmatmul.mubr.bf16.gmra.mxu0 %v5862
        %v6453 = vpop.f32.mrf.mxu0
        %v6454 = vadd.f32 %v6341, %v6453
        %v6455 = vpop.f32.mrf.mxu0
        %v6456 = vadd.f32 %v6343, %v6455
        %v6457 = vpop.f32.mrf.mxu0
        %v6458 = vadd.f32 %v6345, %v6457
        %v6459 = vpop.f32.mrf.mxu0
        %v6460 = vadd.f32 %v6347, %v6459
        %6461 = vmatprep.mubr.bf16.mxu0 %v5867
        %6462 = vmatmul.mubr.bf16.gmra.mxu0 %v5866
        %v6463 = vpop.f32.mrf.mxu0
        %v6464 = vadd.f32 %v6351, %v6463
        %v6465 = vpop.f32.mrf.mxu0
        %v6466 = vadd.f32 %v6353, %v6465
        %v6467 = vpop.f32.mrf.mxu0
        %v6468 = vadd.f32 %v6355, %v6467
        %v6469 = vpop.f32.mrf.mxu0
        %v6470 = vadd.f32 %v6357, %v6469
        %6471 = vmatprep.mubr.bf16.mxu0 %v5871
        %6472 = vmatmul.mubr.bf16.gmra.mxu0 %v5870
        %v6473 = vpop.f32.mrf.mxu0
        %v6474 = vadd.f32 %v6361, %v6473
        %v6475 = vpop.f32.mrf.mxu0
        %v6476 = vadd.f32 %v6363, %v6475
        %v6477 = vpop.f32.mrf.mxu0
        %v6478 = vadd.f32 %v6365, %v6477
        %v6479 = vpop.f32.mrf.mxu0
        %v6480 = vadd.f32 %v6367, %v6479
        %6481 = vdwg.mxu0
        %v6482 = vadd.f32 %v3857, %v6404
        %v6483 = vadd.f32 %v3858, %v6406
        %v6484 = vadd.f32 %v3859, %v6408
        %v6485 = vadd.f32 %v3860, %v6410
        %v6486 = vadd.f32 %v3861, %v6414
        %v6487 = vadd.f32 %v3862, %v6416
        %v6488 = vadd.f32 %v3863, %v6418
        %v6489 = vadd.f32 %v3864, %v6420
        %v6490 = vadd.f32 %v3865, %v6424
        %v6491 = vadd.f32 %v3866, %v6426
        %v6492 = vadd.f32 %v3867, %v6428
        %v6493 = vadd.f32 %v3868, %v6430
        %v6494 = vadd.f32 %v3869, %v6434
        %v6495 = vadd.f32 %v3870, %v6436
        %v6496 = vadd.f32 %v3871, %v6438
        %v6497 = vadd.f32 %v3872, %v6440
        %v6498 = vadd.f32 %v3873, %v6444
        %v6499 = vadd.f32 %v3874, %v6446
        %v6500 = vadd.f32 %v3875, %v6448
        %v6501 = vadd.f32 %v3876, %v6450
        %v6502 = vadd.f32 %v3877, %v6454
        %v6503 = vadd.f32 %v3878, %v6456
        %v6504 = vadd.f32 %v3879, %v6458
        %v6505 = vadd.f32 %v3880, %v6460
        %v6506 = vadd.f32 %v3881, %v6464
        %v6507 = vadd.f32 %v3882, %v6466
        %v6508 = vadd.f32 %v3883, %v6468
        %v6509 = vadd.f32 %v3884, %v6470
        %v6510 = vadd.f32 %v3885, %v6474
        %v6511 = vadd.f32 %v3886, %v6476
        %v6512 = vadd.f32 %v3887, %v6478
        %v6513 = vadd.f32 %v3888, %v6480
        %6514 = vst [vmem:[%s562] sm:$0xff] %v6482
        %6515 = vst [vmem:[%s562 + $0x8] sm:$0xff] %v6483
        %6516 = vst [vmem:[%s562 + $0x10] sm:$0xff] %v6484
        %6517 = vst [vmem:[%s562 + $0x18] sm:$0xff] %v6485
        %6518 = vst [vmem:[%s562 + $0x20] sm:$0xff] %v6486
        %6519 = vst [vmem:[%s562 + $0x28] sm:$0xff] %v6487
        %6520 = vst [vmem:[%s562 + $0x30] sm:$0xff] %v6488
        %6521 = vst [vmem:[%s562 + $0x38] sm:$0xff] %v6489
        %6522 = vst [vmem:[%s562 + $0x40] sm:$0xff] %v6490
        %6523 = vst [vmem:[%s562 + $0x48] sm:$0xff] %v6491
        %6524 = vst [vmem:[%s562 + $0x50] sm:$0xff] %v6492
        %6525 = vst [vmem:[%s562 + $0x58] sm:$0xff] %v6493
        %6526 = vst [vmem:[%s562 + $0x60] sm:$0xff] %v6494
        %6527 = vst [vmem:[%s562 + $0x68] sm:$0xff] %v6495
        %6528 = vst [vmem:[%s562 + $0x70] sm:$0xff] %v6496
        %6529 = vst [vmem:[%s562 + $0x78] sm:$0xff] %v6497
        %6530 = vst [vmem:[%s562 + $0x80] sm:$0xff] %v6498
        %6531 = vst [vmem:[%s562 + $0x88] sm:$0xff] %v6499
        %6532 = vst [vmem:[%s562 + $0x90] sm:$0xff] %v6500
        %6533 = vst [vmem:[%s562 + $0x98] sm:$0xff] %v6501
        %6534 = vst [vmem:[%s562 + $0xa0] sm:$0xff] %v6502
        %6535 = vst [vmem:[%s562 + $0xa8] sm:$0xff] %v6503
        %6536 = vst [vmem:[%s562 + $0xb0] sm:$0xff] %v6504
        %6537 = vst [vmem:[%s562 + $0xb8] sm:$0xff] %v6505
        %6538 = vst [vmem:[%s562 + $0xc0] sm:$0xff] %v6506
        %6539 = vst [vmem:[%s562 + $0xc8] sm:$0xff] %v6507
        %6540 = vst [vmem:[%s562 + $0xd0] sm:$0xff] %v6508
        %6541 = vst [vmem:[%s562 + $0xd8] sm:$0xff] %v6509
        %6542 = vst [vmem:[%s562 + $0xe0] sm:$0xff] %v6510
        %6543 = vst [vmem:[%s562 + $0xe8] sm:$0xff] %v6511
        %6544 = vst [vmem:[%s562 + $0xf0] sm:$0xff] %v6512
        %6545 = vst [vmem:[%s562 + $0xf8] sm:$0xff] %v6513
        %s6546 = sand.u32 %s299, 1
        %s6547 = scalar_lea.sflag [#allocation4], %s6546
        %s6548 = sand.u32 %s299, 1
        %s6549 = smul.addr %s6548, 256
        %s6550 = scalar_lea.vmem [#allocation19], %s6549
        // Predicated region
        $region109: #{tpu_custom_call.1} parent=67 // pred_check
          %p6551 = pneg %p309
        $region110: #{tpu_custom_call.1} parent=67 // pred_check_branch
          %6553 = sbr.rel (%p6551) target = $region112
        $region111: #{tpu_custom_call.1} parent=67 // pred_region
          %s6555 = ssub.s32 4096, 4096
          %6556 = vsyncadd %s6547, %s6555
          %s6557 = smul.addr %s34, 32
          %s6558 = smul.addr %s6557, 128
          %s6559 = scalar_lea.hbm %s12, %s6558
          %s6560 = sshll.u32 %s6550, 4
          %s6561 = int_to_ptr.vmem [resolvable:$true] %s6560
          %6566 = dma.vmem_to_hbm [thread:$0]  %s6561, 4096, %s6559, %s6547, 256, 256, 16
        $region112: #{tpu_custom_call.1} parent=67 // pred_fallthru
          _
      $region68: #{tpu_custom_call.1} parent=5 // pred_fallthru
        _
      %p6567 = scmp.le.s32.totalorder 2, %s29
      // Predicated region
      $region113: #{tpu_custom_call.1} parent=5 // pred_check
        %p6568 = pneg %p6567
      $region114: #{tpu_custom_call.1} parent=5 // pred_check_branch
        %6570 = sbr.rel (%p6568) target = $region116
      $region115: #{tpu_custom_call.1} parent=5 // pred_region
        %s6571 = ssub.s32 %s29, 2
        // Predicated region
        $region117: #{tpu_custom_call.1} parent=115 // pred_check
          %p6572 = pneg %p315
        $region118: #{tpu_custom_call.1} parent=115 // pred_check_branch
          %6574 = sbr.rel (%p6572) target = $region120
        $region119: #{tpu_custom_call.1} parent=115 // pred_region
          %s6575 = sand.u32 %s300, 1
          %s6576 = scalar_lea.sflag [#allocation4], %s6575
          %s6577 = sand.u32 %s300, 1
          %s6578 = smul.addr %s6577, 256
          %s6579 = scalar_lea.vmem [#allocation19], %s6578
          %6580 = dma.done %s6576, 4096
        $region120: #{tpu_custom_call.1} parent=115 // pred_fallthru
          _
      $region116: #{tpu_custom_call.1} parent=5 // pred_fallthru
        _
    $region6: #{tpu_custom_call.1} parent=1 // loop_footer
      %s33 = sadd.s32 1, %s29
    $region7: #{tpu_custom_call.1} parent=1 // loop_footer_branch
      %28 = sbr.rel target = $region3
    $region8: #{tpu_custom_call.1} parent=1 // loop_exit
      _
    %6581 = vsyncpa [#allocation3], 1
    %s6582 = scalar_lea.sflag [#allocation3], 1
    %6583 = vsyncpa %s6582, 1
    %6584 = vsyncpa [#allocation6], 1
    %6585 = vsyncpa [#allocation9], 1
    %6586 = vsyncpa [#allocation12], 1
    %6587 = vsyncpa [#allocation15], 1
    %6588 = vsyncpa [#allocation18], 1
    %6589 = vsyncpa [#allocation4], 1
    %s6590 = scalar_lea.sflag [#allocation4], 1
    %6591 = vsyncpa %s6590, 1

</llo_original>
